<compile_context>
chip_gen: v6e
topology: v6e:2x2x1
jax: 0.10.0
libtpu: 0.0.40
codegen_flags: <defaults>
</compile_context>

<pallas_src>
import functools
import math

import jax
import jax.numpy as jnp
import numpy as np
from jax.experimental import pallas as pl
from jax.experimental.pallas import tpu as pltpu

_LN_EPS = 1e-5
_INV_SQRT2 = 1.0 / math.sqrt(2.0)


def _gelu(h):
    # exact erf-based GELU (torch.nn.functional.gelu default)
    return 0.5 * h * (1.0 + jax.lax.erf(h * _INV_SQRT2))


def _layernorm(x2d, gamma, beta):
    # LayerNorm over the last (lane) axis; biased variance, eps inside rsqrt,
    # matching torch.nn.LayerNorm defaults.
    mu = jnp.mean(x2d, axis=-1, keepdims=True)
    xc = x2d - mu
    var = jnp.mean(xc * xc, axis=-1, keepdims=True)
    return xc * jax.lax.rsqrt(var + _LN_EPS) * gamma + beta


@functools.lru_cache(maxsize=None)
def _supports_batched_minor_transpose(S, D):
    """Probe (once per (S, D)) whether a rank-3 minor-dims swap lowers on this
    Mosaic version; if not, the kernel falls back to unrolled 2-D transposes."""
    def probe_kernel(x_ref, o1_ref, o2_ref):
        t = jnp.swapaxes(x_ref[...], 1, 2)
        o1_ref[...] = t
        o2_ref[...] = jnp.swapaxes(t + 1.0, 1, 2)

    try:
        fn = pl.pallas_call(
            probe_kernel,
            out_shape=(jax.ShapeDtypeStruct((2, D, S), jnp.float32),
                       jax.ShapeDtypeStruct((2, S, D), jnp.float32)),
        )
        jax.jit(fn).lower(jnp.zeros((2, S, D), jnp.float32)).compile()
        return True
    except Exception:
        return False


def _transpose_last2(v, batched):
    """(blk, A, B) -> (blk, B, A)."""
    if batched:
        return jnp.swapaxes(v, 1, 2)
    # Compatibility fallback: unrolled per-sample 2-D transposes (keep tile_b
    # modest if this path is taken).
    return jnp.concatenate([v[b].T[None] for b in range(v.shape[0])], axis=0)


def _mixer_kernel(x_ref,
                  tln_g_ref, tln_b_ref, tw0_ref, tb0_ref, tw1_ref, tb1_ref,
                  cln_g_ref, cln_b_ref, cw0_ref, cb0_ref, cw1_ref, cb1_ref,
                  o_ref, *, batched_transpose):
    blk, S, D = x_ref.shape
    x = x_ref[...].astype(jnp.float32)                       # (blk, S, D)

    # ----- token mixing: x += T(FFN_tok(LN_tok(x)^T)) ------------------------
    xn = _layernorm(x.reshape(blk * S, D), tln_g_ref[...], tln_b_ref[...])
    xn_t = _transpose_last2(xn.reshape(blk, S, D), batched_transpose)  # (blk, D, S)
    h = jnp.dot(xn_t.reshape(blk * D, S), tw0_ref[...],
                preferred_element_type=jnp.float32) + tb0_ref[...]     # (blk*D, Ht)
    h = _gelu(h)
    y = jnp.dot(h, tw1_ref[...],
                preferred_element_type=jnp.float32) + tb1_ref[...]     # (blk*D, S)
    y = _transpose_last2(y.reshape(blk, D, S), batched_transpose)      # (blk, S, D)
    x = x + y

    # ----- channel mixing: x += FFN_ch(LN_ch(x)) ------------------------------
    x2 = x.reshape(blk * S, D)
    zn = _layernorm(x2, cln_g_ref[...], cln_b_ref[...])
    h = jnp.dot(zn, cw0_ref[...],
                preferred_element_type=jnp.float32) + cb0_ref[...]     # (blk*S, Hc)
    h = _gelu(h)
    yc = jnp.dot(h, cw1_ref[...],
                 preferred_element_type=jnp.float32) + cb1_ref[...]    # (blk*S, D)
    out = x2 + yc
    o_ref[...] = out.reshape(blk, S, D).astype(o_ref.dtype)


def _pick_tile_b(n_samples, S, D, vmem_budget_bytes=8 << 20):
    """Largest divisor of n_samples whose in-kernel f32 working set (~10 live
    copies of one (S, D) sample) stays under a conservative VMEM budget, while
    preferring >= 2 grid steps so v7x's two TensorCores both get parallel work.
    (v7x has 64 MiB VMEM vs 128 MiB on v5e/v6e; raise vmem_limit_bytes via
    pltpu.CompilerParams if you deliberately go bigger.)"""
    per_sample = 10 * S * D * 4
    cap = max(1, vmem_budget_bytes // per_sample)
    best = 1
    for t in range(1, n_samples + 1):
        if n_samples % t == 0 and t <= cap and (n_samples // t >= 2 or n_samples == 1):
            best = t
    return best


def mixer_block(x, params, *, tile_b=None):
    """x: (..., per_graph_size, dims). params: dict from init_mixer_params."""
    *lead, S, D = x.shape
    n = int(np.prod(lead)) if lead else 1
    x3 = x.reshape(n, S, D)

    if tile_b is None:
        tile_b = _pick_tile_b(n, S, D)
    assert n % tile_b == 0, f"tile_b={tile_b} must divide n_samples={n}"
    grid = (n // tile_b,)

    batched_transpose = _supports_batched_minor_transpose(S, D)
    kernel = functools.partial(_mixer_kernel,
                               batched_transpose=batched_transpose)

    ordered = (params["tln_g"], params["tln_b"],
               params["tw0"], params["tb0"], params["tw1"], params["tb1"],
               params["cln_g"], params["cln_b"],
               params["cw0"], params["cb0"], params["cw1"], params["cb1"])
    # Weights/biases are small and use constant index maps -> they stay
    # resident in VMEM across all grid steps.
    param_specs = [pl.BlockSpec(p.shape, lambda i: (0, 0)) for p in ordered]

    out3 = pl.pallas_call(
        kernel,
        out_shape=jax.ShapeDtypeStruct((n, S, D), x.dtype),
        grid=grid,
        # If profiling shows exposed input DMA at very large tile_b, add
        # pipeline_mode=pl.Buffered(3) to the x BlockSpec below.
        in_specs=[pl.BlockSpec((tile_b, S, D), lambda i: (i, 0, 0))] + param_specs,
        out_specs=pl.BlockSpec((tile_b, S, D), lambda i: (i, 0, 0)),
        compiler_params=pltpu.CompilerParams(
            dimension_semantics=("parallel",)),
    )(x3, *ordered)
    return out3.reshape(x.shape)


def _init_linear(key, fan_in, fan_out, dtype=jnp.float32):
    """Matches nn.Linear.reset_parameters: W, b ~ U(-1/sqrt(fan_in), 1/sqrt(fan_in)).
    Weight stored pre-transposed as (in, out) so the kernel does y = x @ W + b."""
    kw, kb = jax.random.split(key)
    bound = 1.0 / math.sqrt(fan_in)
    w = jax.random.uniform(kw, (fan_in, fan_out), minval=-bound, maxval=bound,
                           dtype=dtype)
    b = jax.random.uniform(kb, (1, fan_out), minval=-bound, maxval=bound,
                           dtype=dtype)
    return w, b


def init_mixer_params(key, per_graph_size, dims,
                      token_expansion_factor=0.5, channel_expansion_factor=4,
                      dtype=jnp.float32):
    ht = int(token_expansion_factor * per_graph_size)
    hc = int(channel_expansion_factor * dims)
    k0, k1, k2, k3 = jax.random.split(key, 4)
    tw0, tb0 = _init_linear(k0, per_graph_size, ht, dtype)
    tw1, tb1 = _init_linear(k1, ht, per_graph_size, dtype)
    cw0, cb0 = _init_linear(k2, dims, hc, dtype)
    cw1, cb1 = _init_linear(k3, hc, dims, dtype)
    return dict(
        tln_g=jnp.ones((1, dims), dtype), tln_b=jnp.zeros((1, dims), dtype),
        tw0=tw0, tb0=tb0, tw1=tw1, tb1=tb1,
        cln_g=jnp.ones((1, dims), dtype), cln_b=jnp.zeros((1, dims), dtype),
        cw0=cw0, cb0=cb0, cw1=cw1, cb1=cb1)


def mixer_block_reference(x, p):
    """Plain-JAX reference of MixerBlock.forward (default config, f32)."""
    f32 = jnp.float32
    xf = x.astype(f32)

    def ln(v, g, b):
        mu = v.mean(-1, keepdims=True)
        var = ((v - mu) ** 2).mean(-1, keepdims=True)
        return (v - mu) / jnp.sqrt(var + _LN_EPS) * g.reshape(-1) + b.reshape(-1)

    def gelu(h):
        return 0.5 * h * (1.0 + jax.lax.erf(h * _INV_SQRT2))

    # token mixing
    t = ln(xf, p["tln_g"].astype(f32), p["tln_b"].astype(f32))
    t = jnp.swapaxes(t, -1, -2)
    t = gelu(t @ p["tw0"].astype(f32) + p["tb0"].astype(f32))
    t = t @ p["tw1"].astype(f32) + p["tb1"].astype(f32)
    xf = xf + jnp.swapaxes(t, -1, -2)
    # channel mixing
    c = ln(xf, p["cln_g"].astype(f32), p["cln_b"].astype(f32))
    c = gelu(c @ p["cw0"].astype(f32) + p["cb0"].astype(f32))
    c = c @ p["cw1"].astype(f32) + p["cb1"].astype(f32)
    return (xf + c).astype(x.dtype)


if __name__ == "__main__":
    # MixerBlock(per_graph_size=16, dims=128), default expansion factors
    # (token 0.5 -> hidden 8, channel 4 -> hidden 512), dropout=0.
    # x: (batch=2, graphs=4, per_graph_size=16, dims=128); dims is a multiple
    # of 128 so the streamed activation blocks are lane-dense.
    per_graph_size, dims = 16, 128
    batch, graphs = 2, 4

    key = jax.random.PRNGKey(0)
    kx, kp = jax.random.split(key)
    x = jax.random.normal(kx, (batch, graphs, per_graph_size, dims),
                          dtype=jnp.float32)
    params = init_mixer_params(kp, per_graph_size, dims)

    # tile_b=4 -> grid=(2,) parallel steps (both v7x TensorCores busy). For
    # realistic sample counts, push tile_b up (hundreds+) until the ~10*S*D*4 B
    # per-sample working set approaches the scoped-VMEM limit.
    out = mixer_block(x, params, tile_b=4)
    jax.block_until_ready(out)
    assert out.shape == x.shape

    ref = mixer_block_reference(x, params)
    err = float(jnp.max(jnp.abs(out - ref)))
    assert err < 2e-3, f"f32 mismatch vs reference: max abs err = {err}"

    # bf16 activations: same kernel, half the HBM traffic on this
    # bandwidth-bound op (LN/GELU/accumulation still run in f32 inside).
    x_bf16 = x.astype(jnp.bfloat16)
    out_bf16 = mixer_block(x_bf16, params, tile_b=4)
    jax.block_until_ready(out_bf16)
    err_bf16 = float(jnp.max(jnp.abs(out_bf16.astype(jnp.float32) - ref)))
    assert err_bf16 < 0.25, f"bf16 mismatch vs reference: max abs err = {err_bf16}"

    print("KERNEL_OK")
</pallas_src>

<mosaic_0001>
module attributes {stable_mosaic.version = 11 : i64} {
  func.func @_mixer_kernel(%arg0: i32, %arg1: memref<4x16x128xf32, #tpu.memory_space<vmem>>, %arg2: memref<1x128xf32, #tpu.memory_space<vmem>>, %arg3: memref<1x128xf32, #tpu.memory_space<vmem>>, %arg4: memref<16x8xf32, #tpu.memory_space<vmem>>, %arg5: memref<1x8xf32, #tpu.memory_space<vmem>>, %arg6: memref<8x16xf32, #tpu.memory_space<vmem>>, %arg7: memref<1x16xf32, #tpu.memory_space<vmem>>, %arg8: memref<1x128xf32, #tpu.memory_space<vmem>>, %arg9: memref<1x128xf32, #tpu.memory_space<vmem>>, %arg10: memref<128x512xf32, #tpu.memory_space<vmem>>, %arg11: memref<1x512xf32, #tpu.memory_space<vmem>>, %arg12: memref<512x128xf32, #tpu.memory_space<vmem>>, %arg13: memref<1x128xf32, #tpu.memory_space<vmem>>, %arg14: memref<4x16x128xf32, #tpu.memory_space<vmem>>) attributes {dimension_semantics = [#tpu.dimension_semantics<parallel>], iteration_bounds = array<i64: 2>, scalar_prefetch = 0 : i64, scratch_operands = 0 : i64, tpu.core_type = #tpu.core_type<tc>, window_params = [{transform_indices = @transform_0, window_bounds = array<i64: 4, 16, 128>}, {pipeline_mode = #tpu.pipeline_mode<synchronous>, transform_indices = @transform_1, window_bounds = array<i64: 1, 128>}, {pipeline_mode = #tpu.pipeline_mode<synchronous>, transform_indices = @transform_2, window_bounds = array<i64: 1, 128>}, {pipeline_mode = #tpu.pipeline_mode<synchronous>, transform_indices = @transform_3, window_bounds = array<i64: 16, 8>}, {pipeline_mode = #tpu.pipeline_mode<synchronous>, transform_indices = @transform_4, window_bounds = array<i64: 1, 8>}, {pipeline_mode = #tpu.pipeline_mode<synchronous>, transform_indices = @transform_5, window_bounds = array<i64: 8, 16>}, {pipeline_mode = #tpu.pipeline_mode<synchronous>, transform_indices = @transform_6, window_bounds = array<i64: 1, 16>}, {pipeline_mode = #tpu.pipeline_mode<synchronous>, transform_indices = @transform_7, window_bounds = array<i64: 1, 128>}, {pipeline_mode = #tpu.pipeline_mode<synchronous>, transform_indices = @transform_8, window_bounds = array<i64: 1, 128>}, {pipeline_mode = #tpu.pipeline_mode<synchronous>, transform_indices = @transform_9, window_bounds = array<i64: 128, 512>}, {pipeline_mode = #tpu.pipeline_mode<synchronous>, transform_indices = @transform_10, window_bounds = array<i64: 1, 512>}, {pipeline_mode = #tpu.pipeline_mode<synchronous>, transform_indices = @transform_11, window_bounds = array<i64: 512, 128>}, {pipeline_mode = #tpu.pipeline_mode<synchronous>, transform_indices = @transform_12, window_bounds = array<i64: 1, 128>}, {transform_indices = @transform_13, window_bounds = array<i64: 4, 16, 128>}]} {
    %c0 = arith.constant 0 : index
    %c0_0 = arith.constant 0 : index
    %c0_1 = arith.constant 0 : index
    %0 = vector.load %arg1[%c0, %c0_0, %c0_1] : memref<4x16x128xf32, #tpu.memory_space<vmem>>, vector<4x16x128xf32>
    %1 = vector.shape_cast %0 : vector<4x16x128xf32> to vector<64x128xf32>
    %c0_2 = arith.constant 0 : index
    %c0_3 = arith.constant 0 : index
    %2 = vector.load %arg2[%c0_2, %c0_3] : memref<1x128xf32, #tpu.memory_space<vmem>>, vector<1x128xf32>
    %c0_4 = arith.constant 0 : index
    %c0_5 = arith.constant 0 : index
    %3 = vector.load %arg3[%c0_4, %c0_5] : memref<1x128xf32, #tpu.memory_space<vmem>>, vector<1x128xf32>
    %cst = arith.constant dense<0.000000e+00> : vector<64xf32>
    %4 = vector.multi_reduction <add>, %1, %cst [1] : vector<64x128xf32> to vector<64xf32>
    %5 = vector.shape_cast %4 : vector<64xf32> to vector<64x1xf32>
    %cst_6 = arith.constant 1.280000e+02 : f32
    %6 = vector.broadcast %cst_6 : f32 to vector<64x1xf32>
    %7 = arith.divf %5, %6 : vector<64x1xf32>
    %8 = vector.broadcast %7 : vector<64x1xf32> to vector<64x128xf32>
    %9 = arith.subf %1, %8 : vector<64x128xf32>
    %10 = arith.mulf %9, %9 : vector<64x128xf32>
    %cst_7 = arith.constant dense<0.000000e+00> : vector<64xf32>
    %11 = vector.multi_reduction <add>, %10, %cst_7 [1] : vector<64x128xf32> to vector<64xf32>
    %12 = vector.shape_cast %11 : vector<64xf32> to vector<64x1xf32>
    %cst_8 = arith.constant 1.280000e+02 : f32
    %13 = vector.broadcast %cst_8 : f32 to vector<64x1xf32>
    %14 = arith.divf %12, %13 : vector<64x1xf32>
    %cst_9 = arith.constant 9.99999974E-6 : f32
    %15 = vector.broadcast %cst_9 : f32 to vector<64x1xf32>
    %16 = arith.addf %14, %15 : vector<64x1xf32>
    %17 = math.rsqrt %16 : vector<64x1xf32>
    %18 = vector.broadcast %17 : vector<64x1xf32> to vector<64x128xf32>
    %19 = arith.mulf %9, %18 : vector<64x128xf32>
    %20 = vector.broadcast %2 : vector<1x128xf32> to vector<64x128xf32>
    %21 = arith.mulf %19, %20 : vector<64x128xf32>
    %22 = vector.broadcast %3 : vector<1x128xf32> to vector<64x128xf32>
    %23 = arith.addf %21, %22 : vector<64x128xf32>
    %24 = vector.shape_cast %23 : vector<64x128xf32> to vector<4x16x128xf32>
    %25 = vector.extract_strided_slice %24 {offsets = [0, 0, 0], sizes = [1, 16, 128], strides = [1, 1, 1]} : vector<4x16x128xf32> to vector<1x16x128xf32>
    %26 = vector.shape_cast %25 : vector<1x16x128xf32> to vector<16x128xf32>
    %27 = tpu.transpose %26, [1, 0] : vector<16x128xf32> -> vector<128x16xf32>
    %28 = vector.shape_cast %27 : vector<128x16xf32> to vector<1x128x16xf32>
    %29 = vector.extract_strided_slice %24 {offsets = [1, 0, 0], sizes = [1, 16, 128], strides = [1, 1, 1]} : vector<4x16x128xf32> to vector<1x16x128xf32>
    %30 = vector.shape_cast %29 : vector<1x16x128xf32> to vector<16x128xf32>
    %31 = tpu.transpose %30, [1, 0] : vector<16x128xf32> -> vector<128x16xf32>
    %32 = vector.shape_cast %31 : vector<128x16xf32> to vector<1x128x16xf32>
    %33 = vector.extract_strided_slice %24 {offsets = [2, 0, 0], sizes = [1, 16, 128], strides = [1, 1, 1]} : vector<4x16x128xf32> to vector<1x16x128xf32>
    %34 = vector.shape_cast %33 : vector<1x16x128xf32> to vector<16x128xf32>
    %35 = tpu.transpose %34, [1, 0] : vector<16x128xf32> -> vector<128x16xf32>
    %36 = vector.shape_cast %35 : vector<128x16xf32> to vector<1x128x16xf32>
    %37 = vector.extract_strided_slice %24 {offsets = [3, 0, 0], sizes = [1, 16, 128], strides = [1, 1, 1]} : vector<4x16x128xf32> to vector<1x16x128xf32>
    %38 = vector.shape_cast %37 : vector<1x16x128xf32> to vector<16x128xf32>
    %39 = tpu.transpose %38, [1, 0] : vector<16x128xf32> -> vector<128x16xf32>
    %40 = vector.shape_cast %39 : vector<128x16xf32> to vector<1x128x16xf32>
    %41 = tpu.concatenate %28, %32, %36, %40 in 0 : vector<1x128x16xf32>, vector<1x128x16xf32>, vector<1x128x16xf32>, vector<1x128x16xf32> -> vector<4x128x16xf32>
    %42 = vector.shape_cast %41 : vector<4x128x16xf32> to vector<512x16xf32>
    %c0_10 = arith.constant 0 : index
    %c0_11 = arith.constant 0 : index
    %43 = vector.load %arg4[%c0_10, %c0_11] : memref<16x8xf32, #tpu.memory_space<vmem>>, vector<16x8xf32>
    %cst_12 = arith.constant dense<0.000000e+00> : vector<512x8xf32>
    %44 = tpu.matmul %42, %43, %cst_12 {dimension_numbers = #tpu.dot_dimension_numbers<[1], [0], [0], [1], [0, 0, 1, 1], [], []>} : vector<512x16xf32>, vector<16x8xf32>, vector<512x8xf32> -> vector<512x8xf32>
    %c0_13 = arith.constant 0 : index
    %c0_14 = arith.constant 0 : index
    %45 = vector.load %arg5[%c0_13, %c0_14] : memref<1x8xf32, #tpu.memory_space<vmem>>, vector<1x8xf32>
    %46 = vector.broadcast %45 : vector<1x8xf32> to vector<512x8xf32>
    %47 = arith.addf %44, %46 : vector<512x8xf32>
    %cst_15 = arith.constant 5.000000e-01 : f32
    %48 = vector.broadcast %cst_15 : f32 to vector<512x8xf32>
    %49 = arith.mulf %48, %47 : vector<512x8xf32>
    %cst_16 = arith.constant 0.707106769 : f32
    %50 = vector.broadcast %cst_16 : f32 to vector<512x8xf32>
    %51 = arith.mulf %47, %50 : vector<512x8xf32>
    %52 = math.erf %51 : vector<512x8xf32>
    %cst_17 = arith.constant 1.000000e+00 : f32
    %53 = vector.broadcast %cst_17 : f32 to vector<512x8xf32>
    %54 = arith.addf %53, %52 : vector<512x8xf32>
    %55 = arith.mulf %49, %54 : vector<512x8xf32>
    %c0_18 = arith.constant 0 : index
    %c0_19 = arith.constant 0 : index
    %56 = vector.load %arg6[%c0_18, %c0_19] : memref<8x16xf32, #tpu.memory_space<vmem>>, vector<8x16xf32>
    %cst_20 = arith.constant dense<0.000000e+00> : vector<512x16xf32>
    %57 = tpu.matmul %55, %56, %cst_20 {dimension_numbers = #tpu.dot_dimension_numbers<[1], [0], [0], [1], [0, 0, 1, 1], [], []>} : vector<512x8xf32>, vector<8x16xf32>, vector<512x16xf32> -> vector<512x16xf32>
    %c0_21 = arith.constant 0 : index
    %c0_22 = arith.constant 0 : index
    %58 = vector.load %arg7[%c0_21, %c0_22] : memref<1x16xf32, #tpu.memory_space<vmem>>, vector<1x16xf32>
    %59 = vector.broadcast %58 : vector<1x16xf32> to vector<512x16xf32>
    %60 = arith.addf %57, %59 : vector<512x16xf32>
    %61 = vector.shape_cast %60 : vector<512x16xf32> to vector<4x128x16xf32>
    %62 = vector.extract_strided_slice %61 {offsets = [0, 0, 0], sizes = [1, 128, 16], strides = [1, 1, 1]} : vector<4x128x16xf32> to vector<1x128x16xf32>
    %63 = vector.shape_cast %62 : vector<1x128x16xf32> to vector<128x16xf32>
    %64 = tpu.transpose %63, [1, 0] : vector<128x16xf32> -> vector<16x128xf32>
    %65 = vector.shape_cast %64 : vector<16x128xf32> to vector<1x16x128xf32>
    %66 = vector.extract_strided_slice %61 {offsets = [1, 0, 0], sizes = [1, 128, 16], strides = [1, 1, 1]} : vector<4x128x16xf32> to vector<1x128x16xf32>
    %67 = vector.shape_cast %66 : vector<1x128x16xf32> to vector<128x16xf32>
    %68 = tpu.transpose %67, [1, 0] : vector<128x16xf32> -> vector<16x128xf32>
    %69 = vector.shape_cast %68 : vector<16x128xf32> to vector<1x16x128xf32>
    %70 = vector.extract_strided_slice %61 {offsets = [2, 0, 0], sizes = [1, 128, 16], strides = [1, 1, 1]} : vector<4x128x16xf32> to vector<1x128x16xf32>
    %71 = vector.shape_cast %70 : vector<1x128x16xf32> to vector<128x16xf32>
    %72 = tpu.transpose %71, [1, 0] : vector<128x16xf32> -> vector<16x128xf32>
    %73 = vector.shape_cast %72 : vector<16x128xf32> to vector<1x16x128xf32>
    %74 = vector.extract_strided_slice %61 {offsets = [3, 0, 0], sizes = [1, 128, 16], strides = [1, 1, 1]} : vector<4x128x16xf32> to vector<1x128x16xf32>
    %75 = vector.shape_cast %74 : vector<1x128x16xf32> to vector<128x16xf32>
    %76 = tpu.transpose %75, [1, 0] : vector<128x16xf32> -> vector<16x128xf32>
    %77 = vector.shape_cast %76 : vector<16x128xf32> to vector<1x16x128xf32>
    %78 = tpu.concatenate %65, %69, %73, %77 in 0 : vector<1x16x128xf32>, vector<1x16x128xf32>, vector<1x16x128xf32>, vector<1x16x128xf32> -> vector<4x16x128xf32>
    %79 = arith.addf %0, %78 : vector<4x16x128xf32>
    %80 = vector.shape_cast %79 : vector<4x16x128xf32> to vector<64x128xf32>
    %c0_23 = arith.constant 0 : index
    %c0_24 = arith.constant 0 : index
    %81 = vector.load %arg8[%c0_23, %c0_24] : memref<1x128xf32, #tpu.memory_space<vmem>>, vector<1x128xf32>
    %c0_25 = arith.constant 0 : index
    %c0_26 = arith.constant 0 : index
    %82 = vector.load %arg9[%c0_25, %c0_26] : memref<1x128xf32, #tpu.memory_space<vmem>>, vector<1x128xf32>
    %cst_27 = arith.constant dense<0.000000e+00> : vector<64xf32>
    %83 = vector.multi_reduction <add>, %80, %cst_27 [1] : vector<64x128xf32> to vector<64xf32>
    %84 = vector.shape_cast %83 : vector<64xf32> to vector<64x1xf32>
    %cst_28 = arith.constant 1.280000e+02 : f32
    %85 = vector.broadcast %cst_28 : f32 to vector<64x1xf32>
    %86 = arith.divf %84, %85 : vector<64x1xf32>
    %87 = vector.broadcast %86 : vector<64x1xf32> to vector<64x128xf32>
    %88 = arith.subf %80, %87 : vector<64x128xf32>
    %89 = arith.mulf %88, %88 : vector<64x128xf32>
    %cst_29 = arith.constant dense<0.000000e+00> : vector<64xf32>
    %90 = vector.multi_reduction <add>, %89, %cst_29 [1] : vector<64x128xf32> to vector<64xf32>
    %91 = vector.shape_cast %90 : vector<64xf32> to vector<64x1xf32>
    %cst_30 = arith.constant 1.280000e+02 : f32
    %92 = vector.broadcast %cst_30 : f32 to vector<64x1xf32>
    %93 = arith.divf %91, %92 : vector<64x1xf32>
    %cst_31 = arith.constant 9.99999974E-6 : f32
    %94 = vector.broadcast %cst_31 : f32 to vector<64x1xf32>
    %95 = arith.addf %93, %94 : vector<64x1xf32>
    %96 = math.rsqrt %95 : vector<64x1xf32>
    %97 = vector.broadcast %96 : vector<64x1xf32> to vector<64x128xf32>
    %98 = arith.mulf %88, %97 : vector<64x128xf32>
    %99 = vector.broadcast %81 : vector<1x128xf32> to vector<64x128xf32>
    %100 = arith.mulf %98, %99 : vector<64x128xf32>
    %101 = vector.broadcast %82 : vector<1x128xf32> to vector<64x128xf32>
    %102 = arith.addf %100, %101 : vector<64x128xf32>
    %c0_32 = arith.constant 0 : index
    %c0_33 = arith.constant 0 : index
    %103 = vector.load %arg10[%c0_32, %c0_33] : memref<128x512xf32, #tpu.memory_space<vmem>>, vector<128x512xf32>
    %cst_34 = arith.constant dense<0.000000e+00> : vector<64x512xf32>
    %104 = tpu.matmul %102, %103, %cst_34 {dimension_numbers = #tpu.dot_dimension_numbers<[1], [0], [0], [1], [0, 0, 1, 1], [], []>} : vector<64x128xf32>, vector<128x512xf32>, vector<64x512xf32> -> vector<64x512xf32>
    %c0_35 = arith.constant 0 : index
    %c0_36 = arith.constant 0 : index
    %105 = vector.load %arg11[%c0_35, %c0_36] : memref<1x512xf32, #tpu.memory_space<vmem>>, vector<1x512xf32>
    %106 = vector.broadcast %105 : vector<1x512xf32> to vector<64x512xf32>
    %107 = arith.addf %104, %106 : vector<64x512xf32>
    %cst_37 = arith.constant 5.000000e-01 : f32
    %108 = vector.broadcast %cst_37 : f32 to vector<64x512xf32>
    %109 = arith.mulf %108, %107 : vector<64x512xf32>
    %cst_38 = arith.constant 0.707106769 : f32
    %110 = vector.broadcast %cst_38 : f32 to vector<64x512xf32>
    %111 = arith.mulf %107, %110 : vector<64x512xf32>
    %112 = math.erf %111 : vector<64x512xf32>
    %cst_39 = arith.constant 1.000000e+00 : f32
    %113 = vector.broadcast %cst_39 : f32 to vector<64x512xf32>
    %114 = arith.addf %113, %112 : vector<64x512xf32>
    %115 = arith.mulf %109, %114 : vector<64x512xf32>
    %c0_40 = arith.constant 0 : index
    %c0_41 = arith.constant 0 : index
    %116 = vector.load %arg12[%c0_40, %c0_41] : memref<512x128xf32, #tpu.memory_space<vmem>>, vector<512x128xf32>
    %cst_42 = arith.constant dense<0.000000e+00> : vector<64x128xf32>
    %117 = tpu.matmul %115, %116, %cst_42 {dimension_numbers = #tpu.dot_dimension_numbers<[1], [0], [0], [1], [0, 0, 1, 1], [], []>} : vector<64x512xf32>, vector<512x128xf32>, vector<64x128xf32> -> vector<64x128xf32>
    %c0_43 = arith.constant 0 : index
    %c0_44 = arith.constant 0 : index
    %118 = vector.load %arg13[%c0_43, %c0_44] : memref<1x128xf32, #tpu.memory_space<vmem>>, vector<1x128xf32>
    %119 = vector.broadcast %118 : vector<1x128xf32> to vector<64x128xf32>
    %120 = arith.addf %117, %119 : vector<64x128xf32>
    %121 = arith.addf %80, %120 : vector<64x128xf32>
    %122 = vector.shape_cast %121 : vector<64x128xf32> to vector<4x16x128xf32>
    %c0_45 = arith.constant 0 : index
    %c0_46 = arith.constant 0 : index
    %c0_47 = arith.constant 0 : index
    %123 = vector.load %arg14[%c0_45, %c0_46, %c0_47] : memref<4x16x128xf32, #tpu.memory_space<vmem>>, vector<4x16x128xf32>
    tpu.vector_store %arg14[%c0_45, %c0_46, %c0_47], %122 {strides = array<i32>} : memref<4x16x128xf32, #tpu.memory_space<vmem>>, vector<4x16x128xf32>,
    return
  }
  func.func @transform_0(%arg0: i32) -> (i32, i32, i32) {
    %c0_i32 = arith.constant 0 : i32
    %c0_i32_0 = arith.constant 0 : i32
    %c0_i32_1 = arith.constant 0 : i32
    return %arg0, %c0_i32, %c0_i32_0 : i32, i32, i32
  }
  func.func @transform_1(%arg0: i32) -> (i32, i32) {
    %c0_i32 = arith.constant 0 : i32
    %c0_i32_0 = arith.constant 0 : i32
    %c0_i32_1 = arith.constant 0 : i32
    return %c0_i32, %c0_i32_0 : i32, i32
  }
  func.func @transform_2(%arg0: i32) -> (i32, i32) {
    %c0_i32 = arith.constant 0 : i32
    %c0_i32_0 = arith.constant 0 : i32
    %c0_i32_1 = arith.constant 0 : i32
    return %c0_i32, %c0_i32_0 : i32, i32
  }
  func.func @transform_3(%arg0: i32) -> (i32, i32) {
    %c0_i32 = arith.constant 0 : i32
    %c0_i32_0 = arith.constant 0 : i32
    %c0_i32_1 = arith.constant 0 : i32
    return %c0_i32, %c0_i32_0 : i32, i32
  }
  func.func @transform_4(%arg0: i32) -> (i32, i32) {
    %c0_i32 = arith.constant 0 : i32
    %c0_i32_0 = arith.constant 0 : i32
    %c0_i32_1 = arith.constant 0 : i32
    return %c0_i32, %c0_i32_0 : i32, i32
  }
  func.func @transform_5(%arg0: i32) -> (i32, i32) {
    %c0_i32 = arith.constant 0 : i32
    %c0_i32_0 = arith.constant 0 : i32
    %c0_i32_1 = arith.constant 0 : i32
    return %c0_i32, %c0_i32_0 : i32, i32
  }
  func.func @transform_6(%arg0: i32) -> (i32, i32) {
    %c0_i32 = arith.constant 0 : i32
    %c0_i32_0 = arith.constant 0 : i32
    %c0_i32_1 = arith.constant 0 : i32
    return %c0_i32, %c0_i32_0 : i32, i32
  }
  func.func @transform_7(%arg0: i32) -> (i32, i32) {
    %c0_i32 = arith.constant 0 : i32
    %c0_i32_0 = arith.constant 0 : i32
    %c0_i32_1 = arith.constant 0 : i32
    return %c0_i32, %c0_i32_0 : i32, i32
  }
  func.func @transform_8(%arg0: i32) -> (i32, i32) {
    %c0_i32 = arith.constant 0 : i32
    %c0_i32_0 = arith.constant 0 : i32
    %c0_i32_1 = arith.constant 0 : i32
    return %c0_i32, %c0_i32_0 : i32, i32
  }
  func.func @transform_9(%arg0: i32) -> (i32, i32) {
    %c0_i32 = arith.constant 0 : i32
    %c0_i32_0 = arith.constant 0 : i32
    %c0_i32_1 = arith.constant 0 : i32
    return %c0_i32, %c0_i32_0 : i32, i32
  }
  func.func @transform_10(%arg0: i32) -> (i32, i32) {
    %c0_i32 = arith.constant 0 : i32
    %c0_i32_0 = arith.constant 0 : i32
    %c0_i32_1 = arith.constant 0 : i32
    return %c0_i32, %c0_i32_0 : i32, i32
  }
  func.func @transform_11(%arg0: i32) -> (i32, i32) {
    %c0_i32 = arith.constant 0 : i32
    %c0_i32_0 = arith.constant 0 : i32
    %c0_i32_1 = arith.constant 0 : i32
    return %c0_i32, %c0_i32_0 : i32, i32
  }
  func.func @transform_12(%arg0: i32) -> (i32, i32) {
    %c0_i32 = arith.constant 0 : i32
    %c0_i32_0 = arith.constant 0 : i32
    %c0_i32_1 = arith.constant 0 : i32
    return %c0_i32, %c0_i32_0 : i32, i32
  }
  func.func @transform_13(%arg0: i32) -> (i32, i32, i32) {
    %c0_i32 = arith.constant 0 : i32
    %c0_i32_0 = arith.constant 0 : i32
    %c0_i32_1 = arith.constant 0 : i32
    return %arg0, %c0_i32, %c0_i32_0 : i32, i32, i32
  }
}

</mosaic_0001>

<llo_original>
// kernel: tpu_custom_call.1
$region0: #{tpu_custom_call.1}
  #allocation0 [shape = 'u32[]', space=smem, size = 0x4, offset = 0x4, fixed_abs, tag = 'smem constant byte address 0x4 - core index']
  #allocation1 [shape = 'u32[144,128]{1,0:T(1,128)}', space=vmem, size = 0x12000, scoped, tag = 'internal scratch']
  %s0 = inlined_call_operand.hbm [shape: f32[8,16,128], index: 0, kind: input, shape index: {}]
  %s1 = inlined_call_operand.vmem [shape: f32[1,128], index: 1, kind: input, shape index: {}]
  %s2 = inlined_call_operand.vmem [shape: f32[1,128], index: 2, kind: input, shape index: {}]
  %s3 = inlined_call_operand.vmem [shape: f32[16,8], index: 3, kind: input, shape index: {}]
  %s4 = inlined_call_operand.vmem [shape: f32[1,8], index: 4, kind: input, shape index: {}]
  %s5 = inlined_call_operand.vmem [shape: f32[8,16], index: 5, kind: input, shape index: {}]
  %s6 = inlined_call_operand.vmem [shape: f32[1,16], index: 6, kind: input, shape index: {}]
  %s7 = inlined_call_operand.vmem [shape: f32[1,128], index: 7, kind: input, shape index: {}]
  %s8 = inlined_call_operand.vmem [shape: f32[1,128], index: 8, kind: input, shape index: {}]
  %s9 = inlined_call_operand.hbm [shape: f32[128,512], index: 9, kind: input, shape index: {}]
  %s10 = inlined_call_operand.vmem [shape: f32[1,512], index: 10, kind: input, shape index: {}]
  %s11 = inlined_call_operand.hbm [shape: f32[512,128], index: 11, kind: input, shape index: {}]
  %s12 = inlined_call_operand.vmem [shape: f32[1,128], index: 12, kind: input, shape index: {}]
  %s13 = inlined_call_operand.hbm [shape: f32[8,16,128], index: 13, kind: output, shape index: {}]
  %s14 = sld [smem:[#allocation0]]
  $region97: #{tpu_custom_call.1} parent=0
    _
  %s16 = ssub.s32 1, %s14
  %s17 = scalar_select 0, %s16, %s14
  $region1: #{tpu_custom_call.1} parent=0
    #allocation2 [shape = 'u8[65536]{0}', space=vmem, size = 0x10000, scoped, tag = 'input window, operand 0']
    #allocation3 [shape = 's32[2]{0}', space=sflag, size = 0x8, scoped, tag = 'scoped memory for tpu_custom_call.1']
    #allocation4 [shape = 's32[2]{0}', space=sflag, size = 0x8, scoped, tag = 'scoped memory for tpu_custom_call.1']
    #allocation5 [shape = 'u8[262144]{0}', space=vmem, size = 0x40000, scoped, tag = 'input window, operand 9, single buffered']
    #allocation6 [shape = 's32[1]{0}', space=sflag, size = 0x4, scoped, tag = 'scoped memory for tpu_custom_call.1']
    #allocation7 [shape = 'u8[262144]{0}', space=vmem, size = 0x40000, scoped, tag = 'input window, operand 11, single buffered']
    #allocation8 [shape = 'u8[65536]{0}', space=vmem, size = 0x10000, scoped, tag = 'output window, operand 0']
    %18 = vsyncpa [#allocation3], 0
    %s19 = scalar_lea.sflag [#allocation3], 1
    %20 = vsyncpa %s19, 0
    %21 = vsyncpa [#allocation6], 0
    %22 = vsyncpa [#allocation4], 0
    %s23 = scalar_lea.sflag [#allocation4], 1
    %24 = vsyncpa %s23, 0
    loop: start=0, step=1, limit=4
    $region2: #{tpu_custom_call.1} parent=1 // loop_pre_header
      _
    $region3: #{tpu_custom_call.1} parent=1 // loop_header
      %s26 = sphi 0, %s30
      %p27 = scmp.ge.s32.totalorder %s26, 4
      %s36 = sphi 0, %s38
      %s39 = sphi 0, %s36
      %s40 = sphi 0, %s39
      %s56 = sphi 0, %s40
      %s60 = sphi 0, %s60
      %s62 = sphi 0, %s60
      %s63 = sphi 0, %s62
      %s77 = sphi 0, %s63
      %s81 = sphi 0, %s81
      %s83 = sphi 0, %s81
      %s84 = sphi 0, %s83
      %s98 = sphi 0, %s84
      %s102 = sphi 0, %s102
      %s104 = sphi 0, %s102
      %s105 = sphi 0, %s104
      %s119 = sphi 0, %s105
      %s123 = sphi 0, %s123
      %s125 = sphi 0, %s123
      %s126 = sphi 0, %s125
      %s140 = sphi 0, %s126
      %s144 = sphi 0, %s144
      %s146 = sphi 0, %s144
      %s147 = sphi 0, %s146
      %s161 = sphi 0, %s147
      %s165 = sphi 0, %s165
      %s167 = sphi 0, %s165
      %s168 = sphi 0, %s167
      %s182 = sphi 0, %s168
      %s186 = sphi 0, %s186
      %s188 = sphi 0, %s186
      %s189 = sphi 0, %s188
      %s203 = sphi 0, %s189
      %s207 = sphi 0, %s207
      %s209 = sphi 0, %s207
      %s210 = sphi 0, %s209
      %s224 = sphi 0, %s210
      %s228 = sphi 0, %s228
      %s230 = sphi 0, %s228
      %s231 = sphi 0, %s230
      %s245 = sphi 0, %s231
      %s249 = sphi 0, %s249
      %s251 = sphi 0, %s249
      %s252 = sphi 0, %s251
      %s266 = sphi 0, %s252
      %s270 = sphi 0, %s270
      %s272 = sphi 0, %s270
      %s273 = sphi 0, %s272
      %s287 = sphi 0, %s273
      %s291 = sphi 0, %s291
      %s293 = sphi 0, %s291
      %s294 = sphi 0, %s293
      %s308 = sphi 0, %s294
      %s314 = sphi 0, %s316
      %s317 = sphi 0, %s314
      %s318 = sphi 0, %s317
      %s334 = sphi 0, %s318
    $region4: #{tpu_custom_call.1} parent=1 // loop_header_branch
      %29 = sbr.rel (%p27) target = $region8
    $region5: #{tpu_custom_call.1} parent=1 // loop_body
      %s31 = ssub.s32 %s26, 1
      %s32 = ssub.s32 %s26, 2
      %s33 = sadd.s32 %s26, 1
      %s34 = ssub.s32 %s26, %s33
      %p35 = scmp.eq.s32.totalorder %s34, 0
      %s37 = sadd.s32 %s36, 1
      %s38 = scalar_select %p35, %s36, %s37
      %p41 = pneg %p35
      %p42 = scmp.eq.s32.totalorder %s26, 1
      %p43 = por %p41, %p42
      %p44 = scmp.ne.s32.totalorder %s36, %s39
      %p45 = scmp.eq.s32.totalorder %s26, 0
      %p46 = por %p44, %p45
      %p47 = scmp.ne.s32.totalorder %s36, %s39
      %p48 = scmp.eq.s32.totalorder %s31, 1
      %p49 = por %p47, %p48
      %p50 = scmp.ne.s32.totalorder %s39, %s40
      %p51 = scmp.eq.s32.totalorder %s31, 0
      %p52 = por %p50, %p51
      %p53 = scmp.ne.s32.totalorder %s39, %s40
      %p54 = scmp.eq.s32.totalorder %s32, 1
      %p55 = por %p53, %p54
      %p57 = scmp.ne.s32.totalorder %s40, %s56
      %p58 = scmp.eq.s32.totalorder %s32, 0
      %p59 = por %p57, %p58
      %s61 = sadd.s32 %s60, 1
      %p64 = scmp.eq.s32.totalorder %s26, 1
      %p65 = scmp.ne.s32.totalorder %s60, %s62
      %p66 = scmp.eq.s32.totalorder %s26, 0
      %p67 = por %p65, %p66
      %p68 = scmp.ne.s32.totalorder %s60, %s62
      %p69 = scmp.eq.s32.totalorder %s31, 1
      %p70 = por %p68, %p69
      %p71 = scmp.ne.s32.totalorder %s62, %s63
      %p72 = scmp.eq.s32.totalorder %s31, 0
      %p73 = por %p71, %p72
      %p74 = scmp.ne.s32.totalorder %s62, %s63
      %p75 = scmp.eq.s32.totalorder %s32, 1
      %p76 = por %p74, %p75
      %p78 = scmp.ne.s32.totalorder %s63, %s77
      %p79 = scmp.eq.s32.totalorder %s32, 0
      %p80 = por %p78, %p79
      %s82 = sadd.s32 %s81, 1
      %p85 = scmp.eq.s32.totalorder %s26, 1
      %p86 = scmp.ne.s32.totalorder %s81, %s83
      %p87 = scmp.eq.s32.totalorder %s26, 0
      %p88 = por %p86, %p87
      %p89 = scmp.ne.s32.totalorder %s81, %s83
      %p90 = scmp.eq.s32.totalorder %s31, 1
      %p91 = por %p89, %p90
      %p92 = scmp.ne.s32.totalorder %s83, %s84
      %p93 = scmp.eq.s32.totalorder %s31, 0
      %p94 = por %p92, %p93
      %p95 = scmp.ne.s32.totalorder %s83, %s84
      %p96 = scmp.eq.s32.totalorder %s32, 1
      %p97 = por %p95, %p96
      %p99 = scmp.ne.s32.totalorder %s84, %s98
      %p100 = scmp.eq.s32.totalorder %s32, 0
      %p101 = por %p99, %p100
      %s103 = sadd.s32 %s102, 1
      %p106 = scmp.eq.s32.totalorder %s26, 1
      %p107 = scmp.ne.s32.totalorder %s102, %s104
      %p108 = scmp.eq.s32.totalorder %s26, 0
      %p109 = por %p107, %p108
      %p110 = scmp.ne.s32.totalorder %s102, %s104
      %p111 = scmp.eq.s32.totalorder %s31, 1
      %p112 = por %p110, %p111
      %p113 = scmp.ne.s32.totalorder %s104, %s105
      %p114 = scmp.eq.s32.totalorder %s31, 0
      %p115 = por %p113, %p114
      %p116 = scmp.ne.s32.totalorder %s104, %s105
      %p117 = scmp.eq.s32.totalorder %s32, 1
      %p118 = por %p116, %p117
      %p120 = scmp.ne.s32.totalorder %s105, %s119
      %p121 = scmp.eq.s32.totalorder %s32, 0
      %p122 = por %p120, %p121
      %s124 = sadd.s32 %s123, 1
      %p127 = scmp.eq.s32.totalorder %s26, 1
      %p128 = scmp.ne.s32.totalorder %s123, %s125
      %p129 = scmp.eq.s32.totalorder %s26, 0
      %p130 = por %p128, %p129
      %p131 = scmp.ne.s32.totalorder %s123, %s125
      %p132 = scmp.eq.s32.totalorder %s31, 1
      %p133 = por %p131, %p132
      %p134 = scmp.ne.s32.totalorder %s125, %s126
      %p135 = scmp.eq.s32.totalorder %s31, 0
      %p136 = por %p134, %p135
      %p137 = scmp.ne.s32.totalorder %s125, %s126
      %p138 = scmp.eq.s32.totalorder %s32, 1
      %p139 = por %p137, %p138
      %p141 = scmp.ne.s32.totalorder %s126, %s140
      %p142 = scmp.eq.s32.totalorder %s32, 0
      %p143 = por %p141, %p142
      %s145 = sadd.s32 %s144, 1
      %p148 = scmp.eq.s32.totalorder %s26, 1
      %p149 = scmp.ne.s32.totalorder %s144, %s146
      %p150 = scmp.eq.s32.totalorder %s26, 0
      %p151 = por %p149, %p150
      %p152 = scmp.ne.s32.totalorder %s144, %s146
      %p153 = scmp.eq.s32.totalorder %s31, 1
      %p154 = por %p152, %p153
      %p155 = scmp.ne.s32.totalorder %s146, %s147
      %p156 = scmp.eq.s32.totalorder %s31, 0
      %p157 = por %p155, %p156
      %p158 = scmp.ne.s32.totalorder %s146, %s147
      %p159 = scmp.eq.s32.totalorder %s32, 1
      %p160 = por %p158, %p159
      %p162 = scmp.ne.s32.totalorder %s147, %s161
      %p163 = scmp.eq.s32.totalorder %s32, 0
      %p164 = por %p162, %p163
      %s166 = sadd.s32 %s165, 1
      %p169 = scmp.eq.s32.totalorder %s26, 1
      %p170 = scmp.ne.s32.totalorder %s165, %s167
      %p171 = scmp.eq.s32.totalorder %s26, 0
      %p172 = por %p170, %p171
      %p173 = scmp.ne.s32.totalorder %s165, %s167
      %p174 = scmp.eq.s32.totalorder %s31, 1
      %p175 = por %p173, %p174
      %p176 = scmp.ne.s32.totalorder %s167, %s168
      %p177 = scmp.eq.s32.totalorder %s31, 0
      %p178 = por %p176, %p177
      %p179 = scmp.ne.s32.totalorder %s167, %s168
      %p180 = scmp.eq.s32.totalorder %s32, 1
      %p181 = por %p179, %p180
      %p183 = scmp.ne.s32.totalorder %s168, %s182
      %p184 = scmp.eq.s32.totalorder %s32, 0
      %p185 = por %p183, %p184
      %s187 = sadd.s32 %s186, 1
      %p190 = scmp.eq.s32.totalorder %s26, 1
      %p191 = scmp.ne.s32.totalorder %s186, %s188
      %p192 = scmp.eq.s32.totalorder %s26, 0
      %p193 = por %p191, %p192
      %p194 = scmp.ne.s32.totalorder %s186, %s188
      %p195 = scmp.eq.s32.totalorder %s31, 1
      %p196 = por %p194, %p195
      %p197 = scmp.ne.s32.totalorder %s188, %s189
      %p198 = scmp.eq.s32.totalorder %s31, 0
      %p199 = por %p197, %p198
      %p200 = scmp.ne.s32.totalorder %s188, %s189
      %p201 = scmp.eq.s32.totalorder %s32, 1
      %p202 = por %p200, %p201
      %p204 = scmp.ne.s32.totalorder %s189, %s203
      %p205 = scmp.eq.s32.totalorder %s32, 0
      %p206 = por %p204, %p205
      %s208 = sadd.s32 %s207, 1
      %p211 = scmp.eq.s32.totalorder %s26, 1
      %p212 = scmp.ne.s32.totalorder %s207, %s209
      %p213 = scmp.eq.s32.totalorder %s26, 0
      %p214 = por %p212, %p213
      %p215 = scmp.ne.s32.totalorder %s207, %s209
      %p216 = scmp.eq.s32.totalorder %s31, 1
      %p217 = por %p215, %p216
      %p218 = scmp.ne.s32.totalorder %s209, %s210
      %p219 = scmp.eq.s32.totalorder %s31, 0
      %p220 = por %p218, %p219
      %p221 = scmp.ne.s32.totalorder %s209, %s210
      %p222 = scmp.eq.s32.totalorder %s32, 1
      %p223 = por %p221, %p222
      %p225 = scmp.ne.s32.totalorder %s210, %s224
      %p226 = scmp.eq.s32.totalorder %s32, 0
      %p227 = por %p225, %p226
      %s229 = sadd.s32 %s228, 1
      %p232 = scmp.eq.s32.totalorder %s26, 1
      %p233 = scmp.ne.s32.totalorder %s228, %s230
      %p234 = scmp.eq.s32.totalorder %s26, 0
      %p235 = por %p233, %p234
      %p236 = scmp.ne.s32.totalorder %s228, %s230
      %p237 = scmp.eq.s32.totalorder %s31, 1
      %p238 = por %p236, %p237
      %p239 = scmp.ne.s32.totalorder %s230, %s231
      %p240 = scmp.eq.s32.totalorder %s31, 0
      %p241 = por %p239, %p240
      %p242 = scmp.ne.s32.totalorder %s230, %s231
      %p243 = scmp.eq.s32.totalorder %s32, 1
      %p244 = por %p242, %p243
      %p246 = scmp.ne.s32.totalorder %s231, %s245
      %p247 = scmp.eq.s32.totalorder %s32, 0
      %p248 = por %p246, %p247
      %s250 = sadd.s32 %s249, 1
      %p253 = scmp.eq.s32.totalorder %s26, 1
      %p254 = scmp.ne.s32.totalorder %s249, %s251
      %p255 = scmp.eq.s32.totalorder %s26, 0
      %p256 = por %p254, %p255
      %p257 = scmp.ne.s32.totalorder %s249, %s251
      %p258 = scmp.eq.s32.totalorder %s31, 1
      %p259 = por %p257, %p258
      %p260 = scmp.ne.s32.totalorder %s251, %s252
      %p261 = scmp.eq.s32.totalorder %s31, 0
      %p262 = por %p260, %p261
      %p263 = scmp.ne.s32.totalorder %s251, %s252
      %p264 = scmp.eq.s32.totalorder %s32, 1
      %p265 = por %p263, %p264
      %p267 = scmp.ne.s32.totalorder %s252, %s266
      %p268 = scmp.eq.s32.totalorder %s32, 0
      %p269 = por %p267, %p268
      %s271 = sadd.s32 %s270, 1
      %p274 = scmp.eq.s32.totalorder %s26, 1
      %p275 = scmp.ne.s32.totalorder %s270, %s272
      %p276 = scmp.eq.s32.totalorder %s26, 0
      %p277 = por %p275, %p276
      %p278 = scmp.ne.s32.totalorder %s270, %s272
      %p279 = scmp.eq.s32.totalorder %s31, 1
      %p280 = por %p278, %p279
      %p281 = scmp.ne.s32.totalorder %s272, %s273
      %p282 = scmp.eq.s32.totalorder %s31, 0
      %p283 = por %p281, %p282
      %p284 = scmp.ne.s32.totalorder %s272, %s273
      %p285 = scmp.eq.s32.totalorder %s32, 1
      %p286 = por %p284, %p285
      %p288 = scmp.ne.s32.totalorder %s273, %s287
      %p289 = scmp.eq.s32.totalorder %s32, 0
      %p290 = por %p288, %p289
      %s292 = sadd.s32 %s291, 1
      %p295 = scmp.eq.s32.totalorder %s26, 1
      %p296 = scmp.ne.s32.totalorder %s291, %s293
      %p297 = scmp.eq.s32.totalorder %s26, 0
      %p298 = por %p296, %p297
      %p299 = scmp.ne.s32.totalorder %s291, %s293
      %p300 = scmp.eq.s32.totalorder %s31, 1
      %p301 = por %p299, %p300
      %p302 = scmp.ne.s32.totalorder %s293, %s294
      %p303 = scmp.eq.s32.totalorder %s31, 0
      %p304 = por %p302, %p303
      %p305 = scmp.ne.s32.totalorder %s293, %s294
      %p306 = scmp.eq.s32.totalorder %s32, 1
      %p307 = por %p305, %p306
      %p309 = scmp.ne.s32.totalorder %s294, %s308
      %p310 = scmp.eq.s32.totalorder %s32, 0
      %p311 = por %p309, %p310
      %s312 = ssub.s32 %s26, %s33
      %p313 = scmp.eq.s32.totalorder %s312, 0
      %s315 = sadd.s32 %s314, 1
      %s316 = scalar_select %p313, %s314, %s315
      %p319 = pneg %p313
      %p320 = scmp.eq.s32.totalorder %s26, 1
      %p321 = por %p319, %p320
      %p322 = scmp.ne.s32.totalorder %s314, %s317
      %p323 = scmp.eq.s32.totalorder %s26, 0
      %p324 = por %p322, %p323
      %p325 = scmp.ne.s32.totalorder %s314, %s317
      %p326 = scmp.eq.s32.totalorder %s31, 1
      %p327 = por %p325, %p326
      %p328 = scmp.ne.s32.totalorder %s317, %s318
      %p329 = scmp.eq.s32.totalorder %s31, 0
      %p330 = por %p328, %p329
      %p331 = scmp.ne.s32.totalorder %s317, %s318
      %p332 = scmp.eq.s32.totalorder %s32, 1
      %p333 = por %p331, %p332
      %p335 = scmp.ne.s32.totalorder %s318, %s334
      %p336 = scmp.eq.s32.totalorder %s32, 0
      %p337 = por %p335, %p336
      %p338 = scmp.le.s32.totalorder 1, %s26
      %p339 = scmp.lt.s32.totalorder %s26, 3
      %p340 = pnand %p338, %p339
      %p341 = pneg %p340
      // Predicated region
      $region9: #{tpu_custom_call.1} parent=5 // pred_check
        _
      $region10: #{tpu_custom_call.1} parent=5 // pred_check_branch
        %343 = sbr.rel (%p340) target = $region12
      $region11: #{tpu_custom_call.1} parent=5 // pred_region
        %s344 = ssub.s32 %s26, 1
        // Predicated region
        $region13: #{tpu_custom_call.1} parent=11 // pred_check
          %p345 = pneg %p73
        $region14: #{tpu_custom_call.1} parent=11 // pred_check_branch
          %347 = sbr.rel (%p345) target = $region16
        $region15: #{tpu_custom_call.1} parent=11 // pred_region
          _
        $region16: #{tpu_custom_call.1} parent=11 // pred_fallthru
          _
        // Predicated region
        $region17: #{tpu_custom_call.1} parent=11 // pred_check
          %p348 = pneg %p94
        $region18: #{tpu_custom_call.1} parent=11 // pred_check_branch
          %350 = sbr.rel (%p348) target = $region20
        $region19: #{tpu_custom_call.1} parent=11 // pred_region
          _
        $region20: #{tpu_custom_call.1} parent=11 // pred_fallthru
          _
        // Predicated region
        $region21: #{tpu_custom_call.1} parent=11 // pred_check
          %p351 = pneg %p115
        $region22: #{tpu_custom_call.1} parent=11 // pred_check_branch
          %353 = sbr.rel (%p351) target = $region24
        $region23: #{tpu_custom_call.1} parent=11 // pred_region
          _
        $region24: #{tpu_custom_call.1} parent=11 // pred_fallthru
          _
        // Predicated region
        $region25: #{tpu_custom_call.1} parent=11 // pred_check
          %p354 = pneg %p136
        $region26: #{tpu_custom_call.1} parent=11 // pred_check_branch
          %356 = sbr.rel (%p354) target = $region28
        $region27: #{tpu_custom_call.1} parent=11 // pred_region
          _
        $region28: #{tpu_custom_call.1} parent=11 // pred_fallthru
          _
        // Predicated region
        $region29: #{tpu_custom_call.1} parent=11 // pred_check
          %p357 = pneg %p157
        $region30: #{tpu_custom_call.1} parent=11 // pred_check_branch
          %359 = sbr.rel (%p357) target = $region32
        $region31: #{tpu_custom_call.1} parent=11 // pred_region
          _
        $region32: #{tpu_custom_call.1} parent=11 // pred_fallthru
          _
        // Predicated region
        $region33: #{tpu_custom_call.1} parent=11 // pred_check
          %p360 = pneg %p178
        $region34: #{tpu_custom_call.1} parent=11 // pred_check_branch
          %362 = sbr.rel (%p360) target = $region36
        $region35: #{tpu_custom_call.1} parent=11 // pred_region
          _
        $region36: #{tpu_custom_call.1} parent=11 // pred_fallthru
          _
        // Predicated region
        $region37: #{tpu_custom_call.1} parent=11 // pred_check
          %p363 = pneg %p199
        $region38: #{tpu_custom_call.1} parent=11 // pred_check_branch
          %365 = sbr.rel (%p363) target = $region40
        $region39: #{tpu_custom_call.1} parent=11 // pred_region
          _
        $region40: #{tpu_custom_call.1} parent=11 // pred_fallthru
          _
        // Predicated region
        $region41: #{tpu_custom_call.1} parent=11 // pred_check
          %p366 = pneg %p220
        $region42: #{tpu_custom_call.1} parent=11 // pred_check_branch
          %368 = sbr.rel (%p366) target = $region44
        $region43: #{tpu_custom_call.1} parent=11 // pred_region
          _
        $region44: #{tpu_custom_call.1} parent=11 // pred_fallthru
          _
        // Predicated region
        $region45: #{tpu_custom_call.1} parent=11 // pred_check
          %p369 = pneg %p241
        $region46: #{tpu_custom_call.1} parent=11 // pred_check_branch
          %371 = sbr.rel (%p369) target = $region48
        $region47: #{tpu_custom_call.1} parent=11 // pred_region
          %s373 = ssub.s32 8192, 8192
          %374 = vsyncadd [#allocation6], %s373
          %s375 = sshll.u32 [#allocation5], 4
          %s376 = int_to_ptr.vmem [resolvable:$true] %s375
          %381 = dma.hbm_to_vmem [thread:$0]  %s9, 8192, %s376, [#allocation6], 512, 512, 32
        $region48: #{tpu_custom_call.1} parent=11 // pred_fallthru
          _
        // Predicated region
        $region49: #{tpu_custom_call.1} parent=11 // pred_check
          %p382 = pneg %p262
        $region50: #{tpu_custom_call.1} parent=11 // pred_check_branch
          %384 = sbr.rel (%p382) target = $region52
        $region51: #{tpu_custom_call.1} parent=11 // pred_region
          _
        $region52: #{tpu_custom_call.1} parent=11 // pred_fallthru
          _
        // Predicated region
        $region53: #{tpu_custom_call.1} parent=11 // pred_check
          %p385 = pneg %p283
        $region54: #{tpu_custom_call.1} parent=11 // pred_check_branch
          %387 = sbr.rel (%p385) target = $region56
        $region55: #{tpu_custom_call.1} parent=11 // pred_region
          %s389 = ssub.s32 8192, 8192
          %390 = vsyncadd [#allocation6], %s389
          %s391 = sshll.u32 [#allocation7], 4
          %s392 = int_to_ptr.vmem [resolvable:$true] %s391
          %397 = dma.hbm_to_vmem [thread:$0]  %s11, 8192, %s392, [#allocation6], 128, 128, 8
        $region56: #{tpu_custom_call.1} parent=11 // pred_fallthru
          _
        // Predicated region
        $region57: #{tpu_custom_call.1} parent=11 // pred_check
          %p398 = pneg %p304
        $region58: #{tpu_custom_call.1} parent=11 // pred_check_branch
          %400 = sbr.rel (%p398) target = $region60
        $region59: #{tpu_custom_call.1} parent=11 // pred_region
          _
        $region60: #{tpu_custom_call.1} parent=11 // pred_fallthru
          _
      $region12: #{tpu_custom_call.1} parent=5 // pred_fallthru
        _
      %p401 = scmp.lt.s32.totalorder %s26, 2
      // Predicated region
      $region61: #{tpu_custom_call.1} parent=5 // pred_check
        %p402 = pneg %p401
      $region62: #{tpu_custom_call.1} parent=5 // pred_check_branch
        %404 = sbr.rel (%p402) target = $region64
      $region63: #{tpu_custom_call.1} parent=5 // pred_region
        // Predicated region
        $region65: #{tpu_custom_call.1} parent=63 // pred_check
          %p405 = pneg %p46
        $region66: #{tpu_custom_call.1} parent=63 // pred_check_branch
          %407 = sbr.rel (%p405) target = $region68
        $region67: #{tpu_custom_call.1} parent=63 // pred_region
          %s408 = sand.u32 %s36, 1
          %s409 = scalar_lea.sflag [#allocation3], %s408
          %s410 = sand.u32 %s36, 1
          %s411 = smul.addr %s410, 64
          %s412 = scalar_lea.vmem [#allocation2], %s411
          %s413 = smul.u32 4, %s26
          %s415 = ssub.s32 1024, 1024
          %416 = vsyncadd %s409, %s415
          %s417 = smul.addr %s413, 2
          %s418 = smul.addr %s417, 128
          %s419 = scalar_lea.hbm %s0, %s418
          %s420 = sshll.u32 %s412, 4
          %s421 = int_to_ptr.vmem [resolvable:$true] %s420
          %426 = dma.hbm_to_vmem [thread:$0]  %s419, 1024, %s421, %s409, 128, 128, 8
        $region68: #{tpu_custom_call.1} parent=63 // pred_fallthru
          _
      $region64: #{tpu_custom_call.1} parent=5 // pred_fallthru
        _
      %p427 = scmp.le.s32.totalorder 1, %s26
      %p428 = scmp.lt.s32.totalorder %s26, 3
      %p429 = pnand %p427, %p428
      %p430 = pneg %p429
      // Predicated region
      $region69: #{tpu_custom_call.1} parent=5 // pred_check
        _
      $region70: #{tpu_custom_call.1} parent=5 // pred_check_branch
        %432 = sbr.rel (%p429) target = $region72
      $region71: #{tpu_custom_call.1} parent=5 // pred_region
        %s433 = ssub.s32 %s26, 1
        %s434 = sand.u32 %s39, 1
        %s435 = scalar_lea.sflag [#allocation3], %s434
        %s436 = sand.u32 %s39, 1
        %s437 = smul.addr %s436, 64
        %s438 = scalar_lea.vmem [#allocation2], %s437
        // Predicated region
        $region73: #{tpu_custom_call.1} parent=71 // pred_check
          %p439 = pneg %p52
        $region74: #{tpu_custom_call.1} parent=71 // pred_check_branch
          %441 = sbr.rel (%p439) target = $region76
        $region75: #{tpu_custom_call.1} parent=71 // pred_region
          %442 = dma.done %s435, 1024
        $region76: #{tpu_custom_call.1} parent=71 // pred_fallthru
          _
        // Predicated region
        $region77: #{tpu_custom_call.1} parent=71 // pred_check
          %p443 = pneg %p241
        $region78: #{tpu_custom_call.1} parent=71 // pred_check_branch
          %445 = sbr.rel (%p443) target = $region80
        $region79: #{tpu_custom_call.1} parent=71 // pred_region
          %446 = dma.done [#allocation6], 8192
        $region80: #{tpu_custom_call.1} parent=71 // pred_fallthru
          _
        // Predicated region
        $region81: #{tpu_custom_call.1} parent=71 // pred_check
          %p447 = pneg %p283
        $region82: #{tpu_custom_call.1} parent=71 // pred_check_branch
          %449 = sbr.rel (%p447) target = $region84
        $region83: #{tpu_custom_call.1} parent=71 // pred_region
          %450 = dma.done [#allocation6], 8192
        $region84: #{tpu_custom_call.1} parent=71 // pred_fallthru
          _
        %s451 = sand.u32 %s39, 1
        %s452 = scalar_lea.sflag [#allocation3], %s451
        %s453 = sand.u32 %s39, 1
        %s454 = smul.addr %s453, 64
        %s455 = scalar_lea.vmem [#allocation2], %s454
        %p456 = pneg %p52
        %p457 = pneg %p49
        %p458 = pneg %p73
        %p459 = pneg %p70
        %p460 = pneg %p94
        %p461 = pneg %p91
        %p462 = pneg %p115
        %p463 = pneg %p112
        %p464 = pneg %p136
        %p465 = pneg %p133
        %p466 = pneg %p157
        %p467 = pneg %p154
        %p468 = pneg %p178
        %p469 = pneg %p175
        %p470 = pneg %p199
        %p471 = pneg %p196
        %p472 = pneg %p220
        %p473 = pneg %p217
        %p474 = pneg %p241
        %p475 = pneg %p238
        %p476 = pneg %p262
        %p477 = pneg %p259
        %p478 = pneg %p283
        %p479 = pneg %p280
        %p480 = pneg %p304
        %p481 = pneg %p301
        %p482 = pneg %p330
        %p483 = pneg %p327
        %s484 = sand.u32 %s317, 1
        %s485 = scalar_lea.sflag [#allocation4], %s484
        %s486 = sand.u32 %s317, 1
        %s487 = smul.addr %s486, 64
        %s488 = scalar_lea.vmem [#allocation8], %s487
        %s489 = smul.u32 4, %s31
        %s490 = smul.u32 4, %s31
        %v491 = vld [vmem:[%s438] sm:$0xff]
        %v492 = vld [vmem:[%s438 + $0x8] sm:$0xff]
        %v493 = vld [vmem:[%s438 + $0x10] sm:$0xff]
        %v494 = vld [vmem:[%s438 + $0x18] sm:$0xff]
        %v495 = vld [vmem:[%s438 + $0x20] sm:$0xff]
        %v496 = vld [vmem:[%s438 + $0x28] sm:$0xff]
        %v497 = vld [vmem:[%s438 + $0x30] sm:$0xff]
        %v498 = vld [vmem:[%s438 + $0x38] sm:$0xff]
        %v499 = vld [vmem:[%s1] sm:$0x1]
        %v500 = vld [vmem:[%s2] sm:$0x1]
        %501 = vadd.xlane.f32.xlu0 %v491
        %v502 = vpop.xlane.xlu0 %501
        %503 = vadd.xlane.f32.xlu0 %v492
        %v504 = vpop.xlane.xlu0 %503
        %505 = vadd.xlane.f32.xlu0 %v493
        %v506 = vpop.xlane.xlu0 %505
        %507 = vadd.xlane.f32.xlu0 %v494
        %v508 = vpop.xlane.xlu0 %507
        %509 = vadd.xlane.f32.xlu0 %v495
        %v510 = vpop.xlane.xlu0 %509
        %511 = vadd.xlane.f32.xlu0 %v496
        %v512 = vpop.xlane.xlu0 %511
        %513 = vadd.xlane.f32.xlu0 %v497
        %v514 = vpop.xlane.xlu0 %513
        %515 = vadd.xlane.f32.xlu0 %v498
        %v516 = vpop.xlane.xlu0 %515
        %v517 = vrcp.pop 128.0
        %v518 = vmul.f32 %v502, %v517
        %v519 = vmul.f32 %v504, %v517
        %v520 = vmul.f32 %v506, %v517
        %v521 = vmul.f32 %v508, %v517
        %v522 = vmul.f32 %v510, %v517
        %v523 = vmul.f32 %v512, %v517
        %v524 = vmul.f32 %v514, %v517
        %v525 = vmul.f32 %v516, %v517
        %v526 = vsub.f32 %v491, %v518
        %v527 = vsub.f32 %v492, %v519
        %v528 = vsub.f32 %v493, %v520
        %v529 = vsub.f32 %v494, %v521
        %v530 = vsub.f32 %v495, %v522
        %v531 = vsub.f32 %v496, %v523
        %v532 = vsub.f32 %v497, %v524
        %v533 = vsub.f32 %v498, %v525
        %v534 = vmul.f32 %v526, %v526
        %v535 = vmul.f32 %v527, %v527
        %v536 = vmul.f32 %v528, %v528
        %v537 = vmul.f32 %v529, %v529
        %v538 = vmul.f32 %v530, %v530
        %v539 = vmul.f32 %v531, %v531
        %v540 = vmul.f32 %v532, %v532
        %v541 = vmul.f32 %v533, %v533
        %542 = vadd.xlane.f32.xlu0 %v534
        %v543 = vpop.xlane.xlu0 %542
        %544 = vadd.xlane.f32.xlu0 %v535
        %v545 = vpop.xlane.xlu0 %544
        %546 = vadd.xlane.f32.xlu0 %v536
        %v547 = vpop.xlane.xlu0 %546
        %548 = vadd.xlane.f32.xlu0 %v537
        %v549 = vpop.xlane.xlu0 %548
        %550 = vadd.xlane.f32.xlu0 %v538
        %v551 = vpop.xlane.xlu0 %550
        %552 = vadd.xlane.f32.xlu0 %v539
        %v553 = vpop.xlane.xlu0 %552
        %554 = vadd.xlane.f32.xlu0 %v540
        %v555 = vpop.xlane.xlu0 %554
        %556 = vadd.xlane.f32.xlu0 %v541
        %v557 = vpop.xlane.xlu0 %556
        %v558 = vmul.f32 %v543, %v517
        %v559 = vmul.f32 %v545, %v517
        %v560 = vmul.f32 %v547, %v517
        %v561 = vmul.f32 %v549, %v517
        %v562 = vmul.f32 %v551, %v517
        %v563 = vmul.f32 %v553, %v517
        %v564 = vmul.f32 %v555, %v517
        %v565 = vmul.f32 %v557, %v517
        %v566 = vadd.f32 %v558, 1e-05
        %v567 = vadd.f32 %v559, 1e-05
        %v568 = vadd.f32 %v560, 1e-05
        %v569 = vadd.f32 %v561, 1e-05
        %v570 = vadd.f32 %v562, 1e-05
        %v571 = vadd.f32 %v563, 1e-05
        %v572 = vadd.f32 %v564, 1e-05
        %v573 = vadd.f32 %v565, 1e-05
        %v574 = vrsqrt.pop %v566
        %v575 = vrsqrt.pop %v567
        %v576 = vrsqrt.pop %v568
        %v577 = vrsqrt.pop %v569
        %v578 = vrsqrt.pop %v570
        %v579 = vrsqrt.pop %v571
        %v580 = vrsqrt.pop %v572
        %v581 = vrsqrt.pop %v573
        %v582 = vmul.f32 %v526, %v574
        %v583 = vmul.f32 %v527, %v575
        %v584 = vmul.f32 %v528, %v576
        %v585 = vmul.f32 %v529, %v577
        %v586 = vmul.f32 %v530, %v578
        %v587 = vmul.f32 %v531, %v579
        %v588 = vmul.f32 %v532, %v580
        %v589 = vmul.f32 %v533, %v581
        %v591 = vlaneseq
        %v592 = vshrl.u32 %v591, 7
        %v593 = vsub.s32 0, %v592
        %v594 = vrot.slane %v499, %v593
        %v596 = vmul.f32 %v582, %v594
        %v597 = vmul.f32 %v583, %v594
        %v598 = vmul.f32 %v584, %v594
        %v599 = vmul.f32 %v585, %v594
        %v600 = vmul.f32 %v586, %v594
        %v601 = vmul.f32 %v587, %v594
        %v602 = vmul.f32 %v588, %v594
        %v603 = vmul.f32 %v589, %v594
        %v605 = vlaneseq
        %v606 = vshrl.u32 %v605, 7
        %v607 = vsub.s32 0, %v606
        %v608 = vrot.slane %v500, %v607
        %v610 = vadd.f32 %v596, %v608
        %v611 = vadd.f32 %v597, %v608
        %v612 = vadd.f32 %v598, %v608
        %v613 = vadd.f32 %v599, %v608
        %v614 = vadd.f32 %v600, %v608
        %v615 = vadd.f32 %v601, %v608
        %v616 = vadd.f32 %v602, %v608
        %v617 = vadd.f32 %v603, %v608
        %618 = vxpose.xlu0.b32.start [1/16] %v610, 128
        %619 = vxpose.xlu0.b32.cont [2/16] %v611, 128
        %620 = vxpose.xlu0.b32.cont [3/16] 0.0, 128
        %621 = vxpose.xlu0.b32.cont [4/16] 0.0, 128
        %622 = vxpose.xlu0.b32.cont [5/16] 0.0, 128
        %623 = vxpose.xlu0.b32.cont [6/16] 0.0, 128
        %624 = vxpose.xlu0.b32.cont [7/16] 0.0, 128
        %625 = vxpose.xlu0.b32.cont [8/16] 0.0, 128
        %626 = vxpose.xlu0.b32.cont [9/16] 0.0, 128
        %627 = vxpose.xlu0.b32.cont [10/16] 0.0, 128
        %628 = vxpose.xlu0.b32.cont [11/16] 0.0, 128
        %629 = vxpose.xlu0.b32.cont [12/16] 0.0, 128
        %630 = vxpose.xlu0.b32.cont [13/16] 0.0, 128
        %631 = vxpose.xlu0.b32.cont [14/16] 0.0, 128
        %632 = vxpose.xlu0.b32.cont [15/16] 0.0, 128
        %633 = vxpose.xlu0.b32.end [16/16] 0.0, 128
        %v634 = vpop.trf.xlu0
        %v635 = vpop.trf.xlu0
        %v636 = vpop.trf.xlu0
        %v637 = vpop.trf.xlu0
        %v638 = vpop.trf.xlu0
        %v639 = vpop.trf.xlu0
        %v640 = vpop.trf.xlu0
        %v641 = vpop.trf.xlu0
        %v642 = vpop.trf.xlu0
        %v643 = vpop.trf.xlu0
        %v644 = vpop.trf.xlu0
        %v645 = vpop.trf.xlu0
        %v646 = vpop.trf.xlu0
        %v647 = vpop.trf.xlu0
        %v648 = vpop.trf.xlu0
        %v649 = vpop.trf.xlu0
        %650 = vxpose.xlu0.b32.start [1/16] %v612, 128
        %651 = vxpose.xlu0.b32.cont [2/16] %v613, 128
        %652 = vxpose.xlu0.b32.cont [3/16] 0.0, 128
        %653 = vxpose.xlu0.b32.cont [4/16] 0.0, 128
        %654 = vxpose.xlu0.b32.cont [5/16] 0.0, 128
        %655 = vxpose.xlu0.b32.cont [6/16] 0.0, 128
        %656 = vxpose.xlu0.b32.cont [7/16] 0.0, 128
        %657 = vxpose.xlu0.b32.cont [8/16] 0.0, 128
        %658 = vxpose.xlu0.b32.cont [9/16] 0.0, 128
        %659 = vxpose.xlu0.b32.cont [10/16] 0.0, 128
        %660 = vxpose.xlu0.b32.cont [11/16] 0.0, 128
        %661 = vxpose.xlu0.b32.cont [12/16] 0.0, 128
        %662 = vxpose.xlu0.b32.cont [13/16] 0.0, 128
        %663 = vxpose.xlu0.b32.cont [14/16] 0.0, 128
        %664 = vxpose.xlu0.b32.cont [15/16] 0.0, 128
        %665 = vxpose.xlu0.b32.end [16/16] 0.0, 128
        %v666 = vpop.trf.xlu0
        %v667 = vpop.trf.xlu0
        %v668 = vpop.trf.xlu0
        %v669 = vpop.trf.xlu0
        %v670 = vpop.trf.xlu0
        %v671 = vpop.trf.xlu0
        %v672 = vpop.trf.xlu0
        %v673 = vpop.trf.xlu0
        %v674 = vpop.trf.xlu0
        %v675 = vpop.trf.xlu0
        %v676 = vpop.trf.xlu0
        %v677 = vpop.trf.xlu0
        %v678 = vpop.trf.xlu0
        %v679 = vpop.trf.xlu0
        %v680 = vpop.trf.xlu0
        %v681 = vpop.trf.xlu0
        %682 = vxpose.xlu0.b32.start [1/16] %v614, 128
        %683 = vxpose.xlu0.b32.cont [2/16] %v615, 128
        %684 = vxpose.xlu0.b32.cont [3/16] 0.0, 128
        %685 = vxpose.xlu0.b32.cont [4/16] 0.0, 128
        %686 = vxpose.xlu0.b32.cont [5/16] 0.0, 128
        %687 = vxpose.xlu0.b32.cont [6/16] 0.0, 128
        %688 = vxpose.xlu0.b32.cont [7/16] 0.0, 128
        %689 = vxpose.xlu0.b32.cont [8/16] 0.0, 128
        %690 = vxpose.xlu0.b32.cont [9/16] 0.0, 128
        %691 = vxpose.xlu0.b32.cont [10/16] 0.0, 128
        %692 = vxpose.xlu0.b32.cont [11/16] 0.0, 128
        %693 = vxpose.xlu0.b32.cont [12/16] 0.0, 128
        %694 = vxpose.xlu0.b32.cont [13/16] 0.0, 128
        %695 = vxpose.xlu0.b32.cont [14/16] 0.0, 128
        %696 = vxpose.xlu0.b32.cont [15/16] 0.0, 128
        %697 = vxpose.xlu0.b32.end [16/16] 0.0, 128
        %v698 = vpop.trf.xlu0
        %v699 = vpop.trf.xlu0
        %v700 = vpop.trf.xlu0
        %v701 = vpop.trf.xlu0
        %v702 = vpop.trf.xlu0
        %v703 = vpop.trf.xlu0
        %v704 = vpop.trf.xlu0
        %v705 = vpop.trf.xlu0
        %v706 = vpop.trf.xlu0
        %v707 = vpop.trf.xlu0
        %v708 = vpop.trf.xlu0
        %v709 = vpop.trf.xlu0
        %v710 = vpop.trf.xlu0
        %v711 = vpop.trf.xlu0
        %v712 = vpop.trf.xlu0
        %v713 = vpop.trf.xlu0
        %714 = vxpose.xlu0.b32.start [1/16] %v616, 128
        %715 = vxpose.xlu0.b32.cont [2/16] %v617, 128
        %716 = vxpose.xlu0.b32.cont [3/16] 0.0, 128
        %717 = vxpose.xlu0.b32.cont [4/16] 0.0, 128
        %718 = vxpose.xlu0.b32.cont [5/16] 0.0, 128
        %719 = vxpose.xlu0.b32.cont [6/16] 0.0, 128
        %720 = vxpose.xlu0.b32.cont [7/16] 0.0, 128
        %721 = vxpose.xlu0.b32.cont [8/16] 0.0, 128
        %722 = vxpose.xlu0.b32.cont [9/16] 0.0, 128
        %723 = vxpose.xlu0.b32.cont [10/16] 0.0, 128
        %724 = vxpose.xlu0.b32.cont [11/16] 0.0, 128
        %725 = vxpose.xlu0.b32.cont [12/16] 0.0, 128
        %726 = vxpose.xlu0.b32.cont [13/16] 0.0, 128
        %727 = vxpose.xlu0.b32.cont [14/16] 0.0, 128
        %728 = vxpose.xlu0.b32.cont [15/16] 0.0, 128
        %729 = vxpose.xlu0.b32.end [16/16] 0.0, 128
        %v730 = vpop.trf.xlu0
        %v731 = vpop.trf.xlu0
        %v732 = vpop.trf.xlu0
        %v733 = vpop.trf.xlu0
        %v734 = vpop.trf.xlu0
        %v735 = vpop.trf.xlu0
        %v736 = vpop.trf.xlu0
        %v737 = vpop.trf.xlu0
        %v738 = vpop.trf.xlu0
        %v739 = vpop.trf.xlu0
        %v740 = vpop.trf.xlu0
        %v741 = vpop.trf.xlu0
        %v742 = vpop.trf.xlu0
        %v743 = vpop.trf.xlu0
        %v744 = vpop.trf.xlu0
        %v745 = vpop.trf.xlu0
        %v746 = vld [vmem:[%s3] sm:$0xff]
        %v747 = vld [vmem:[%s3 + $0x8] sm:$0xff]
        %v748 = vld [vmem:[%s4] sm:$0x1]
        %v750 = vlaneseq
        %v751 = vshrl.u32 %v750, 7
        %v752 = vsub.s32 0, %v751
        %v753 = vrot.slane %v748, %v752
        %vm755 = vcmask 130048
        %v757 = vsel %vm755, %v634, 0
        %v760 = vsel %vm755, %v635, 0
        %v763 = vsel %vm755, %v636, 0
        %v766 = vsel %vm755, %v637, 0
        %v769 = vsel %vm755, %v638, 0
        %v772 = vsel %vm755, %v639, 0
        %v775 = vsel %vm755, %v640, 0
        %v778 = vsel %vm755, %v641, 0
        %v781 = vsel %vm755, %v642, 0
        %v784 = vsel %vm755, %v643, 0
        %v787 = vsel %vm755, %v644, 0
        %v790 = vsel %vm755, %v645, 0
        %v793 = vsel %vm755, %v646, 0
        %v796 = vsel %vm755, %v647, 0
        %v799 = vsel %vm755, %v648, 0
        %v802 = vsel %vm755, %v649, 0
        %v805 = vsel %vm755, %v666, 0
        %v808 = vsel %vm755, %v667, 0
        %v811 = vsel %vm755, %v668, 0
        %v814 = vsel %vm755, %v669, 0
        %v817 = vsel %vm755, %v670, 0
        %v820 = vsel %vm755, %v671, 0
        %v823 = vsel %vm755, %v672, 0
        %v826 = vsel %vm755, %v673, 0
        %v829 = vsel %vm755, %v674, 0
        %v832 = vsel %vm755, %v675, 0
        %v835 = vsel %vm755, %v676, 0
        %v838 = vsel %vm755, %v677, 0
        %v841 = vsel %vm755, %v678, 0
        %v844 = vsel %vm755, %v679, 0
        %v847 = vsel %vm755, %v680, 0
        %v850 = vsel %vm755, %v681, 0
        %v853 = vsel %vm755, %v698, 0
        %v856 = vsel %vm755, %v699, 0
        %v859 = vsel %vm755, %v700, 0
        %v862 = vsel %vm755, %v701, 0
        %v865 = vsel %vm755, %v702, 0
        %v868 = vsel %vm755, %v703, 0
        %v871 = vsel %vm755, %v704, 0
        %v874 = vsel %vm755, %v705, 0
        %v877 = vsel %vm755, %v706, 0
        %v880 = vsel %vm755, %v707, 0
        %v883 = vsel %vm755, %v708, 0
        %v886 = vsel %vm755, %v709, 0
        %v889 = vsel %vm755, %v710, 0
        %v892 = vsel %vm755, %v711, 0
        %v895 = vsel %vm755, %v712, 0
        %v898 = vsel %vm755, %v713, 0
        %v901 = vsel %vm755, %v730, 0
        %v904 = vsel %vm755, %v731, 0
        %v907 = vsel %vm755, %v732, 0
        %v910 = vsel %vm755, %v733, 0
        %v913 = vsel %vm755, %v734, 0
        %v916 = vsel %vm755, %v735, 0
        %v919 = vsel %vm755, %v736, 0
        %v922 = vsel %vm755, %v737, 0
        %v925 = vsel %vm755, %v738, 0
        %v928 = vsel %vm755, %v739, 0
        %v931 = vsel %vm755, %v740, 0
        %v934 = vsel %vm755, %v741, 0
        %v937 = vsel %vm755, %v742, 0
        %v940 = vsel %vm755, %v743, 0
        %v943 = vsel %vm755, %v744, 0
        %v946 = vsel %vm755, %v745, 0
        %948 = vmatprep.subr.mxu0 0.0
        %949 = vmatpush1.msra.mxu0 0.0
        %950 = vmatprep.subr.mxu0 0.0
        %951 = vmatpush1.msra.mxu0 0.0
        %952 = vmatprep.subr.mxu0 0.0
        %953 = vmatpush1.msra.mxu0 0.0
        %954 = vmatprep.subr.mxu0 0.0
        %955 = vmatpush1.msra.mxu0 0.0
        %956 = vmatprep.subr.mxu0 0.0
        %957 = vmatpush1.msra.mxu0 0.0
        %958 = vmatprep.subr.mxu0 0.0
        %959 = vmatpush1.msra.mxu0 0.0
        %960 = vmatprep.subr.mxu0 0.0
        %961 = vmatpush1.msra.mxu0 0.0
        %962 = vmatprep.subr.mxu0 0.0
        %963 = vmatpush1.msra.mxu0 0.0
        %964 = vmatprep.subr.mxu0 0.0
        %965 = vmatpush1.msra.mxu0 0.0
        %966 = vmatprep.subr.mxu0 0.0
        %967 = vmatpush1.msra.mxu0 0.0
        %968 = vmatprep.subr.mxu0 0.0
        %969 = vmatpush1.msra.mxu0 0.0
        %970 = vmatprep.subr.mxu0 0.0
        %971 = vmatpush1.msra.mxu0 0.0
        %972 = vmatprep.subr.mxu0 0.0
        %973 = vmatpush1.msra.mxu0 0.0
        %974 = vmatprep.subr.mxu0 0.0
        %975 = vmatpush1.msra.mxu0 0.0
        %976 = vmatprep.subr.mxu0 0.0
        %977 = vmatpush1.msra.mxu0 %v747
        %978 = vmatprep.subr.mxu0 0.0
        %979 = vmatpush1.msra.mxu0 %v746
        %980 = vmatprep.subr.mxu0 0.0
        %981 = vmatpush2.msra.mxu0 0.0
        %982 = vmatprep.subr.mxu0 0.0
        %983 = vmatpush2.msra.mxu0 0.0
        %984 = vmatprep.subr.mxu0 0.0
        %985 = vmatpush2.msra.mxu0 0.0
        %986 = vmatprep.subr.mxu0 0.0
        %987 = vmatpush2.msra.mxu0 0.0
        %988 = vmatprep.subr.mxu0 0.0
        %989 = vmatpush2.msra.mxu0 0.0
        %990 = vmatprep.subr.mxu0 0.0
        %991 = vmatpush2.msra.mxu0 0.0
        %992 = vmatprep.subr.mxu0 0.0
        %993 = vmatpush2.msra.mxu0 0.0
        %994 = vmatprep.subr.mxu0 0.0
        %995 = vmatpush2.msra.mxu0 0.0
        %996 = vmatprep.subr.mxu0 0.0
        %997 = vmatpush2.msra.mxu0 0.0
        %998 = vmatprep.subr.mxu0 0.0
        %999 = vmatpush2.msra.mxu0 0.0
        %1000 = vmatprep.subr.mxu0 0.0
        %1001 = vmatpush2.msra.mxu0 0.0
        %1002 = vmatprep.subr.mxu0 0.0
        %1003 = vmatpush2.msra.mxu0 0.0
        %1004 = vmatprep.subr.mxu0 0.0
        %1005 = vmatpush2.msra.mxu0 0.0
        %1006 = vmatprep.subr.mxu0 0.0
        %1007 = vmatpush2.msra.mxu0 0.0
        %1008 = vmatprep.subr.mxu0 0.0
        %1009 = vmatpush2.msra.mxu0 0.0
        %1010 = vmatprep.subr.mxu0 0.0
        %1011 = vmatpush2.msra.mxu0 0.0
        %1012 = vmatprep.mubr.f32.mxu0 0.0
        %1013 = vmatmul.mubr.f32.gmra.mxu0 %v757
        %v1014 = vpop.f32.mrf.mxu0
        %v1015 = vadd.f32 %v753, %v1014
        %v1016 = vpop.f32.mrf.mxu0
        %1017 = vmatprep.mubr.f32.mxu0 0.0
        %1018 = vmatmul.mubr.f32.gmra.mxu0 %v760
        %v1019 = vpop.f32.mrf.mxu0
        %v1020 = vadd.f32 %v753, %v1019
        %v1021 = vpop.f32.mrf.mxu0
        %1022 = vmatprep.mubr.f32.mxu0 0.0
        %1023 = vmatmul.mubr.f32.gmra.mxu0 %v763
        %v1024 = vpop.f32.mrf.mxu0
        %v1025 = vadd.f32 %v753, %v1024
        %v1026 = vpop.f32.mrf.mxu0
        %1027 = vmatprep.mubr.f32.mxu0 0.0
        %1028 = vmatmul.mubr.f32.gmra.mxu0 %v766
        %v1029 = vpop.f32.mrf.mxu0
        %v1030 = vadd.f32 %v753, %v1029
        %v1031 = vpop.f32.mrf.mxu0
        %1032 = vmatprep.mubr.f32.mxu0 0.0
        %1033 = vmatmul.mubr.f32.gmra.mxu0 %v769
        %v1034 = vpop.f32.mrf.mxu0
        %v1035 = vadd.f32 %v753, %v1034
        %v1036 = vpop.f32.mrf.mxu0
        %1037 = vmatprep.mubr.f32.mxu0 0.0
        %1038 = vmatmul.mubr.f32.gmra.mxu0 %v772
        %v1039 = vpop.f32.mrf.mxu0
        %v1040 = vadd.f32 %v753, %v1039
        %v1041 = vpop.f32.mrf.mxu0
        %1042 = vmatprep.mubr.f32.mxu0 0.0
        %1043 = vmatmul.mubr.f32.gmra.mxu0 %v775
        %v1044 = vpop.f32.mrf.mxu0
        %v1045 = vadd.f32 %v753, %v1044
        %v1046 = vpop.f32.mrf.mxu0
        %1047 = vmatprep.mubr.f32.mxu0 0.0
        %1048 = vmatmul.mubr.f32.gmra.mxu0 %v778
        %v1049 = vpop.f32.mrf.mxu0
        %v1050 = vadd.f32 %v753, %v1049
        %v1051 = vpop.f32.mrf.mxu0
        %1052 = vmatprep.mubr.f32.mxu0 0.0
        %1053 = vmatmul.mubr.f32.gmra.mxu0 %v781
        %v1054 = vpop.f32.mrf.mxu0
        %v1055 = vadd.f32 %v753, %v1054
        %v1056 = vpop.f32.mrf.mxu0
        %1057 = vmatprep.mubr.f32.mxu0 0.0
        %1058 = vmatmul.mubr.f32.gmra.mxu0 %v784
        %v1059 = vpop.f32.mrf.mxu0
        %v1060 = vadd.f32 %v753, %v1059
        %v1061 = vpop.f32.mrf.mxu0
        %1062 = vmatprep.mubr.f32.mxu0 0.0
        %1063 = vmatmul.mubr.f32.gmra.mxu0 %v787
        %v1064 = vpop.f32.mrf.mxu0
        %v1065 = vadd.f32 %v753, %v1064
        %v1066 = vpop.f32.mrf.mxu0
        %1067 = vmatprep.mubr.f32.mxu0 0.0
        %1068 = vmatmul.mubr.f32.gmra.mxu0 %v790
        %v1069 = vpop.f32.mrf.mxu0
        %v1070 = vadd.f32 %v753, %v1069
        %v1071 = vpop.f32.mrf.mxu0
        %1072 = vmatprep.mubr.f32.mxu0 0.0
        %1073 = vmatmul.mubr.f32.gmra.mxu0 %v793
        %v1074 = vpop.f32.mrf.mxu0
        %v1075 = vadd.f32 %v753, %v1074
        %v1076 = vpop.f32.mrf.mxu0
        %1077 = vmatprep.mubr.f32.mxu0 0.0
        %1078 = vmatmul.mubr.f32.gmra.mxu0 %v796
        %v1079 = vpop.f32.mrf.mxu0
        %v1080 = vadd.f32 %v753, %v1079
        %v1081 = vpop.f32.mrf.mxu0
        %1082 = vmatprep.mubr.f32.mxu0 0.0
        %1083 = vmatmul.mubr.f32.gmra.mxu0 %v799
        %v1084 = vpop.f32.mrf.mxu0
        %v1085 = vadd.f32 %v753, %v1084
        %v1086 = vpop.f32.mrf.mxu0
        %1087 = vmatprep.mubr.f32.mxu0 0.0
        %1088 = vmatmul.mubr.f32.gmra.mxu0 %v802
        %v1089 = vpop.f32.mrf.mxu0
        %v1090 = vadd.f32 %v753, %v1089
        %v1091 = vpop.f32.mrf.mxu0
        %1092 = vmatprep.mubr.f32.mxu0 0.0
        %1093 = vmatmul.mubr.f32.gmra.mxu0 %v805
        %v1094 = vpop.f32.mrf.mxu0
        %v1095 = vadd.f32 %v753, %v1094
        %v1096 = vpop.f32.mrf.mxu0
        %1097 = vmatprep.mubr.f32.mxu0 0.0
        %1098 = vmatmul.mubr.f32.gmra.mxu0 %v808
        %v1099 = vpop.f32.mrf.mxu0
        %v1100 = vadd.f32 %v753, %v1099
        %v1101 = vpop.f32.mrf.mxu0
        %1102 = vmatprep.mubr.f32.mxu0 0.0
        %1103 = vmatmul.mubr.f32.gmra.mxu0 %v811
        %v1104 = vpop.f32.mrf.mxu0
        %v1105 = vadd.f32 %v753, %v1104
        %v1106 = vpop.f32.mrf.mxu0
        %1107 = vmatprep.mubr.f32.mxu0 0.0
        %1108 = vmatmul.mubr.f32.gmra.mxu0 %v814
        %v1109 = vpop.f32.mrf.mxu0
        %v1110 = vadd.f32 %v753, %v1109
        %v1111 = vpop.f32.mrf.mxu0
        %1112 = vmatprep.mubr.f32.mxu0 0.0
        %1113 = vmatmul.mubr.f32.gmra.mxu0 %v817
        %v1114 = vpop.f32.mrf.mxu0
        %v1115 = vadd.f32 %v753, %v1114
        %v1116 = vpop.f32.mrf.mxu0
        %1117 = vmatprep.mubr.f32.mxu0 0.0
        %1118 = vmatmul.mubr.f32.gmra.mxu0 %v820
        %v1119 = vpop.f32.mrf.mxu0
        %v1120 = vadd.f32 %v753, %v1119
        %v1121 = vpop.f32.mrf.mxu0
        %1122 = vmatprep.mubr.f32.mxu0 0.0
        %1123 = vmatmul.mubr.f32.gmra.mxu0 %v823
        %v1124 = vpop.f32.mrf.mxu0
        %v1125 = vadd.f32 %v753, %v1124
        %v1126 = vpop.f32.mrf.mxu0
        %1127 = vmatprep.mubr.f32.mxu0 0.0
        %1128 = vmatmul.mubr.f32.gmra.mxu0 %v826
        %v1129 = vpop.f32.mrf.mxu0
        %v1130 = vadd.f32 %v753, %v1129
        %v1131 = vpop.f32.mrf.mxu0
        %1132 = vmatprep.mubr.f32.mxu0 0.0
        %1133 = vmatmul.mubr.f32.gmra.mxu0 %v829
        %v1134 = vpop.f32.mrf.mxu0
        %v1135 = vadd.f32 %v753, %v1134
        %v1136 = vpop.f32.mrf.mxu0
        %1137 = vmatprep.mubr.f32.mxu0 0.0
        %1138 = vmatmul.mubr.f32.gmra.mxu0 %v832
        %v1139 = vpop.f32.mrf.mxu0
        %v1140 = vadd.f32 %v753, %v1139
        %v1141 = vpop.f32.mrf.mxu0
        %1142 = vmatprep.mubr.f32.mxu0 0.0
        %1143 = vmatmul.mubr.f32.gmra.mxu0 %v835
        %v1144 = vpop.f32.mrf.mxu0
        %v1145 = vadd.f32 %v753, %v1144
        %v1146 = vpop.f32.mrf.mxu0
        %1147 = vmatprep.mubr.f32.mxu0 0.0
        %1148 = vmatmul.mubr.f32.gmra.mxu0 %v838
        %v1149 = vpop.f32.mrf.mxu0
        %v1150 = vadd.f32 %v753, %v1149
        %v1151 = vpop.f32.mrf.mxu0
        %1152 = vmatprep.mubr.f32.mxu0 0.0
        %1153 = vmatmul.mubr.f32.gmra.mxu0 %v841
        %v1154 = vpop.f32.mrf.mxu0
        %v1155 = vadd.f32 %v753, %v1154
        %v1156 = vpop.f32.mrf.mxu0
        %1157 = vmatprep.mubr.f32.mxu0 0.0
        %1158 = vmatmul.mubr.f32.gmra.mxu0 %v844
        %v1159 = vpop.f32.mrf.mxu0
        %v1160 = vadd.f32 %v753, %v1159
        %v1161 = vpop.f32.mrf.mxu0
        %1162 = vmatprep.mubr.f32.mxu0 0.0
        %1163 = vmatmul.mubr.f32.gmra.mxu0 %v847
        %v1164 = vpop.f32.mrf.mxu0
        %v1165 = vadd.f32 %v753, %v1164
        %v1166 = vpop.f32.mrf.mxu0
        %1167 = vmatprep.mubr.f32.mxu0 0.0
        %1168 = vmatmul.mubr.f32.gmra.mxu0 %v850
        %v1169 = vpop.f32.mrf.mxu0
        %v1170 = vadd.f32 %v753, %v1169
        %v1171 = vpop.f32.mrf.mxu0
        %1172 = vmatprep.mubr.f32.mxu0 0.0
        %1173 = vmatmul.mubr.f32.gmra.mxu0 %v853
        %v1174 = vpop.f32.mrf.mxu0
        %v1175 = vadd.f32 %v753, %v1174
        %v1176 = vpop.f32.mrf.mxu0
        %1177 = vmatprep.mubr.f32.mxu0 0.0
        %1178 = vmatmul.mubr.f32.gmra.mxu0 %v856
        %v1179 = vpop.f32.mrf.mxu0
        %v1180 = vadd.f32 %v753, %v1179
        %v1181 = vpop.f32.mrf.mxu0
        %1182 = vmatprep.mubr.f32.mxu0 0.0
        %1183 = vmatmul.mubr.f32.gmra.mxu0 %v859
        %v1184 = vpop.f32.mrf.mxu0
        %v1185 = vadd.f32 %v753, %v1184
        %v1186 = vpop.f32.mrf.mxu0
        %1187 = vmatprep.mubr.f32.mxu0 0.0
        %1188 = vmatmul.mubr.f32.gmra.mxu0 %v862
        %v1189 = vpop.f32.mrf.mxu0
        %v1190 = vadd.f32 %v753, %v1189
        %v1191 = vpop.f32.mrf.mxu0
        %1192 = vmatprep.mubr.f32.mxu0 0.0
        %1193 = vmatmul.mubr.f32.gmra.mxu0 %v865
        %v1194 = vpop.f32.mrf.mxu0
        %v1195 = vadd.f32 %v753, %v1194
        %v1196 = vpop.f32.mrf.mxu0
        %1197 = vmatprep.mubr.f32.mxu0 0.0
        %1198 = vmatmul.mubr.f32.gmra.mxu0 %v868
        %v1199 = vpop.f32.mrf.mxu0
        %v1200 = vadd.f32 %v753, %v1199
        %v1201 = vpop.f32.mrf.mxu0
        %1202 = vmatprep.mubr.f32.mxu0 0.0
        %1203 = vmatmul.mubr.f32.gmra.mxu0 %v871
        %v1204 = vpop.f32.mrf.mxu0
        %v1205 = vadd.f32 %v753, %v1204
        %v1206 = vpop.f32.mrf.mxu0
        %1207 = vmatprep.mubr.f32.mxu0 0.0
        %1208 = vmatmul.mubr.f32.gmra.mxu0 %v874
        %v1209 = vpop.f32.mrf.mxu0
        %v1210 = vadd.f32 %v753, %v1209
        %v1211 = vpop.f32.mrf.mxu0
        %1212 = vmatprep.mubr.f32.mxu0 0.0
        %1213 = vmatmul.mubr.f32.gmra.mxu0 %v877
        %v1214 = vpop.f32.mrf.mxu0
        %v1215 = vadd.f32 %v753, %v1214
        %v1216 = vpop.f32.mrf.mxu0
        %1217 = vmatprep.mubr.f32.mxu0 0.0
        %1218 = vmatmul.mubr.f32.gmra.mxu0 %v880
        %v1219 = vpop.f32.mrf.mxu0
        %v1220 = vadd.f32 %v753, %v1219
        %v1221 = vpop.f32.mrf.mxu0
        %1222 = vmatprep.mubr.f32.mxu0 0.0
        %1223 = vmatmul.mubr.f32.gmra.mxu0 %v883
        %v1224 = vpop.f32.mrf.mxu0
        %v1225 = vadd.f32 %v753, %v1224
        %v1226 = vpop.f32.mrf.mxu0
        %1227 = vmatprep.mubr.f32.mxu0 0.0
        %1228 = vmatmul.mubr.f32.gmra.mxu0 %v886
        %v1229 = vpop.f32.mrf.mxu0
        %v1230 = vadd.f32 %v753, %v1229
        %v1231 = vpop.f32.mrf.mxu0
        %1232 = vmatprep.mubr.f32.mxu0 0.0
        %1233 = vmatmul.mubr.f32.gmra.mxu0 %v889
        %v1234 = vpop.f32.mrf.mxu0
        %v1235 = vadd.f32 %v753, %v1234
        %v1236 = vpop.f32.mrf.mxu0
        %1237 = vmatprep.mubr.f32.mxu0 0.0
        %1238 = vmatmul.mubr.f32.gmra.mxu0 %v892
        %v1239 = vpop.f32.mrf.mxu0
        %v1240 = vadd.f32 %v753, %v1239
        %v1241 = vpop.f32.mrf.mxu0
        %1242 = vmatprep.mubr.f32.mxu0 0.0
        %1243 = vmatmul.mubr.f32.gmra.mxu0 %v895
        %v1244 = vpop.f32.mrf.mxu0
        %v1245 = vadd.f32 %v753, %v1244
        %v1246 = vpop.f32.mrf.mxu0
        %1247 = vmatprep.mubr.f32.mxu0 0.0
        %1248 = vmatmul.mubr.f32.gmra.mxu0 %v898
        %v1249 = vpop.f32.mrf.mxu0
        %v1250 = vadd.f32 %v753, %v1249
        %v1251 = vpop.f32.mrf.mxu0
        %1252 = vmatprep.mubr.f32.mxu0 0.0
        %1253 = vmatmul.mubr.f32.gmra.mxu0 %v901
        %v1254 = vpop.f32.mrf.mxu0
        %v1255 = vadd.f32 %v753, %v1254
        %v1256 = vpop.f32.mrf.mxu0
        %1257 = vmatprep.mubr.f32.mxu0 0.0
        %1258 = vmatmul.mubr.f32.gmra.mxu0 %v904
        %v1259 = vpop.f32.mrf.mxu0
        %v1260 = vadd.f32 %v753, %v1259
        %v1261 = vpop.f32.mrf.mxu0
        %1262 = vmatprep.mubr.f32.mxu0 0.0
        %1263 = vmatmul.mubr.f32.gmra.mxu0 %v907
        %v1264 = vpop.f32.mrf.mxu0
        %v1265 = vadd.f32 %v753, %v1264
        %v1266 = vpop.f32.mrf.mxu0
        %1267 = vmatprep.mubr.f32.mxu0 0.0
        %1268 = vmatmul.mubr.f32.gmra.mxu0 %v910
        %v1269 = vpop.f32.mrf.mxu0
        %v1270 = vadd.f32 %v753, %v1269
        %v1271 = vpop.f32.mrf.mxu0
        %1272 = vmatprep.mubr.f32.mxu0 0.0
        %1273 = vmatmul.mubr.f32.gmra.mxu0 %v913
        %v1274 = vpop.f32.mrf.mxu0
        %v1275 = vadd.f32 %v753, %v1274
        %v1276 = vpop.f32.mrf.mxu0
        %1277 = vmatprep.mubr.f32.mxu0 0.0
        %1278 = vmatmul.mubr.f32.gmra.mxu0 %v916
        %v1279 = vpop.f32.mrf.mxu0
        %v1280 = vadd.f32 %v753, %v1279
        %v1281 = vpop.f32.mrf.mxu0
        %1282 = vmatprep.mubr.f32.mxu0 0.0
        %1283 = vmatmul.mubr.f32.gmra.mxu0 %v919
        %v1284 = vpop.f32.mrf.mxu0
        %v1285 = vadd.f32 %v753, %v1284
        %v1286 = vpop.f32.mrf.mxu0
        %1287 = vmatprep.mubr.f32.mxu0 0.0
        %1288 = vmatmul.mubr.f32.gmra.mxu0 %v922
        %v1289 = vpop.f32.mrf.mxu0
        %v1290 = vadd.f32 %v753, %v1289
        %v1291 = vpop.f32.mrf.mxu0
        %1292 = vmatprep.mubr.f32.mxu0 0.0
        %1293 = vmatmul.mubr.f32.gmra.mxu0 %v925
        %v1294 = vpop.f32.mrf.mxu0
        %v1295 = vadd.f32 %v753, %v1294
        %v1296 = vpop.f32.mrf.mxu0
        %1297 = vmatprep.mubr.f32.mxu0 0.0
        %1298 = vmatmul.mubr.f32.gmra.mxu0 %v928
        %v1299 = vpop.f32.mrf.mxu0
        %v1300 = vadd.f32 %v753, %v1299
        %v1301 = vpop.f32.mrf.mxu0
        %1302 = vmatprep.mubr.f32.mxu0 0.0
        %1303 = vmatmul.mubr.f32.gmra.mxu0 %v931
        %v1304 = vpop.f32.mrf.mxu0
        %v1305 = vadd.f32 %v753, %v1304
        %v1306 = vpop.f32.mrf.mxu0
        %1307 = vmatprep.mubr.f32.mxu0 0.0
        %1308 = vmatmul.mubr.f32.gmra.mxu0 %v934
        %v1309 = vpop.f32.mrf.mxu0
        %v1310 = vadd.f32 %v753, %v1309
        %v1311 = vpop.f32.mrf.mxu0
        %1312 = vmatprep.mubr.f32.mxu0 0.0
        %1313 = vmatmul.mubr.f32.gmra.mxu0 %v937
        %v1314 = vpop.f32.mrf.mxu0
        %v1315 = vadd.f32 %v753, %v1314
        %v1316 = vpop.f32.mrf.mxu0
        %1317 = vmatprep.mubr.f32.mxu0 0.0
        %1318 = vmatmul.mubr.f32.gmra.mxu0 %v940
        %v1319 = vpop.f32.mrf.mxu0
        %v1320 = vadd.f32 %v753, %v1319
        %v1321 = vpop.f32.mrf.mxu0
        %1322 = vmatprep.mubr.f32.mxu0 0.0
        %1323 = vmatmul.mubr.f32.gmra.mxu0 %v943
        %v1324 = vpop.f32.mrf.mxu0
        %v1325 = vadd.f32 %v753, %v1324
        %v1326 = vpop.f32.mrf.mxu0
        %1327 = vmatprep.mubr.f32.mxu0 0.0
        %1328 = vmatmul.mubr.f32.gmra.mxu0 %v946
        %v1329 = vpop.f32.mrf.mxu0
        %v1330 = vadd.f32 %v753, %v1329
        %v1331 = vpop.f32.mrf.mxu0
        %1332 = vdwg.mxu0
        %v1333 = vmul.f32 %v1015, 0.5
        %v1334 = vmul.f32 %v1020, 0.5
        %v1335 = vmul.f32 %v1025, 0.5
        %v1336 = vmul.f32 %v1030, 0.5
        %v1337 = vmul.f32 %v1035, 0.5
        %v1338 = vmul.f32 %v1040, 0.5
        %v1339 = vmul.f32 %v1045, 0.5
        %v1340 = vmul.f32 %v1050, 0.5
        %v1341 = vmul.f32 %v1055, 0.5
        %v1342 = vmul.f32 %v1060, 0.5
        %v1343 = vmul.f32 %v1065, 0.5
        %v1344 = vmul.f32 %v1070, 0.5
        %v1345 = vmul.f32 %v1075, 0.5
        %v1346 = vmul.f32 %v1080, 0.5
        %v1347 = vmul.f32 %v1085, 0.5
        %v1348 = vmul.f32 %v1090, 0.5
        %v1349 = vmul.f32 %v1095, 0.5
        %v1350 = vmul.f32 %v1100, 0.5
        %v1351 = vmul.f32 %v1105, 0.5
        %v1352 = vmul.f32 %v1110, 0.5
        %v1353 = vmul.f32 %v1115, 0.5
        %v1354 = vmul.f32 %v1120, 0.5
        %v1355 = vmul.f32 %v1125, 0.5
        %v1356 = vmul.f32 %v1130, 0.5
        %v1357 = vmul.f32 %v1135, 0.5
        %v1358 = vmul.f32 %v1140, 0.5
        %v1359 = vmul.f32 %v1145, 0.5
        %v1360 = vmul.f32 %v1150, 0.5
        %v1361 = vmul.f32 %v1155, 0.5
        %v1362 = vmul.f32 %v1160, 0.5
        %v1363 = vmul.f32 %v1165, 0.5
        %v1364 = vmul.f32 %v1170, 0.5
        %v1365 = vmul.f32 %v1175, 0.5
        %v1366 = vmul.f32 %v1180, 0.5
        %v1367 = vmul.f32 %v1185, 0.5
        %v1368 = vmul.f32 %v1190, 0.5
        %v1369 = vmul.f32 %v1195, 0.5
        %v1370 = vmul.f32 %v1200, 0.5
        %v1371 = vmul.f32 %v1205, 0.5
        %v1372 = vmul.f32 %v1210, 0.5
        %v1373 = vmul.f32 %v1215, 0.5
        %v1374 = vmul.f32 %v1220, 0.5
        %v1375 = vmul.f32 %v1225, 0.5
        %v1376 = vmul.f32 %v1230, 0.5
        %v1377 = vmul.f32 %v1235, 0.5
        %v1378 = vmul.f32 %v1240, 0.5
        %v1379 = vmul.f32 %v1245, 0.5
        %v1380 = vmul.f32 %v1250, 0.5
        %v1381 = vmul.f32 %v1255, 0.5
        %v1382 = vmul.f32 %v1260, 0.5
        %v1383 = vmul.f32 %v1265, 0.5
        %v1384 = vmul.f32 %v1270, 0.5
        %v1385 = vmul.f32 %v1275, 0.5
        %v1386 = vmul.f32 %v1280, 0.5
        %v1387 = vmul.f32 %v1285, 0.5
        %v1388 = vmul.f32 %v1290, 0.5
        %v1389 = vmul.f32 %v1295, 0.5
        %v1390 = vmul.f32 %v1300, 0.5
        %v1391 = vmul.f32 %v1305, 0.5
        %v1392 = vmul.f32 %v1310, 0.5
        %v1393 = vmul.f32 %v1315, 0.5
        %v1394 = vmul.f32 %v1320, 0.5
        %v1395 = vmul.f32 %v1325, 0.5
        %v1396 = vmul.f32 %v1330, 0.5
        %v1397 = vmul.f32 %v1015, 0.70710677
        %v1398 = vmul.f32 %v1020, 0.70710677
        %v1399 = vmul.f32 %v1025, 0.70710677
        %v1400 = vmul.f32 %v1030, 0.70710677
        %v1401 = vmul.f32 %v1035, 0.70710677
        %v1402 = vmul.f32 %v1040, 0.70710677
        %v1403 = vmul.f32 %v1045, 0.70710677
        %v1404 = vmul.f32 %v1050, 0.70710677
        %v1405 = vmul.f32 %v1055, 0.70710677
        %v1406 = vmul.f32 %v1060, 0.70710677
        %v1407 = vmul.f32 %v1065, 0.70710677
        %v1408 = vmul.f32 %v1070, 0.70710677
        %v1409 = vmul.f32 %v1075, 0.70710677
        %v1410 = vmul.f32 %v1080, 0.70710677
        %v1411 = vmul.f32 %v1085, 0.70710677
        %v1412 = vmul.f32 %v1090, 0.70710677
        %v1413 = vmul.f32 %v1095, 0.70710677
        %v1414 = vmul.f32 %v1100, 0.70710677
        %v1415 = vmul.f32 %v1105, 0.70710677
        %v1416 = vmul.f32 %v1110, 0.70710677
        %v1417 = vmul.f32 %v1115, 0.70710677
        %v1418 = vmul.f32 %v1120, 0.70710677
        %v1419 = vmul.f32 %v1125, 0.70710677
        %v1420 = vmul.f32 %v1130, 0.70710677
        %v1421 = vmul.f32 %v1135, 0.70710677
        %v1422 = vmul.f32 %v1140, 0.70710677
        %v1423 = vmul.f32 %v1145, 0.70710677
        %v1424 = vmul.f32 %v1150, 0.70710677
        %v1425 = vmul.f32 %v1155, 0.70710677
        %v1426 = vmul.f32 %v1160, 0.70710677
        %v1427 = vmul.f32 %v1165, 0.70710677
        %v1428 = vmul.f32 %v1170, 0.70710677
        %v1429 = vmul.f32 %v1175, 0.70710677
        %v1430 = vmul.f32 %v1180, 0.70710677
        %v1431 = vmul.f32 %v1185, 0.70710677
        %v1432 = vmul.f32 %v1190, 0.70710677
        %v1433 = vmul.f32 %v1195, 0.70710677
        %v1434 = vmul.f32 %v1200, 0.70710677
        %v1435 = vmul.f32 %v1205, 0.70710677
        %v1436 = vmul.f32 %v1210, 0.70710677
        %v1437 = vmul.f32 %v1215, 0.70710677
        %v1438 = vmul.f32 %v1220, 0.70710677
        %v1439 = vmul.f32 %v1225, 0.70710677
        %v1440 = vmul.f32 %v1230, 0.70710677
        %v1441 = vmul.f32 %v1235, 0.70710677
        %v1442 = vmul.f32 %v1240, 0.70710677
        %v1443 = vmul.f32 %v1245, 0.70710677
        %v1444 = vmul.f32 %v1250, 0.70710677
        %v1445 = vmul.f32 %v1255, 0.70710677
        %v1446 = vmul.f32 %v1260, 0.70710677
        %v1447 = vmul.f32 %v1265, 0.70710677
        %v1448 = vmul.f32 %v1270, 0.70710677
        %v1449 = vmul.f32 %v1275, 0.70710677
        %v1450 = vmul.f32 %v1280, 0.70710677
        %v1451 = vmul.f32 %v1285, 0.70710677
        %v1452 = vmul.f32 %v1290, 0.70710677
        %v1453 = vmul.f32 %v1295, 0.70710677
        %v1454 = vmul.f32 %v1300, 0.70710677
        %v1455 = vmul.f32 %v1305, 0.70710677
        %v1456 = vmul.f32 %v1310, 0.70710677
        %v1457 = vmul.f32 %v1315, 0.70710677
        %v1458 = vmul.f32 %v1320, 0.70710677
        %v1459 = vmul.f32 %v1325, 0.70710677
        %v1460 = vmul.f32 %v1330, 0.70710677
        %v1461 = verf.f32.pop %v1397
        %v1462 = verf.f32.pop %v1398
        %v1463 = verf.f32.pop %v1399
        %v1464 = verf.f32.pop %v1400
        %v1465 = verf.f32.pop %v1401
        %v1466 = verf.f32.pop %v1402
        %v1467 = verf.f32.pop %v1403
        %v1468 = verf.f32.pop %v1404
        %v1469 = verf.f32.pop %v1405
        %v1470 = verf.f32.pop %v1406
        %v1471 = verf.f32.pop %v1407
        %v1472 = verf.f32.pop %v1408
        %v1473 = verf.f32.pop %v1409
        %v1474 = verf.f32.pop %v1410
        %v1475 = verf.f32.pop %v1411
        %v1476 = verf.f32.pop %v1412
        %v1477 = verf.f32.pop %v1413
        %v1478 = verf.f32.pop %v1414
        %v1479 = verf.f32.pop %v1415
        %v1480 = verf.f32.pop %v1416
        %v1481 = verf.f32.pop %v1417
        %v1482 = verf.f32.pop %v1418
        %v1483 = verf.f32.pop %v1419
        %v1484 = verf.f32.pop %v1420
        %v1485 = verf.f32.pop %v1421
        %v1486 = verf.f32.pop %v1422
        %v1487 = verf.f32.pop %v1423
        %v1488 = verf.f32.pop %v1424
        %v1489 = verf.f32.pop %v1425
        %v1490 = verf.f32.pop %v1426
        %v1491 = verf.f32.pop %v1427
        %v1492 = verf.f32.pop %v1428
        %v1493 = verf.f32.pop %v1429
        %v1494 = verf.f32.pop %v1430
        %v1495 = verf.f32.pop %v1431
        %v1496 = verf.f32.pop %v1432
        %v1497 = verf.f32.pop %v1433
        %v1498 = verf.f32.pop %v1434
        %v1499 = verf.f32.pop %v1435
        %v1500 = verf.f32.pop %v1436
        %v1501 = verf.f32.pop %v1437
        %v1502 = verf.f32.pop %v1438
        %v1503 = verf.f32.pop %v1439
        %v1504 = verf.f32.pop %v1440
        %v1505 = verf.f32.pop %v1441
        %v1506 = verf.f32.pop %v1442
        %v1507 = verf.f32.pop %v1443
        %v1508 = verf.f32.pop %v1444
        %v1509 = verf.f32.pop %v1445
        %v1510 = verf.f32.pop %v1446
        %v1511 = verf.f32.pop %v1447
        %v1512 = verf.f32.pop %v1448
        %v1513 = verf.f32.pop %v1449
        %v1514 = verf.f32.pop %v1450
        %v1515 = verf.f32.pop %v1451
        %v1516 = verf.f32.pop %v1452
        %v1517 = verf.f32.pop %v1453
        %v1518 = verf.f32.pop %v1454
        %v1519 = verf.f32.pop %v1455
        %v1520 = verf.f32.pop %v1456
        %v1521 = verf.f32.pop %v1457
        %v1522 = verf.f32.pop %v1458
        %v1523 = verf.f32.pop %v1459
        %v1524 = verf.f32.pop %v1460
        %v1525 = vadd.f32 %v1461, 1.0
        %v1526 = vadd.f32 %v1462, 1.0
        %v1527 = vadd.f32 %v1463, 1.0
        %v1528 = vadd.f32 %v1464, 1.0
        %v1529 = vadd.f32 %v1465, 1.0
        %v1530 = vadd.f32 %v1466, 1.0
        %v1531 = vadd.f32 %v1467, 1.0
        %v1532 = vadd.f32 %v1468, 1.0
        %v1533 = vadd.f32 %v1469, 1.0
        %v1534 = vadd.f32 %v1470, 1.0
        %v1535 = vadd.f32 %v1471, 1.0
        %v1536 = vadd.f32 %v1472, 1.0
        %v1537 = vadd.f32 %v1473, 1.0
        %v1538 = vadd.f32 %v1474, 1.0
        %v1539 = vadd.f32 %v1475, 1.0
        %v1540 = vadd.f32 %v1476, 1.0
        %v1541 = vadd.f32 %v1477, 1.0
        %v1542 = vadd.f32 %v1478, 1.0
        %v1543 = vadd.f32 %v1479, 1.0
        %v1544 = vadd.f32 %v1480, 1.0
        %v1545 = vadd.f32 %v1481, 1.0
        %v1546 = vadd.f32 %v1482, 1.0
        %v1547 = vadd.f32 %v1483, 1.0
        %v1548 = vadd.f32 %v1484, 1.0
        %v1549 = vadd.f32 %v1485, 1.0
        %v1550 = vadd.f32 %v1486, 1.0
        %v1551 = vadd.f32 %v1487, 1.0
        %v1552 = vadd.f32 %v1488, 1.0
        %v1553 = vadd.f32 %v1489, 1.0
        %v1554 = vadd.f32 %v1490, 1.0
        %v1555 = vadd.f32 %v1491, 1.0
        %v1556 = vadd.f32 %v1492, 1.0
        %v1557 = vadd.f32 %v1493, 1.0
        %v1558 = vadd.f32 %v1494, 1.0
        %v1559 = vadd.f32 %v1495, 1.0
        %v1560 = vadd.f32 %v1496, 1.0
        %v1561 = vadd.f32 %v1497, 1.0
        %v1562 = vadd.f32 %v1498, 1.0
        %v1563 = vadd.f32 %v1499, 1.0
        %v1564 = vadd.f32 %v1500, 1.0
        %v1565 = vadd.f32 %v1501, 1.0
        %v1566 = vadd.f32 %v1502, 1.0
        %v1567 = vadd.f32 %v1503, 1.0
        %v1568 = vadd.f32 %v1504, 1.0
        %v1569 = vadd.f32 %v1505, 1.0
        %v1570 = vadd.f32 %v1506, 1.0
        %v1571 = vadd.f32 %v1507, 1.0
        %v1572 = vadd.f32 %v1508, 1.0
        %v1573 = vadd.f32 %v1509, 1.0
        %v1574 = vadd.f32 %v1510, 1.0
        %v1575 = vadd.f32 %v1511, 1.0
        %v1576 = vadd.f32 %v1512, 1.0
        %v1577 = vadd.f32 %v1513, 1.0
        %v1578 = vadd.f32 %v1514, 1.0
        %v1579 = vadd.f32 %v1515, 1.0
        %v1580 = vadd.f32 %v1516, 1.0
        %v1581 = vadd.f32 %v1517, 1.0
        %v1582 = vadd.f32 %v1518, 1.0
        %v1583 = vadd.f32 %v1519, 1.0
        %v1584 = vadd.f32 %v1520, 1.0
        %v1585 = vadd.f32 %v1521, 1.0
        %v1586 = vadd.f32 %v1522, 1.0
        %v1587 = vadd.f32 %v1523, 1.0
        %v1588 = vadd.f32 %v1524, 1.0
        %v1589 = vmul.f32 %v1333, %v1525
        %v1590 = vmul.f32 %v1334, %v1526
        %v1591 = vmul.f32 %v1335, %v1527
        %v1592 = vmul.f32 %v1336, %v1528
        %v1593 = vmul.f32 %v1337, %v1529
        %v1594 = vmul.f32 %v1338, %v1530
        %v1595 = vmul.f32 %v1339, %v1531
        %v1596 = vmul.f32 %v1340, %v1532
        %v1597 = vmul.f32 %v1341, %v1533
        %v1598 = vmul.f32 %v1342, %v1534
        %v1599 = vmul.f32 %v1343, %v1535
        %v1600 = vmul.f32 %v1344, %v1536
        %v1601 = vmul.f32 %v1345, %v1537
        %v1602 = vmul.f32 %v1346, %v1538
        %v1603 = vmul.f32 %v1347, %v1539
        %v1604 = vmul.f32 %v1348, %v1540
        %v1605 = vmul.f32 %v1349, %v1541
        %v1606 = vmul.f32 %v1350, %v1542
        %v1607 = vmul.f32 %v1351, %v1543
        %v1608 = vmul.f32 %v1352, %v1544
        %v1609 = vmul.f32 %v1353, %v1545
        %v1610 = vmul.f32 %v1354, %v1546
        %v1611 = vmul.f32 %v1355, %v1547
        %v1612 = vmul.f32 %v1356, %v1548
        %v1613 = vmul.f32 %v1357, %v1549
        %v1614 = vmul.f32 %v1358, %v1550
        %v1615 = vmul.f32 %v1359, %v1551
        %v1616 = vmul.f32 %v1360, %v1552
        %v1617 = vmul.f32 %v1361, %v1553
        %v1618 = vmul.f32 %v1362, %v1554
        %v1619 = vmul.f32 %v1363, %v1555
        %v1620 = vmul.f32 %v1364, %v1556
        %v1621 = vmul.f32 %v1365, %v1557
        %v1622 = vmul.f32 %v1366, %v1558
        %v1623 = vmul.f32 %v1367, %v1559
        %v1624 = vmul.f32 %v1368, %v1560
        %v1625 = vmul.f32 %v1369, %v1561
        %v1626 = vmul.f32 %v1370, %v1562
        %v1627 = vmul.f32 %v1371, %v1563
        %v1628 = vmul.f32 %v1372, %v1564
        %v1629 = vmul.f32 %v1373, %v1565
        %v1630 = vmul.f32 %v1374, %v1566
        %v1631 = vmul.f32 %v1375, %v1567
        %v1632 = vmul.f32 %v1376, %v1568
        %v1633 = vmul.f32 %v1377, %v1569
        %v1634 = vmul.f32 %v1378, %v1570
        %v1635 = vmul.f32 %v1379, %v1571
        %v1636 = vmul.f32 %v1380, %v1572
        %v1637 = vmul.f32 %v1381, %v1573
        %v1638 = vmul.f32 %v1382, %v1574
        %v1639 = vmul.f32 %v1383, %v1575
        %v1640 = vmul.f32 %v1384, %v1576
        %v1641 = vmul.f32 %v1385, %v1577
        %v1642 = vmul.f32 %v1386, %v1578
        %v1643 = vmul.f32 %v1387, %v1579
        %v1644 = vmul.f32 %v1388, %v1580
        %v1645 = vmul.f32 %v1389, %v1581
        %v1646 = vmul.f32 %v1390, %v1582
        %v1647 = vmul.f32 %v1391, %v1583
        %v1648 = vmul.f32 %v1392, %v1584
        %v1649 = vmul.f32 %v1393, %v1585
        %v1650 = vmul.f32 %v1394, %v1586
        %v1651 = vmul.f32 %v1395, %v1587
        %v1652 = vmul.f32 %v1396, %v1588
        %v1653 = vld [vmem:[%s5] sm:$0xff]
        %v1654 = vld [vmem:[%s6] sm:$0x1]
        %v1656 = vlaneseq
        %v1657 = vshrl.u32 %v1656, 7
        %v1658 = vsub.s32 0, %v1657
        %v1659 = vrot.slane %v1654, %v1658
        %vm1661 = vcmask 64512
        %v1663 = vsel %vm1661, %v1589, 0
        %v1666 = vsel %vm1661, %v1590, 0
        %v1669 = vsel %vm1661, %v1591, 0
        %v1672 = vsel %vm1661, %v1592, 0
        %v1675 = vsel %vm1661, %v1593, 0
        %v1678 = vsel %vm1661, %v1594, 0
        %v1681 = vsel %vm1661, %v1595, 0
        %v1684 = vsel %vm1661, %v1596, 0
        %v1687 = vsel %vm1661, %v1597, 0
        %v1690 = vsel %vm1661, %v1598, 0
        %v1693 = vsel %vm1661, %v1599, 0
        %v1696 = vsel %vm1661, %v1600, 0
        %v1699 = vsel %vm1661, %v1601, 0
        %v1702 = vsel %vm1661, %v1602, 0
        %v1705 = vsel %vm1661, %v1603, 0
        %v1708 = vsel %vm1661, %v1604, 0
        %v1711 = vsel %vm1661, %v1605, 0
        %v1714 = vsel %vm1661, %v1606, 0
        %v1717 = vsel %vm1661, %v1607, 0
        %v1720 = vsel %vm1661, %v1608, 0
        %v1723 = vsel %vm1661, %v1609, 0
        %v1726 = vsel %vm1661, %v1610, 0
        %v1729 = vsel %vm1661, %v1611, 0
        %v1732 = vsel %vm1661, %v1612, 0
        %v1735 = vsel %vm1661, %v1613, 0
        %v1738 = vsel %vm1661, %v1614, 0
        %v1741 = vsel %vm1661, %v1615, 0
        %v1744 = vsel %vm1661, %v1616, 0
        %v1747 = vsel %vm1661, %v1617, 0
        %v1750 = vsel %vm1661, %v1618, 0
        %v1753 = vsel %vm1661, %v1619, 0
        %v1756 = vsel %vm1661, %v1620, 0
        %v1759 = vsel %vm1661, %v1621, 0
        %v1762 = vsel %vm1661, %v1622, 0
        %v1765 = vsel %vm1661, %v1623, 0
        %v1768 = vsel %vm1661, %v1624, 0
        %v1771 = vsel %vm1661, %v1625, 0
        %v1774 = vsel %vm1661, %v1626, 0
        %v1777 = vsel %vm1661, %v1627, 0
        %v1780 = vsel %vm1661, %v1628, 0
        %v1783 = vsel %vm1661, %v1629, 0
        %v1786 = vsel %vm1661, %v1630, 0
        %v1789 = vsel %vm1661, %v1631, 0
        %v1792 = vsel %vm1661, %v1632, 0
        %v1795 = vsel %vm1661, %v1633, 0
        %v1798 = vsel %vm1661, %v1634, 0
        %v1801 = vsel %vm1661, %v1635, 0
        %v1804 = vsel %vm1661, %v1636, 0
        %v1807 = vsel %vm1661, %v1637, 0
        %v1810 = vsel %vm1661, %v1638, 0
        %v1813 = vsel %vm1661, %v1639, 0
        %v1816 = vsel %vm1661, %v1640, 0
        %v1819 = vsel %vm1661, %v1641, 0
        %v1822 = vsel %vm1661, %v1642, 0
        %v1825 = vsel %vm1661, %v1643, 0
        %v1828 = vsel %vm1661, %v1644, 0
        %v1831 = vsel %vm1661, %v1645, 0
        %v1834 = vsel %vm1661, %v1646, 0
        %v1837 = vsel %vm1661, %v1647, 0
        %v1840 = vsel %vm1661, %v1648, 0
        %v1843 = vsel %vm1661, %v1649, 0
        %v1846 = vsel %vm1661, %v1650, 0
        %v1849 = vsel %vm1661, %v1651, 0
        %v1852 = vsel %vm1661, %v1652, 0
        %1854 = vmatprep.subr.mxu0 0.0
        %1855 = vmatpush1.msra.mxu0 0.0
        %1856 = vmatprep.subr.mxu0 0.0
        %1857 = vmatpush1.msra.mxu0 0.0
        %1858 = vmatprep.subr.mxu0 0.0
        %1859 = vmatpush1.msra.mxu0 0.0
        %1860 = vmatprep.subr.mxu0 0.0
        %1861 = vmatpush1.msra.mxu0 0.0
        %1862 = vmatprep.subr.mxu0 0.0
        %1863 = vmatpush1.msra.mxu0 0.0
        %1864 = vmatprep.subr.mxu0 0.0
        %1865 = vmatpush1.msra.mxu0 0.0
        %1866 = vmatprep.subr.mxu0 0.0
        %1867 = vmatpush1.msra.mxu0 0.0
        %1868 = vmatprep.subr.mxu0 0.0
        %1869 = vmatpush1.msra.mxu0 0.0
        %1870 = vmatprep.subr.mxu0 0.0
        %1871 = vmatpush1.msra.mxu0 0.0
        %1872 = vmatprep.subr.mxu0 0.0
        %1873 = vmatpush1.msra.mxu0 0.0
        %1874 = vmatprep.subr.mxu0 0.0
        %1875 = vmatpush1.msra.mxu0 0.0
        %1876 = vmatprep.subr.mxu0 0.0
        %1877 = vmatpush1.msra.mxu0 0.0
        %1878 = vmatprep.subr.mxu0 0.0
        %1879 = vmatpush1.msra.mxu0 0.0
        %1880 = vmatprep.subr.mxu0 0.0
        %1881 = vmatpush1.msra.mxu0 0.0
        %1882 = vmatprep.subr.mxu0 0.0
        %1883 = vmatpush1.msra.mxu0 0.0
        %1884 = vmatprep.subr.mxu0 0.0
        %1885 = vmatpush1.msra.mxu0 %v1653
        %1886 = vmatprep.subr.mxu0 0.0
        %1887 = vmatpush2.msra.mxu0 0.0
        %1888 = vmatprep.subr.mxu0 0.0
        %1889 = vmatpush2.msra.mxu0 0.0
        %1890 = vmatprep.subr.mxu0 0.0
        %1891 = vmatpush2.msra.mxu0 0.0
        %1892 = vmatprep.subr.mxu0 0.0
        %1893 = vmatpush2.msra.mxu0 0.0
        %1894 = vmatprep.subr.mxu0 0.0
        %1895 = vmatpush2.msra.mxu0 0.0
        %1896 = vmatprep.subr.mxu0 0.0
        %1897 = vmatpush2.msra.mxu0 0.0
        %1898 = vmatprep.subr.mxu0 0.0
        %1899 = vmatpush2.msra.mxu0 0.0
        %1900 = vmatprep.subr.mxu0 0.0
        %1901 = vmatpush2.msra.mxu0 0.0
        %1902 = vmatprep.subr.mxu0 0.0
        %1903 = vmatpush2.msra.mxu0 0.0
        %1904 = vmatprep.subr.mxu0 0.0
        %1905 = vmatpush2.msra.mxu0 0.0
        %1906 = vmatprep.subr.mxu0 0.0
        %1907 = vmatpush2.msra.mxu0 0.0
        %1908 = vmatprep.subr.mxu0 0.0
        %1909 = vmatpush2.msra.mxu0 0.0
        %1910 = vmatprep.subr.mxu0 0.0
        %1911 = vmatpush2.msra.mxu0 0.0
        %1912 = vmatprep.subr.mxu0 0.0
        %1913 = vmatpush2.msra.mxu0 0.0
        %1914 = vmatprep.subr.mxu0 0.0
        %1915 = vmatpush2.msra.mxu0 0.0
        %1916 = vmatprep.subr.mxu0 0.0
        %1917 = vmatpush2.msra.mxu0 0.0
        %1918 = vmatprep.mubr.f32.mxu0 0.0
        %1919 = vmatmul.mubr.f32.gmra.mxu0 %v1663
        %v1920 = vpop.f32.mrf.mxu0
        %v1921 = vadd.f32 %v1659, %v1920
        %v1922 = vpop.f32.mrf.mxu0
        %1923 = vmatprep.mubr.f32.mxu0 0.0
        %1924 = vmatmul.mubr.f32.gmra.mxu0 %v1666
        %v1925 = vpop.f32.mrf.mxu0
        %v1926 = vadd.f32 %v1659, %v1925
        %v1927 = vpop.f32.mrf.mxu0
        %1928 = vmatprep.mubr.f32.mxu0 0.0
        %1929 = vmatmul.mubr.f32.gmra.mxu0 %v1669
        %v1930 = vpop.f32.mrf.mxu0
        %v1931 = vadd.f32 %v1659, %v1930
        %v1932 = vpop.f32.mrf.mxu0
        %1933 = vmatprep.mubr.f32.mxu0 0.0
        %1934 = vmatmul.mubr.f32.gmra.mxu0 %v1672
        %v1935 = vpop.f32.mrf.mxu0
        %v1936 = vadd.f32 %v1659, %v1935
        %v1937 = vpop.f32.mrf.mxu0
        %1938 = vmatprep.mubr.f32.mxu0 0.0
        %1939 = vmatmul.mubr.f32.gmra.mxu0 %v1675
        %v1940 = vpop.f32.mrf.mxu0
        %v1941 = vadd.f32 %v1659, %v1940
        %v1942 = vpop.f32.mrf.mxu0
        %1943 = vmatprep.mubr.f32.mxu0 0.0
        %1944 = vmatmul.mubr.f32.gmra.mxu0 %v1678
        %v1945 = vpop.f32.mrf.mxu0
        %v1946 = vadd.f32 %v1659, %v1945
        %v1947 = vpop.f32.mrf.mxu0
        %1948 = vmatprep.mubr.f32.mxu0 0.0
        %1949 = vmatmul.mubr.f32.gmra.mxu0 %v1681
        %v1950 = vpop.f32.mrf.mxu0
        %v1951 = vadd.f32 %v1659, %v1950
        %v1952 = vpop.f32.mrf.mxu0
        %1953 = vmatprep.mubr.f32.mxu0 0.0
        %1954 = vmatmul.mubr.f32.gmra.mxu0 %v1684
        %v1955 = vpop.f32.mrf.mxu0
        %v1956 = vadd.f32 %v1659, %v1955
        %v1957 = vpop.f32.mrf.mxu0
        %1958 = vmatprep.mubr.f32.mxu0 0.0
        %1959 = vmatmul.mubr.f32.gmra.mxu0 %v1687
        %v1960 = vpop.f32.mrf.mxu0
        %v1961 = vadd.f32 %v1659, %v1960
        %v1962 = vpop.f32.mrf.mxu0
        %1963 = vmatprep.mubr.f32.mxu0 0.0
        %1964 = vmatmul.mubr.f32.gmra.mxu0 %v1690
        %v1965 = vpop.f32.mrf.mxu0
        %v1966 = vadd.f32 %v1659, %v1965
        %v1967 = vpop.f32.mrf.mxu0
        %1968 = vmatprep.mubr.f32.mxu0 0.0
        %1969 = vmatmul.mubr.f32.gmra.mxu0 %v1693
        %v1970 = vpop.f32.mrf.mxu0
        %v1971 = vadd.f32 %v1659, %v1970
        %v1972 = vpop.f32.mrf.mxu0
        %1973 = vmatprep.mubr.f32.mxu0 0.0
        %1974 = vmatmul.mubr.f32.gmra.mxu0 %v1696
        %v1975 = vpop.f32.mrf.mxu0
        %v1976 = vadd.f32 %v1659, %v1975
        %v1977 = vpop.f32.mrf.mxu0
        %1978 = vmatprep.mubr.f32.mxu0 0.0
        %1979 = vmatmul.mubr.f32.gmra.mxu0 %v1699
        %v1980 = vpop.f32.mrf.mxu0
        %v1981 = vadd.f32 %v1659, %v1980
        %v1982 = vpop.f32.mrf.mxu0
        %1983 = vmatprep.mubr.f32.mxu0 0.0
        %1984 = vmatmul.mubr.f32.gmra.mxu0 %v1702
        %v1985 = vpop.f32.mrf.mxu0
        %v1986 = vadd.f32 %v1659, %v1985
        %v1987 = vpop.f32.mrf.mxu0
        %1988 = vmatprep.mubr.f32.mxu0 0.0
        %1989 = vmatmul.mubr.f32.gmra.mxu0 %v1705
        %v1990 = vpop.f32.mrf.mxu0
        %v1991 = vadd.f32 %v1659, %v1990
        %v1992 = vpop.f32.mrf.mxu0
        %1993 = vmatprep.mubr.f32.mxu0 0.0
        %1994 = vmatmul.mubr.f32.gmra.mxu0 %v1708
        %v1995 = vpop.f32.mrf.mxu0
        %v1996 = vadd.f32 %v1659, %v1995
        %v1997 = vpop.f32.mrf.mxu0
        %1998 = vmatprep.mubr.f32.mxu0 0.0
        %1999 = vmatmul.mubr.f32.gmra.mxu0 %v1711
        %v2000 = vpop.f32.mrf.mxu0
        %v2001 = vadd.f32 %v1659, %v2000
        %v2002 = vpop.f32.mrf.mxu0
        %2003 = vmatprep.mubr.f32.mxu0 0.0
        %2004 = vmatmul.mubr.f32.gmra.mxu0 %v1714
        %v2005 = vpop.f32.mrf.mxu0
        %v2006 = vadd.f32 %v1659, %v2005
        %v2007 = vpop.f32.mrf.mxu0
        %2008 = vmatprep.mubr.f32.mxu0 0.0
        %2009 = vmatmul.mubr.f32.gmra.mxu0 %v1717
        %v2010 = vpop.f32.mrf.mxu0
        %v2011 = vadd.f32 %v1659, %v2010
        %v2012 = vpop.f32.mrf.mxu0
        %2013 = vmatprep.mubr.f32.mxu0 0.0
        %2014 = vmatmul.mubr.f32.gmra.mxu0 %v1720
        %v2015 = vpop.f32.mrf.mxu0
        %v2016 = vadd.f32 %v1659, %v2015
        %v2017 = vpop.f32.mrf.mxu0
        %2018 = vmatprep.mubr.f32.mxu0 0.0
        %2019 = vmatmul.mubr.f32.gmra.mxu0 %v1723
        %v2020 = vpop.f32.mrf.mxu0
        %v2021 = vadd.f32 %v1659, %v2020
        %v2022 = vpop.f32.mrf.mxu0
        %2023 = vmatprep.mubr.f32.mxu0 0.0
        %2024 = vmatmul.mubr.f32.gmra.mxu0 %v1726
        %v2025 = vpop.f32.mrf.mxu0
        %v2026 = vadd.f32 %v1659, %v2025
        %v2027 = vpop.f32.mrf.mxu0
        %2028 = vmatprep.mubr.f32.mxu0 0.0
        %2029 = vmatmul.mubr.f32.gmra.mxu0 %v1729
        %v2030 = vpop.f32.mrf.mxu0
        %v2031 = vadd.f32 %v1659, %v2030
        %v2032 = vpop.f32.mrf.mxu0
        %2033 = vmatprep.mubr.f32.mxu0 0.0
        %2034 = vmatmul.mubr.f32.gmra.mxu0 %v1732
        %v2035 = vpop.f32.mrf.mxu0
        %v2036 = vadd.f32 %v1659, %v2035
        %v2037 = vpop.f32.mrf.mxu0
        %2038 = vmatprep.mubr.f32.mxu0 0.0
        %2039 = vmatmul.mubr.f32.gmra.mxu0 %v1735
        %v2040 = vpop.f32.mrf.mxu0
        %v2041 = vadd.f32 %v1659, %v2040
        %v2042 = vpop.f32.mrf.mxu0
        %2043 = vmatprep.mubr.f32.mxu0 0.0
        %2044 = vmatmul.mubr.f32.gmra.mxu0 %v1738
        %v2045 = vpop.f32.mrf.mxu0
        %v2046 = vadd.f32 %v1659, %v2045
        %v2047 = vpop.f32.mrf.mxu0
        %2048 = vmatprep.mubr.f32.mxu0 0.0
        %2049 = vmatmul.mubr.f32.gmra.mxu0 %v1741
        %v2050 = vpop.f32.mrf.mxu0
        %v2051 = vadd.f32 %v1659, %v2050
        %v2052 = vpop.f32.mrf.mxu0
        %2053 = vmatprep.mubr.f32.mxu0 0.0
        %2054 = vmatmul.mubr.f32.gmra.mxu0 %v1744
        %v2055 = vpop.f32.mrf.mxu0
        %v2056 = vadd.f32 %v1659, %v2055
        %v2057 = vpop.f32.mrf.mxu0
        %2058 = vmatprep.mubr.f32.mxu0 0.0
        %2059 = vmatmul.mubr.f32.gmra.mxu0 %v1747
        %v2060 = vpop.f32.mrf.mxu0
        %v2061 = vadd.f32 %v1659, %v2060
        %v2062 = vpop.f32.mrf.mxu0
        %2063 = vmatprep.mubr.f32.mxu0 0.0
        %2064 = vmatmul.mubr.f32.gmra.mxu0 %v1750
        %v2065 = vpop.f32.mrf.mxu0
        %v2066 = vadd.f32 %v1659, %v2065
        %v2067 = vpop.f32.mrf.mxu0
        %2068 = vmatprep.mubr.f32.mxu0 0.0
        %2069 = vmatmul.mubr.f32.gmra.mxu0 %v1753
        %v2070 = vpop.f32.mrf.mxu0
        %v2071 = vadd.f32 %v1659, %v2070
        %v2072 = vpop.f32.mrf.mxu0
        %2073 = vmatprep.mubr.f32.mxu0 0.0
        %2074 = vmatmul.mubr.f32.gmra.mxu0 %v1756
        %v2075 = vpop.f32.mrf.mxu0
        %v2076 = vadd.f32 %v1659, %v2075
        %v2077 = vpop.f32.mrf.mxu0
        %2078 = vmatprep.mubr.f32.mxu0 0.0
        %2079 = vmatmul.mubr.f32.gmra.mxu0 %v1759
        %v2080 = vpop.f32.mrf.mxu0
        %v2081 = vadd.f32 %v1659, %v2080
        %v2082 = vpop.f32.mrf.mxu0
        %2083 = vmatprep.mubr.f32.mxu0 0.0
        %2084 = vmatmul.mubr.f32.gmra.mxu0 %v1762
        %v2085 = vpop.f32.mrf.mxu0
        %v2086 = vadd.f32 %v1659, %v2085
        %v2087 = vpop.f32.mrf.mxu0
        %2088 = vmatprep.mubr.f32.mxu0 0.0
        %2089 = vmatmul.mubr.f32.gmra.mxu0 %v1765
        %v2090 = vpop.f32.mrf.mxu0
        %v2091 = vadd.f32 %v1659, %v2090
        %v2092 = vpop.f32.mrf.mxu0
        %2093 = vmatprep.mubr.f32.mxu0 0.0
        %2094 = vmatmul.mubr.f32.gmra.mxu0 %v1768
        %v2095 = vpop.f32.mrf.mxu0
        %v2096 = vadd.f32 %v1659, %v2095
        %v2097 = vpop.f32.mrf.mxu0
        %2098 = vmatprep.mubr.f32.mxu0 0.0
        %2099 = vmatmul.mubr.f32.gmra.mxu0 %v1771
        %v2100 = vpop.f32.mrf.mxu0
        %v2101 = vadd.f32 %v1659, %v2100
        %v2102 = vpop.f32.mrf.mxu0
        %2103 = vmatprep.mubr.f32.mxu0 0.0
        %2104 = vmatmul.mubr.f32.gmra.mxu0 %v1774
        %v2105 = vpop.f32.mrf.mxu0
        %v2106 = vadd.f32 %v1659, %v2105
        %v2107 = vpop.f32.mrf.mxu0
        %2108 = vmatprep.mubr.f32.mxu0 0.0
        %2109 = vmatmul.mubr.f32.gmra.mxu0 %v1777
        %v2110 = vpop.f32.mrf.mxu0
        %v2111 = vadd.f32 %v1659, %v2110
        %v2112 = vpop.f32.mrf.mxu0
        %2113 = vmatprep.mubr.f32.mxu0 0.0
        %2114 = vmatmul.mubr.f32.gmra.mxu0 %v1780
        %v2115 = vpop.f32.mrf.mxu0
        %v2116 = vadd.f32 %v1659, %v2115
        %v2117 = vpop.f32.mrf.mxu0
        %2118 = vmatprep.mubr.f32.mxu0 0.0
        %2119 = vmatmul.mubr.f32.gmra.mxu0 %v1783
        %v2120 = vpop.f32.mrf.mxu0
        %v2121 = vadd.f32 %v1659, %v2120
        %v2122 = vpop.f32.mrf.mxu0
        %2123 = vmatprep.mubr.f32.mxu0 0.0
        %2124 = vmatmul.mubr.f32.gmra.mxu0 %v1786
        %v2125 = vpop.f32.mrf.mxu0
        %v2126 = vadd.f32 %v1659, %v2125
        %v2127 = vpop.f32.mrf.mxu0
        %2128 = vmatprep.mubr.f32.mxu0 0.0
        %2129 = vmatmul.mubr.f32.gmra.mxu0 %v1789
        %v2130 = vpop.f32.mrf.mxu0
        %v2131 = vadd.f32 %v1659, %v2130
        %v2132 = vpop.f32.mrf.mxu0
        %2133 = vmatprep.mubr.f32.mxu0 0.0
        %2134 = vmatmul.mubr.f32.gmra.mxu0 %v1792
        %v2135 = vpop.f32.mrf.mxu0
        %v2136 = vadd.f32 %v1659, %v2135
        %v2137 = vpop.f32.mrf.mxu0
        %2138 = vmatprep.mubr.f32.mxu0 0.0
        %2139 = vmatmul.mubr.f32.gmra.mxu0 %v1795
        %v2140 = vpop.f32.mrf.mxu0
        %v2141 = vadd.f32 %v1659, %v2140
        %v2142 = vpop.f32.mrf.mxu0
        %2143 = vmatprep.mubr.f32.mxu0 0.0
        %2144 = vmatmul.mubr.f32.gmra.mxu0 %v1798
        %v2145 = vpop.f32.mrf.mxu0
        %v2146 = vadd.f32 %v1659, %v2145
        %v2147 = vpop.f32.mrf.mxu0
        %2148 = vmatprep.mubr.f32.mxu0 0.0
        %2149 = vmatmul.mubr.f32.gmra.mxu0 %v1801
        %v2150 = vpop.f32.mrf.mxu0
        %v2151 = vadd.f32 %v1659, %v2150
        %v2152 = vpop.f32.mrf.mxu0
        %2153 = vmatprep.mubr.f32.mxu0 0.0
        %2154 = vmatmul.mubr.f32.gmra.mxu0 %v1804
        %v2155 = vpop.f32.mrf.mxu0
        %v2156 = vadd.f32 %v1659, %v2155
        %v2157 = vpop.f32.mrf.mxu0
        %2158 = vmatprep.mubr.f32.mxu0 0.0
        %2159 = vmatmul.mubr.f32.gmra.mxu0 %v1807
        %v2160 = vpop.f32.mrf.mxu0
        %v2161 = vadd.f32 %v1659, %v2160
        %v2162 = vpop.f32.mrf.mxu0
        %2163 = vmatprep.mubr.f32.mxu0 0.0
        %2164 = vmatmul.mubr.f32.gmra.mxu0 %v1810
        %v2165 = vpop.f32.mrf.mxu0
        %v2166 = vadd.f32 %v1659, %v2165
        %v2167 = vpop.f32.mrf.mxu0
        %2168 = vmatprep.mubr.f32.mxu0 0.0
        %2169 = vmatmul.mubr.f32.gmra.mxu0 %v1813
        %v2170 = vpop.f32.mrf.mxu0
        %v2171 = vadd.f32 %v1659, %v2170
        %v2172 = vpop.f32.mrf.mxu0
        %2173 = vmatprep.mubr.f32.mxu0 0.0
        %2174 = vmatmul.mubr.f32.gmra.mxu0 %v1816
        %v2175 = vpop.f32.mrf.mxu0
        %v2176 = vadd.f32 %v1659, %v2175
        %v2177 = vpop.f32.mrf.mxu0
        %2178 = vmatprep.mubr.f32.mxu0 0.0
        %2179 = vmatmul.mubr.f32.gmra.mxu0 %v1819
        %v2180 = vpop.f32.mrf.mxu0
        %v2181 = vadd.f32 %v1659, %v2180
        %v2182 = vpop.f32.mrf.mxu0
        %2183 = vmatprep.mubr.f32.mxu0 0.0
        %2184 = vmatmul.mubr.f32.gmra.mxu0 %v1822
        %v2185 = vpop.f32.mrf.mxu0
        %v2186 = vadd.f32 %v1659, %v2185
        %v2187 = vpop.f32.mrf.mxu0
        %2188 = vmatprep.mubr.f32.mxu0 0.0
        %2189 = vmatmul.mubr.f32.gmra.mxu0 %v1825
        %v2190 = vpop.f32.mrf.mxu0
        %v2191 = vadd.f32 %v1659, %v2190
        %v2192 = vpop.f32.mrf.mxu0
        %2193 = vmatprep.mubr.f32.mxu0 0.0
        %2194 = vmatmul.mubr.f32.gmra.mxu0 %v1828
        %v2195 = vpop.f32.mrf.mxu0
        %v2196 = vadd.f32 %v1659, %v2195
        %v2197 = vpop.f32.mrf.mxu0
        %2198 = vmatprep.mubr.f32.mxu0 0.0
        %2199 = vmatmul.mubr.f32.gmra.mxu0 %v1831
        %v2200 = vpop.f32.mrf.mxu0
        %v2201 = vadd.f32 %v1659, %v2200
        %v2202 = vpop.f32.mrf.mxu0
        %2203 = vmatprep.mubr.f32.mxu0 0.0
        %2204 = vmatmul.mubr.f32.gmra.mxu0 %v1834
        %v2205 = vpop.f32.mrf.mxu0
        %v2206 = vadd.f32 %v1659, %v2205
        %v2207 = vpop.f32.mrf.mxu0
        %2208 = vmatprep.mubr.f32.mxu0 0.0
        %2209 = vmatmul.mubr.f32.gmra.mxu0 %v1837
        %v2210 = vpop.f32.mrf.mxu0
        %v2211 = vadd.f32 %v1659, %v2210
        %v2212 = vpop.f32.mrf.mxu0
        %2213 = vmatprep.mubr.f32.mxu0 0.0
        %2214 = vmatmul.mubr.f32.gmra.mxu0 %v1840
        %v2215 = vpop.f32.mrf.mxu0
        %v2216 = vadd.f32 %v1659, %v2215
        %v2217 = vpop.f32.mrf.mxu0
        %2218 = vmatprep.mubr.f32.mxu0 0.0
        %2219 = vmatmul.mubr.f32.gmra.mxu0 %v1843
        %v2220 = vpop.f32.mrf.mxu0
        %v2221 = vadd.f32 %v1659, %v2220
        %v2222 = vpop.f32.mrf.mxu0
        %2223 = vmatprep.mubr.f32.mxu0 0.0
        %2224 = vmatmul.mubr.f32.gmra.mxu0 %v1846
        %v2225 = vpop.f32.mrf.mxu0
        %v2226 = vadd.f32 %v1659, %v2225
        %v2227 = vpop.f32.mrf.mxu0
        %2228 = vmatprep.mubr.f32.mxu0 0.0
        %2229 = vmatmul.mubr.f32.gmra.mxu0 %v1849
        %v2230 = vpop.f32.mrf.mxu0
        %v2231 = vadd.f32 %v1659, %v2230
        %v2232 = vpop.f32.mrf.mxu0
        %2233 = vmatprep.mubr.f32.mxu0 0.0
        %2234 = vmatmul.mubr.f32.gmra.mxu0 %v1852
        %v2235 = vpop.f32.mrf.mxu0
        %v2236 = vadd.f32 %v1659, %v2235
        %v2237 = vpop.f32.mrf.mxu0
        %2238 = vdwg.mxu0
        %2239 = vxpose.xlu0.b32.start [1/16] %v1921, 128
        %2240 = vxpose.xlu0.b32.cont [2/16] %v1926, 128
        %2241 = vxpose.xlu0.b32.cont [3/16] %v1931, 128
        %2242 = vxpose.xlu0.b32.cont [4/16] %v1936, 128
        %2243 = vxpose.xlu0.b32.cont [5/16] %v1941, 128
        %2244 = vxpose.xlu0.b32.cont [6/16] %v1946, 128
        %2245 = vxpose.xlu0.b32.cont [7/16] %v1951, 128
        %2246 = vxpose.xlu0.b32.cont [8/16] %v1956, 128
        %2247 = vxpose.xlu0.b32.cont [9/16] %v1961, 128
        %2248 = vxpose.xlu0.b32.cont [10/16] %v1966, 128
        %2249 = vxpose.xlu0.b32.cont [11/16] %v1971, 128
        %2250 = vxpose.xlu0.b32.cont [12/16] %v1976, 128
        %2251 = vxpose.xlu0.b32.cont [13/16] %v1981, 128
        %2252 = vxpose.xlu0.b32.cont [14/16] %v1986, 128
        %2253 = vxpose.xlu0.b32.cont [15/16] %v1991, 128
        %2254 = vxpose.xlu0.b32.end [16/16] %v1996, 128
        %v2255 = vpop.trf.xlu0
        %v2256 = vpop.trf.xlu0
        %v2257 = vpop.trf.xlu0
        %v2258 = vpop.trf.xlu0
        %v2259 = vpop.trf.xlu0
        %v2260 = vpop.trf.xlu0
        %v2261 = vpop.trf.xlu0
        %v2262 = vpop.trf.xlu0
        %v2263 = vpop.trf.xlu0
        %v2264 = vpop.trf.xlu0
        %v2265 = vpop.trf.xlu0
        %v2266 = vpop.trf.xlu0
        %v2267 = vpop.trf.xlu0
        %v2268 = vpop.trf.xlu0
        %v2269 = vpop.trf.xlu0
        %v2270 = vpop.trf.xlu0
        %2271 = vxpose.xlu0.b32.start [1/16] %v2001, 128
        %2272 = vxpose.xlu0.b32.cont [2/16] %v2006, 128
        %2273 = vxpose.xlu0.b32.cont [3/16] %v2011, 128
        %2274 = vxpose.xlu0.b32.cont [4/16] %v2016, 128
        %2275 = vxpose.xlu0.b32.cont [5/16] %v2021, 128
        %2276 = vxpose.xlu0.b32.cont [6/16] %v2026, 128
        %2277 = vxpose.xlu0.b32.cont [7/16] %v2031, 128
        %2278 = vxpose.xlu0.b32.cont [8/16] %v2036, 128
        %2279 = vxpose.xlu0.b32.cont [9/16] %v2041, 128
        %2280 = vxpose.xlu0.b32.cont [10/16] %v2046, 128
        %2281 = vxpose.xlu0.b32.cont [11/16] %v2051, 128
        %2282 = vxpose.xlu0.b32.cont [12/16] %v2056, 128
        %2283 = vxpose.xlu0.b32.cont [13/16] %v2061, 128
        %2284 = vxpose.xlu0.b32.cont [14/16] %v2066, 128
        %2285 = vxpose.xlu0.b32.cont [15/16] %v2071, 128
        %2286 = vxpose.xlu0.b32.end [16/16] %v2076, 128
        %v2287 = vpop.trf.xlu0
        %v2288 = vpop.trf.xlu0
        %v2289 = vpop.trf.xlu0
        %v2290 = vpop.trf.xlu0
        %v2291 = vpop.trf.xlu0
        %v2292 = vpop.trf.xlu0
        %v2293 = vpop.trf.xlu0
        %v2294 = vpop.trf.xlu0
        %v2295 = vpop.trf.xlu0
        %v2296 = vpop.trf.xlu0
        %v2297 = vpop.trf.xlu0
        %v2298 = vpop.trf.xlu0
        %v2299 = vpop.trf.xlu0
        %v2300 = vpop.trf.xlu0
        %v2301 = vpop.trf.xlu0
        %v2302 = vpop.trf.xlu0
        %2303 = vxpose.xlu0.b32.start [1/16] %v2081, 128
        %2304 = vxpose.xlu0.b32.cont [2/16] %v2086, 128
        %2305 = vxpose.xlu0.b32.cont [3/16] %v2091, 128
        %2306 = vxpose.xlu0.b32.cont [4/16] %v2096, 128
        %2307 = vxpose.xlu0.b32.cont [5/16] %v2101, 128
        %2308 = vxpose.xlu0.b32.cont [6/16] %v2106, 128
        %2309 = vxpose.xlu0.b32.cont [7/16] %v2111, 128
        %2310 = vxpose.xlu0.b32.cont [8/16] %v2116, 128
        %2311 = vxpose.xlu0.b32.cont [9/16] %v2121, 128
        %2312 = vxpose.xlu0.b32.cont [10/16] %v2126, 128
        %2313 = vxpose.xlu0.b32.cont [11/16] %v2131, 128
        %2314 = vxpose.xlu0.b32.cont [12/16] %v2136, 128
        %2315 = vxpose.xlu0.b32.cont [13/16] %v2141, 128
        %2316 = vxpose.xlu0.b32.cont [14/16] %v2146, 128
        %2317 = vxpose.xlu0.b32.cont [15/16] %v2151, 128
        %2318 = vxpose.xlu0.b32.end [16/16] %v2156, 128
        %v2319 = vpop.trf.xlu0
        %v2320 = vpop.trf.xlu0
        %v2321 = vpop.trf.xlu0
        %v2322 = vpop.trf.xlu0
        %v2323 = vpop.trf.xlu0
        %v2324 = vpop.trf.xlu0
        %v2325 = vpop.trf.xlu0
        %v2326 = vpop.trf.xlu0
        %v2327 = vpop.trf.xlu0
        %v2328 = vpop.trf.xlu0
        %v2329 = vpop.trf.xlu0
        %v2330 = vpop.trf.xlu0
        %v2331 = vpop.trf.xlu0
        %v2332 = vpop.trf.xlu0
        %v2333 = vpop.trf.xlu0
        %v2334 = vpop.trf.xlu0
        %2335 = vxpose.xlu0.b32.start [1/16] %v2161, 128
        %2336 = vxpose.xlu0.b32.cont [2/16] %v2166, 128
        %2337 = vxpose.xlu0.b32.cont [3/16] %v2171, 128
        %2338 = vxpose.xlu0.b32.cont [4/16] %v2176, 128
        %2339 = vxpose.xlu0.b32.cont [5/16] %v2181, 128
        %2340 = vxpose.xlu0.b32.cont [6/16] %v2186, 128
        %2341 = vxpose.xlu0.b32.cont [7/16] %v2191, 128
        %2342 = vxpose.xlu0.b32.cont [8/16] %v2196, 128
        %2343 = vxpose.xlu0.b32.cont [9/16] %v2201, 128
        %2344 = vxpose.xlu0.b32.cont [10/16] %v2206, 128
        %2345 = vxpose.xlu0.b32.cont [11/16] %v2211, 128
        %2346 = vxpose.xlu0.b32.cont [12/16] %v2216, 128
        %2347 = vxpose.xlu0.b32.cont [13/16] %v2221, 128
        %2348 = vxpose.xlu0.b32.cont [14/16] %v2226, 128
        %2349 = vxpose.xlu0.b32.cont [15/16] %v2231, 128
        %2350 = vxpose.xlu0.b32.end [16/16] %v2236, 128
        %v2351 = vpop.trf.xlu0
        %v2352 = vpop.trf.xlu0
        %v2353 = vpop.trf.xlu0
        %v2354 = vpop.trf.xlu0
        %v2355 = vpop.trf.xlu0
        %v2356 = vpop.trf.xlu0
        %v2357 = vpop.trf.xlu0
        %v2358 = vpop.trf.xlu0
        %v2359 = vpop.trf.xlu0
        %v2360 = vpop.trf.xlu0
        %v2361 = vpop.trf.xlu0
        %v2362 = vpop.trf.xlu0
        %v2363 = vpop.trf.xlu0
        %v2364 = vpop.trf.xlu0
        %v2365 = vpop.trf.xlu0
        %v2366 = vpop.trf.xlu0
        %v2367 = vadd.f32 %v491, %v2255
        %v2368 = vadd.f32 %v492, %v2256
        %v2369 = vadd.f32 %v493, %v2287
        %v2370 = vadd.f32 %v494, %v2288
        %v2371 = vadd.f32 %v495, %v2319
        %v2372 = vadd.f32 %v496, %v2320
        %v2373 = vadd.f32 %v497, %v2351
        %v2374 = vadd.f32 %v498, %v2352
        %v2375 = vld [vmem:[%s7] sm:$0x1]
        %v2376 = vld [vmem:[%s8] sm:$0x1]
        %2377 = vadd.xlane.f32.xlu0 %v2367
        %v2378 = vpop.xlane.xlu0 %2377
        %2379 = vadd.xlane.f32.xlu0 %v2368
        %v2380 = vpop.xlane.xlu0 %2379
        %2381 = vadd.xlane.f32.xlu0 %v2369
        %v2382 = vpop.xlane.xlu0 %2381
        %2383 = vadd.xlane.f32.xlu0 %v2370
        %v2384 = vpop.xlane.xlu0 %2383
        %2385 = vadd.xlane.f32.xlu0 %v2371
        %v2386 = vpop.xlane.xlu0 %2385
        %2387 = vadd.xlane.f32.xlu0 %v2372
        %v2388 = vpop.xlane.xlu0 %2387
        %2389 = vadd.xlane.f32.xlu0 %v2373
        %v2390 = vpop.xlane.xlu0 %2389
        %2391 = vadd.xlane.f32.xlu0 %v2374
        %v2392 = vpop.xlane.xlu0 %2391
        %v2393 = vmul.f32 %v2378, %v517
        %v2394 = vmul.f32 %v2380, %v517
        %v2395 = vmul.f32 %v2382, %v517
        %v2396 = vmul.f32 %v2384, %v517
        %v2397 = vmul.f32 %v2386, %v517
        %v2398 = vmul.f32 %v2388, %v517
        %v2399 = vmul.f32 %v2390, %v517
        %v2400 = vmul.f32 %v2392, %v517
        %v2401 = vsub.f32 %v2367, %v2393
        %v2402 = vsub.f32 %v2368, %v2394
        %v2403 = vsub.f32 %v2369, %v2395
        %v2404 = vsub.f32 %v2370, %v2396
        %v2405 = vsub.f32 %v2371, %v2397
        %v2406 = vsub.f32 %v2372, %v2398
        %v2407 = vsub.f32 %v2373, %v2399
        %v2408 = vsub.f32 %v2374, %v2400
        %v2409 = vmul.f32 %v2401, %v2401
        %v2410 = vmul.f32 %v2402, %v2402
        %v2411 = vmul.f32 %v2403, %v2403
        %v2412 = vmul.f32 %v2404, %v2404
        %v2413 = vmul.f32 %v2405, %v2405
        %v2414 = vmul.f32 %v2406, %v2406
        %v2415 = vmul.f32 %v2407, %v2407
        %v2416 = vmul.f32 %v2408, %v2408
        %2417 = vadd.xlane.f32.xlu0 %v2409
        %v2418 = vpop.xlane.xlu0 %2417
        %2419 = vadd.xlane.f32.xlu0 %v2410
        %v2420 = vpop.xlane.xlu0 %2419
        %2421 = vadd.xlane.f32.xlu0 %v2411
        %v2422 = vpop.xlane.xlu0 %2421
        %2423 = vadd.xlane.f32.xlu0 %v2412
        %v2424 = vpop.xlane.xlu0 %2423
        %2425 = vadd.xlane.f32.xlu0 %v2413
        %v2426 = vpop.xlane.xlu0 %2425
        %2427 = vadd.xlane.f32.xlu0 %v2414
        %v2428 = vpop.xlane.xlu0 %2427
        %2429 = vadd.xlane.f32.xlu0 %v2415
        %v2430 = vpop.xlane.xlu0 %2429
        %2431 = vadd.xlane.f32.xlu0 %v2416
        %v2432 = vpop.xlane.xlu0 %2431
        %v2433 = vmul.f32 %v2418, %v517
        %v2434 = vmul.f32 %v2420, %v517
        %v2435 = vmul.f32 %v2422, %v517
        %v2436 = vmul.f32 %v2424, %v517
        %v2437 = vmul.f32 %v2426, %v517
        %v2438 = vmul.f32 %v2428, %v517
        %v2439 = vmul.f32 %v2430, %v517
        %v2440 = vmul.f32 %v2432, %v517
        %v2441 = vadd.f32 %v2433, 1e-05
        %v2442 = vadd.f32 %v2434, 1e-05
        %v2443 = vadd.f32 %v2435, 1e-05
        %v2444 = vadd.f32 %v2436, 1e-05
        %v2445 = vadd.f32 %v2437, 1e-05
        %v2446 = vadd.f32 %v2438, 1e-05
        %v2447 = vadd.f32 %v2439, 1e-05
        %v2448 = vadd.f32 %v2440, 1e-05
        %v2449 = vrsqrt.pop %v2441
        %v2450 = vrsqrt.pop %v2442
        %v2451 = vrsqrt.pop %v2443
        %v2452 = vrsqrt.pop %v2444
        %v2453 = vrsqrt.pop %v2445
        %v2454 = vrsqrt.pop %v2446
        %v2455 = vrsqrt.pop %v2447
        %v2456 = vrsqrt.pop %v2448
        %v2457 = vmul.f32 %v2401, %v2449
        %v2458 = vmul.f32 %v2402, %v2450
        %v2459 = vmul.f32 %v2403, %v2451
        %v2460 = vmul.f32 %v2404, %v2452
        %v2461 = vmul.f32 %v2405, %v2453
        %v2462 = vmul.f32 %v2406, %v2454
        %v2463 = vmul.f32 %v2407, %v2455
        %v2464 = vmul.f32 %v2408, %v2456
        %v2466 = vlaneseq
        %v2467 = vshrl.u32 %v2466, 7
        %v2468 = vsub.s32 0, %v2467
        %v2469 = vrot.slane %v2375, %v2468
        %v2471 = vmul.f32 %v2457, %v2469
        %v2472 = vmul.f32 %v2458, %v2469
        %v2473 = vmul.f32 %v2459, %v2469
        %v2474 = vmul.f32 %v2460, %v2469
        %v2475 = vmul.f32 %v2461, %v2469
        %v2476 = vmul.f32 %v2462, %v2469
        %v2477 = vmul.f32 %v2463, %v2469
        %v2478 = vmul.f32 %v2464, %v2469
        %v2480 = vlaneseq
        %v2481 = vshrl.u32 %v2480, 7
        %v2482 = vsub.s32 0, %v2481
        %v2483 = vrot.slane %v2376, %v2482
        %v2485 = vadd.f32 %v2471, %v2483
        %v2486 = vadd.f32 %v2472, %v2483
        %v2487 = vadd.f32 %v2473, %v2483
        %v2488 = vadd.f32 %v2474, %v2483
        %v2489 = vadd.f32 %v2475, %v2483
        %v2490 = vadd.f32 %v2476, %v2483
        %v2491 = vadd.f32 %v2477, %v2483
        %v2492 = vadd.f32 %v2478, %v2483
        %v2493 = vld [vmem:[#allocation5] sm:$0xff]
        %v2494 = vld [vmem:[#allocation5 + $0x8] sm:$0xff]
        %v2495 = vld [vmem:[#allocation5 + $0x10] sm:$0xff]
        %v2496 = vld [vmem:[#allocation5 + $0x18] sm:$0xff]
        %v2497 = vld [vmem:[#allocation5 + $0x20] sm:$0xff]
        %v2498 = vld [vmem:[#allocation5 + $0x28] sm:$0xff]
        %v2499 = vld [vmem:[#allocation5 + $0x30] sm:$0xff]
        %v2500 = vld [vmem:[#allocation5 + $0x38] sm:$0xff]
        %v2501 = vld [vmem:[#allocation5 + $0x40] sm:$0xff]
        %v2502 = vld [vmem:[#allocation5 + $0x48] sm:$0xff]
        %v2503 = vld [vmem:[#allocation5 + $0x50] sm:$0xff]
        %v2504 = vld [vmem:[#allocation5 + $0x58] sm:$0xff]
        %v2505 = vld [vmem:[#allocation5 + $0x60] sm:$0xff]
        %v2506 = vld [vmem:[#allocation5 + $0x68] sm:$0xff]
        %v2507 = vld [vmem:[#allocation5 + $0x70] sm:$0xff]
        %v2508 = vld [vmem:[#allocation5 + $0x78] sm:$0xff]
        %v2509 = vld [vmem:[#allocation5 + $0x80] sm:$0xff]
        %v2510 = vld [vmem:[#allocation5 + $0x88] sm:$0xff]
        %v2511 = vld [vmem:[#allocation5 + $0x90] sm:$0xff]
        %v2512 = vld [vmem:[#allocation5 + $0x98] sm:$0xff]
        %v2513 = vld [vmem:[#allocation5 + $0xa0] sm:$0xff]
        %v2514 = vld [vmem:[#allocation5 + $0xa8] sm:$0xff]
        %v2515 = vld [vmem:[#allocation5 + $0xb0] sm:$0xff]
        %v2516 = vld [vmem:[#allocation5 + $0xb8] sm:$0xff]
        %v2517 = vld [vmem:[#allocation5 + $0xc0] sm:$0xff]
        %v2518 = vld [vmem:[#allocation5 + $0xc8] sm:$0xff]
        %v2519 = vld [vmem:[#allocation5 + $0xd0] sm:$0xff]
        %v2520 = vld [vmem:[#allocation5 + $0xd8] sm:$0xff]
        %v2521 = vld [vmem:[#allocation5 + $0xe0] sm:$0xff]
        %v2522 = vld [vmem:[#allocation5 + $0xe8] sm:$0xff]
        %v2523 = vld [vmem:[#allocation5 + $0xf0] sm:$0xff]
        %v2524 = vld [vmem:[#allocation5 + $0xf8] sm:$0xff]
        %v2525 = vld [vmem:[#allocation5 + $0x100] sm:$0xff]
        %v2526 = vld [vmem:[#allocation5 + $0x108] sm:$0xff]
        %v2527 = vld [vmem:[#allocation5 + $0x110] sm:$0xff]
        %v2528 = vld [vmem:[#allocation5 + $0x118] sm:$0xff]
        %v2529 = vld [vmem:[#allocation5 + $0x120] sm:$0xff]
        %v2530 = vld [vmem:[#allocation5 + $0x128] sm:$0xff]
        %v2531 = vld [vmem:[#allocation5 + $0x130] sm:$0xff]
        %v2532 = vld [vmem:[#allocation5 + $0x138] sm:$0xff]
        %v2533 = vld [vmem:[#allocation5 + $0x140] sm:$0xff]
        %v2534 = vld [vmem:[#allocation5 + $0x148] sm:$0xff]
        %v2535 = vld [vmem:[#allocation5 + $0x150] sm:$0xff]
        %v2536 = vld [vmem:[#allocation5 + $0x158] sm:$0xff]
        %v2537 = vld [vmem:[#allocation5 + $0x160] sm:$0xff]
        %v2538 = vld [vmem:[#allocation5 + $0x168] sm:$0xff]
        %v2539 = vld [vmem:[#allocation5 + $0x170] sm:$0xff]
        %v2540 = vld [vmem:[#allocation5 + $0x178] sm:$0xff]
        %v2541 = vld [vmem:[#allocation5 + $0x180] sm:$0xff]
        %v2542 = vld [vmem:[#allocation5 + $0x188] sm:$0xff]
        %v2543 = vld [vmem:[#allocation5 + $0x190] sm:$0xff]
        %v2544 = vld [vmem:[#allocation5 + $0x198] sm:$0xff]
        %v2545 = vld [vmem:[#allocation5 + $0x1a0] sm:$0xff]
        %v2546 = vld [vmem:[#allocation5 + $0x1a8] sm:$0xff]
        %v2547 = vld [vmem:[#allocation5 + $0x1b0] sm:$0xff]
        %v2548 = vld [vmem:[#allocation5 + $0x1b8] sm:$0xff]
        %v2549 = vld [vmem:[#allocation5 + $0x1c0] sm:$0xff]
        %v2550 = vld [vmem:[#allocation5 + $0x1c8] sm:$0xff]
        %v2551 = vld [vmem:[#allocation5 + $0x1d0] sm:$0xff]
        %v2552 = vld [vmem:[#allocation5 + $0x1d8] sm:$0xff]
        %v2553 = vld [vmem:[#allocation5 + $0x1e0] sm:$0xff]
        %v2554 = vld [vmem:[#allocation5 + $0x1e8] sm:$0xff]
        %v2555 = vld [vmem:[#allocation5 + $0x1f0] sm:$0xff]
        %v2556 = vld [vmem:[#allocation5 + $0x1f8] sm:$0xff]
        %v2557 = vld [vmem:[%s10] sm:$0xf]
        %v2559 = vlaneseq
        %v2560 = vshrl.u32 %v2559, 7
        %v2561 = vsub.s32 0, %v2560
        %v2562 = vrot.slane %v2557, %v2561
        %v2563 = vlaneseq
        %v2564 = vshrl.u32 %v2563, 7
        %v2565 = vsub.s32 1, %v2564
        %v2566 = vrot.slane %v2557, %v2565
        %v2567 = vlaneseq
        %v2568 = vshrl.u32 %v2567, 7
        %v2569 = vsub.s32 2, %v2568
        %v2570 = vrot.slane %v2557, %v2569
        %v2571 = vlaneseq
        %v2572 = vshrl.u32 %v2571, 7
        %v2573 = vsub.s32 3, %v2572
        %v2574 = vrot.slane %v2557, %v2573
        %2579 = vmatprep.subr.mxu0 %v2554
        %2580 = vmatpush1.msra.mxu0 %v2553
        %2581 = vmatprep.subr.mxu0 %v2550
        %2582 = vmatpush1.msra.mxu0 %v2549
        %2583 = vmatprep.subr.mxu0 %v2546
        %2584 = vmatpush1.msra.mxu0 %v2545
        %2585 = vmatprep.subr.mxu0 %v2542
        %2586 = vmatpush1.msra.mxu0 %v2541
        %2587 = vmatprep.subr.mxu0 %v2538
        %2588 = vmatpush1.msra.mxu0 %v2537
        %2589 = vmatprep.subr.mxu0 %v2534
        %2590 = vmatpush1.msra.mxu0 %v2533
        %2591 = vmatprep.subr.mxu0 %v2530
        %2592 = vmatpush1.msra.mxu0 %v2529
        %2593 = vmatprep.subr.mxu0 %v2526
        %2594 = vmatpush1.msra.mxu0 %v2525
        %2595 = vmatprep.subr.mxu0 %v2522
        %2596 = vmatpush1.msra.mxu0 %v2521
        %2597 = vmatprep.subr.mxu0 %v2518
        %2598 = vmatpush1.msra.mxu0 %v2517
        %2599 = vmatprep.subr.mxu0 %v2514
        %2600 = vmatpush1.msra.mxu0 %v2513
        %2601 = vmatprep.subr.mxu0 %v2510
        %2602 = vmatpush1.msra.mxu0 %v2509
        %2603 = vmatprep.subr.mxu0 %v2506
        %2604 = vmatpush1.msra.mxu0 %v2505
        %2605 = vmatprep.subr.mxu0 %v2502
        %2606 = vmatpush1.msra.mxu0 %v2501
        %2607 = vmatprep.subr.mxu0 %v2498
        %2608 = vmatpush1.msra.mxu0 %v2497
        %2609 = vmatprep.subr.mxu0 %v2494
        %2610 = vmatpush1.msra.mxu0 %v2493
        %2611 = vmatprep.subr.mxu0 0.0
        %2612 = vmatpush2.msra.mxu0 0.0
        %2613 = vmatprep.subr.mxu0 0.0
        %2614 = vmatpush2.msra.mxu0 0.0
        %2615 = vmatprep.subr.mxu0 0.0
        %2616 = vmatpush2.msra.mxu0 0.0
        %2617 = vmatprep.subr.mxu0 0.0
        %2618 = vmatpush2.msra.mxu0 0.0
        %2619 = vmatprep.subr.mxu0 0.0
        %2620 = vmatpush2.msra.mxu0 0.0
        %2621 = vmatprep.subr.mxu0 0.0
        %2622 = vmatpush2.msra.mxu0 0.0
        %2623 = vmatprep.subr.mxu0 0.0
        %2624 = vmatpush2.msra.mxu0 0.0
        %2625 = vmatprep.subr.mxu0 0.0
        %2626 = vmatpush2.msra.mxu0 0.0
        %2627 = vmatprep.subr.mxu0 0.0
        %2628 = vmatpush2.msra.mxu0 0.0
        %2629 = vmatprep.subr.mxu0 0.0
        %2630 = vmatpush2.msra.mxu0 0.0
        %2631 = vmatprep.subr.mxu0 0.0
        %2632 = vmatpush2.msra.mxu0 0.0
        %2633 = vmatprep.subr.mxu0 0.0
        %2634 = vmatpush2.msra.mxu0 0.0
        %2635 = vmatprep.subr.mxu0 0.0
        %2636 = vmatpush2.msra.mxu0 0.0
        %2637 = vmatprep.subr.mxu0 0.0
        %2638 = vmatpush2.msra.mxu0 0.0
        %2639 = vmatprep.subr.mxu0 0.0
        %2640 = vmatpush2.msra.mxu0 0.0
        %2641 = vmatprep.subr.mxu0 0.0
        %2642 = vmatpush2.msra.mxu0 0.0
        %2643 = vmatprep.mubr.f32.mxu0 0.0
        %2644 = vmatmul.mubr.f32.gmra.mxu0 %v2485
        %v2645 = vpop.f32.mrf.mxu0
        %v2646 = vadd.f32 %v2562, %v2645
        %v2647 = vpop.f32.mrf.mxu0
        %v2648 = vadd.f32 %v2566, %v2647
        %2649 = vmatprep.mubr.f32.mxu0 0.0
        %2650 = vmatmul.mubr.f32.gmra.mxu0 %v2486
        %v2651 = vpop.f32.mrf.mxu0
        %v2652 = vadd.f32 %v2562, %v2651
        %v2653 = vpop.f32.mrf.mxu0
        %v2654 = vadd.f32 %v2566, %v2653
        %2655 = vmatprep.mubr.f32.mxu0 0.0
        %2656 = vmatmul.mubr.f32.gmra.mxu0 %v2487
        %v2657 = vpop.f32.mrf.mxu0
        %v2658 = vadd.f32 %v2562, %v2657
        %v2659 = vpop.f32.mrf.mxu0
        %v2660 = vadd.f32 %v2566, %v2659
        %2661 = vmatprep.mubr.f32.mxu0 0.0
        %2662 = vmatmul.mubr.f32.gmra.mxu0 %v2488
        %v2663 = vpop.f32.mrf.mxu0
        %v2664 = vadd.f32 %v2562, %v2663
        %v2665 = vpop.f32.mrf.mxu0
        %v2666 = vadd.f32 %v2566, %v2665
        %2667 = vmatprep.mubr.f32.mxu0 0.0
        %2668 = vmatmul.mubr.f32.gmra.mxu0 %v2489
        %v2669 = vpop.f32.mrf.mxu0
        %v2670 = vadd.f32 %v2562, %v2669
        %v2671 = vpop.f32.mrf.mxu0
        %v2672 = vadd.f32 %v2566, %v2671
        %2673 = vmatprep.mubr.f32.mxu0 0.0
        %2674 = vmatmul.mubr.f32.gmra.mxu0 %v2490
        %v2675 = vpop.f32.mrf.mxu0
        %v2676 = vadd.f32 %v2562, %v2675
        %v2677 = vpop.f32.mrf.mxu0
        %v2678 = vadd.f32 %v2566, %v2677
        %2679 = vmatprep.mubr.f32.mxu0 0.0
        %2680 = vmatmul.mubr.f32.gmra.mxu0 %v2491
        %v2681 = vpop.f32.mrf.mxu0
        %v2682 = vadd.f32 %v2562, %v2681
        %v2683 = vpop.f32.mrf.mxu0
        %v2684 = vadd.f32 %v2566, %v2683
        %2685 = vmatprep.mubr.f32.mxu0 0.0
        %2686 = vmatmul.mubr.f32.gmra.mxu0 %v2492
        %v2687 = vpop.f32.mrf.mxu0
        %v2688 = vadd.f32 %v2562, %v2687
        %v2689 = vpop.f32.mrf.mxu0
        %v2690 = vadd.f32 %v2566, %v2689
        %2691 = vdwg.mxu0
        %2692 = vmatprep.subr.mxu0 %v2556
        %2693 = vmatpush1.msra.mxu0 %v2555
        %2694 = vmatprep.subr.mxu0 %v2552
        %2695 = vmatpush1.msra.mxu0 %v2551
        %2696 = vmatprep.subr.mxu0 %v2548
        %2697 = vmatpush1.msra.mxu0 %v2547
        %2698 = vmatprep.subr.mxu0 %v2544
        %2699 = vmatpush1.msra.mxu0 %v2543
        %2700 = vmatprep.subr.mxu0 %v2540
        %2701 = vmatpush1.msra.mxu0 %v2539
        %2702 = vmatprep.subr.mxu0 %v2536
        %2703 = vmatpush1.msra.mxu0 %v2535
        %2704 = vmatprep.subr.mxu0 %v2532
        %2705 = vmatpush1.msra.mxu0 %v2531
        %2706 = vmatprep.subr.mxu0 %v2528
        %2707 = vmatpush1.msra.mxu0 %v2527
        %2708 = vmatprep.subr.mxu0 %v2524
        %2709 = vmatpush1.msra.mxu0 %v2523
        %2710 = vmatprep.subr.mxu0 %v2520
        %2711 = vmatpush1.msra.mxu0 %v2519
        %2712 = vmatprep.subr.mxu0 %v2516
        %2713 = vmatpush1.msra.mxu0 %v2515
        %2714 = vmatprep.subr.mxu0 %v2512
        %2715 = vmatpush1.msra.mxu0 %v2511
        %2716 = vmatprep.subr.mxu0 %v2508
        %2717 = vmatpush1.msra.mxu0 %v2507
        %2718 = vmatprep.subr.mxu0 %v2504
        %2719 = vmatpush1.msra.mxu0 %v2503
        %2720 = vmatprep.subr.mxu0 %v2500
        %2721 = vmatpush1.msra.mxu0 %v2499
        %2722 = vmatprep.subr.mxu0 %v2496
        %2723 = vmatpush1.msra.mxu0 %v2495
        %2724 = vmatprep.subr.mxu0 0.0
        %2725 = vmatpush2.msra.mxu0 0.0
        %2726 = vmatprep.subr.mxu0 0.0
        %2727 = vmatpush2.msra.mxu0 0.0
        %2728 = vmatprep.subr.mxu0 0.0
        %2729 = vmatpush2.msra.mxu0 0.0
        %2730 = vmatprep.subr.mxu0 0.0
        %2731 = vmatpush2.msra.mxu0 0.0
        %2732 = vmatprep.subr.mxu0 0.0
        %2733 = vmatpush2.msra.mxu0 0.0
        %2734 = vmatprep.subr.mxu0 0.0
        %2735 = vmatpush2.msra.mxu0 0.0
        %2736 = vmatprep.subr.mxu0 0.0
        %2737 = vmatpush2.msra.mxu0 0.0
        %2738 = vmatprep.subr.mxu0 0.0
        %2739 = vmatpush2.msra.mxu0 0.0
        %2740 = vmatprep.subr.mxu0 0.0
        %2741 = vmatpush2.msra.mxu0 0.0
        %2742 = vmatprep.subr.mxu0 0.0
        %2743 = vmatpush2.msra.mxu0 0.0
        %2744 = vmatprep.subr.mxu0 0.0
        %2745 = vmatpush2.msra.mxu0 0.0
        %2746 = vmatprep.subr.mxu0 0.0
        %2747 = vmatpush2.msra.mxu0 0.0
        %2748 = vmatprep.subr.mxu0 0.0
        %2749 = vmatpush2.msra.mxu0 0.0
        %2750 = vmatprep.subr.mxu0 0.0
        %2751 = vmatpush2.msra.mxu0 0.0
        %2752 = vmatprep.subr.mxu0 0.0
        %2753 = vmatpush2.msra.mxu0 0.0
        %2754 = vmatprep.subr.mxu0 0.0
        %2755 = vmatpush2.msra.mxu0 0.0
        %2756 = vmatprep.mubr.f32.mxu0 0.0
        %2757 = vmatmul.mubr.f32.gmra.mxu0 %v2485
        %v2758 = vpop.f32.mrf.mxu0
        %v2759 = vadd.f32 %v2570, %v2758
        %v2760 = vpop.f32.mrf.mxu0
        %v2761 = vadd.f32 %v2574, %v2760
        %2762 = vmatprep.mubr.f32.mxu0 0.0
        %2763 = vmatmul.mubr.f32.gmra.mxu0 %v2486
        %v2764 = vpop.f32.mrf.mxu0
        %v2765 = vadd.f32 %v2570, %v2764
        %v2766 = vpop.f32.mrf.mxu0
        %v2767 = vadd.f32 %v2574, %v2766
        %2768 = vmatprep.mubr.f32.mxu0 0.0
        %2769 = vmatmul.mubr.f32.gmra.mxu0 %v2487
        %v2770 = vpop.f32.mrf.mxu0
        %v2771 = vadd.f32 %v2570, %v2770
        %v2772 = vpop.f32.mrf.mxu0
        %v2773 = vadd.f32 %v2574, %v2772
        %2774 = vmatprep.mubr.f32.mxu0 0.0
        %2775 = vmatmul.mubr.f32.gmra.mxu0 %v2488
        %v2776 = vpop.f32.mrf.mxu0
        %v2777 = vadd.f32 %v2570, %v2776
        %v2778 = vpop.f32.mrf.mxu0
        %v2779 = vadd.f32 %v2574, %v2778
        %2780 = vmatprep.mubr.f32.mxu0 0.0
        %2781 = vmatmul.mubr.f32.gmra.mxu0 %v2489
        %v2782 = vpop.f32.mrf.mxu0
        %v2783 = vadd.f32 %v2570, %v2782
        %v2784 = vpop.f32.mrf.mxu0
        %v2785 = vadd.f32 %v2574, %v2784
        %2786 = vmatprep.mubr.f32.mxu0 0.0
        %2787 = vmatmul.mubr.f32.gmra.mxu0 %v2490
        %v2788 = vpop.f32.mrf.mxu0
        %v2789 = vadd.f32 %v2570, %v2788
        %v2790 = vpop.f32.mrf.mxu0
        %v2791 = vadd.f32 %v2574, %v2790
        %2792 = vmatprep.mubr.f32.mxu0 0.0
        %2793 = vmatmul.mubr.f32.gmra.mxu0 %v2491
        %v2794 = vpop.f32.mrf.mxu0
        %v2795 = vadd.f32 %v2570, %v2794
        %v2796 = vpop.f32.mrf.mxu0
        %v2797 = vadd.f32 %v2574, %v2796
        %2798 = vmatprep.mubr.f32.mxu0 0.0
        %2799 = vmatmul.mubr.f32.gmra.mxu0 %v2492
        %v2800 = vpop.f32.mrf.mxu0
        %v2801 = vadd.f32 %v2570, %v2800
        %v2802 = vpop.f32.mrf.mxu0
        %v2803 = vadd.f32 %v2574, %v2802
        %2804 = vdwg.mxu0
        %v2805 = vmul.f32 %v2646, 0.5
        %v2806 = vmul.f32 %v2648, 0.5
        %v2807 = vmul.f32 %v2759, 0.5
        %v2808 = vmul.f32 %v2761, 0.5
        %v2809 = vmul.f32 %v2652, 0.5
        %v2810 = vmul.f32 %v2654, 0.5
        %v2811 = vmul.f32 %v2765, 0.5
        %v2812 = vmul.f32 %v2767, 0.5
        %v2813 = vmul.f32 %v2658, 0.5
        %v2814 = vmul.f32 %v2660, 0.5
        %v2815 = vmul.f32 %v2771, 0.5
        %v2816 = vmul.f32 %v2773, 0.5
        %v2817 = vmul.f32 %v2664, 0.5
        %v2818 = vmul.f32 %v2666, 0.5
        %v2819 = vmul.f32 %v2777, 0.5
        %v2820 = vmul.f32 %v2779, 0.5
        %v2821 = vmul.f32 %v2670, 0.5
        %v2822 = vmul.f32 %v2672, 0.5
        %v2823 = vmul.f32 %v2783, 0.5
        %v2824 = vmul.f32 %v2785, 0.5
        %v2825 = vmul.f32 %v2676, 0.5
        %v2826 = vmul.f32 %v2678, 0.5
        %v2827 = vmul.f32 %v2789, 0.5
        %v2828 = vmul.f32 %v2791, 0.5
        %v2829 = vmul.f32 %v2682, 0.5
        %v2830 = vmul.f32 %v2684, 0.5
        %v2831 = vmul.f32 %v2795, 0.5
        %v2832 = vmul.f32 %v2797, 0.5
        %v2833 = vmul.f32 %v2688, 0.5
        %v2834 = vmul.f32 %v2690, 0.5
        %v2835 = vmul.f32 %v2801, 0.5
        %v2836 = vmul.f32 %v2803, 0.5
        %v2837 = vmul.f32 %v2646, 0.70710677
        %v2838 = vmul.f32 %v2648, 0.70710677
        %v2839 = vmul.f32 %v2759, 0.70710677
        %v2840 = vmul.f32 %v2761, 0.70710677
        %v2841 = vmul.f32 %v2652, 0.70710677
        %v2842 = vmul.f32 %v2654, 0.70710677
        %v2843 = vmul.f32 %v2765, 0.70710677
        %v2844 = vmul.f32 %v2767, 0.70710677
        %v2845 = vmul.f32 %v2658, 0.70710677
        %v2846 = vmul.f32 %v2660, 0.70710677
        %v2847 = vmul.f32 %v2771, 0.70710677
        %v2848 = vmul.f32 %v2773, 0.70710677
        %v2849 = vmul.f32 %v2664, 0.70710677
        %v2850 = vmul.f32 %v2666, 0.70710677
        %v2851 = vmul.f32 %v2777, 0.70710677
        %v2852 = vmul.f32 %v2779, 0.70710677
        %v2853 = vmul.f32 %v2670, 0.70710677
        %v2854 = vmul.f32 %v2672, 0.70710677
        %v2855 = vmul.f32 %v2783, 0.70710677
        %v2856 = vmul.f32 %v2785, 0.70710677
        %v2857 = vmul.f32 %v2676, 0.70710677
        %v2858 = vmul.f32 %v2678, 0.70710677
        %v2859 = vmul.f32 %v2789, 0.70710677
        %v2860 = vmul.f32 %v2791, 0.70710677
        %v2861 = vmul.f32 %v2682, 0.70710677
        %v2862 = vmul.f32 %v2684, 0.70710677
        %v2863 = vmul.f32 %v2795, 0.70710677
        %v2864 = vmul.f32 %v2797, 0.70710677
        %v2865 = vmul.f32 %v2688, 0.70710677
        %v2866 = vmul.f32 %v2690, 0.70710677
        %v2867 = vmul.f32 %v2801, 0.70710677
        %v2868 = vmul.f32 %v2803, 0.70710677
        %v2869 = verf.f32.pop %v2837
        %v2870 = verf.f32.pop %v2838
        %v2871 = verf.f32.pop %v2839
        %v2872 = verf.f32.pop %v2840
        %v2873 = verf.f32.pop %v2841
        %v2874 = verf.f32.pop %v2842
        %v2875 = verf.f32.pop %v2843
        %v2876 = verf.f32.pop %v2844
        %v2877 = verf.f32.pop %v2845
        %v2878 = verf.f32.pop %v2846
        %v2879 = verf.f32.pop %v2847
        %v2880 = verf.f32.pop %v2848
        %v2881 = verf.f32.pop %v2849
        %v2882 = verf.f32.pop %v2850
        %v2883 = verf.f32.pop %v2851
        %v2884 = verf.f32.pop %v2852
        %v2885 = verf.f32.pop %v2853
        %v2886 = verf.f32.pop %v2854
        %v2887 = verf.f32.pop %v2855
        %v2888 = verf.f32.pop %v2856
        %v2889 = verf.f32.pop %v2857
        %v2890 = verf.f32.pop %v2858
        %v2891 = verf.f32.pop %v2859
        %v2892 = verf.f32.pop %v2860
        %v2893 = verf.f32.pop %v2861
        %v2894 = verf.f32.pop %v2862
        %v2895 = verf.f32.pop %v2863
        %v2896 = verf.f32.pop %v2864
        %v2897 = verf.f32.pop %v2865
        %v2898 = verf.f32.pop %v2866
        %v2899 = verf.f32.pop %v2867
        %v2900 = verf.f32.pop %v2868
        %v2901 = vadd.f32 %v2869, 1.0
        %v2902 = vadd.f32 %v2870, 1.0
        %v2903 = vadd.f32 %v2871, 1.0
        %v2904 = vadd.f32 %v2872, 1.0
        %v2905 = vadd.f32 %v2873, 1.0
        %v2906 = vadd.f32 %v2874, 1.0
        %v2907 = vadd.f32 %v2875, 1.0
        %v2908 = vadd.f32 %v2876, 1.0
        %v2909 = vadd.f32 %v2877, 1.0
        %v2910 = vadd.f32 %v2878, 1.0
        %v2911 = vadd.f32 %v2879, 1.0
        %v2912 = vadd.f32 %v2880, 1.0
        %v2913 = vadd.f32 %v2881, 1.0
        %v2914 = vadd.f32 %v2882, 1.0
        %v2915 = vadd.f32 %v2883, 1.0
        %v2916 = vadd.f32 %v2884, 1.0
        %v2917 = vadd.f32 %v2885, 1.0
        %v2918 = vadd.f32 %v2886, 1.0
        %v2919 = vadd.f32 %v2887, 1.0
        %v2920 = vadd.f32 %v2888, 1.0
        %v2921 = vadd.f32 %v2889, 1.0
        %v2922 = vadd.f32 %v2890, 1.0
        %v2923 = vadd.f32 %v2891, 1.0
        %v2924 = vadd.f32 %v2892, 1.0
        %v2925 = vadd.f32 %v2893, 1.0
        %v2926 = vadd.f32 %v2894, 1.0
        %v2927 = vadd.f32 %v2895, 1.0
        %v2928 = vadd.f32 %v2896, 1.0
        %v2929 = vadd.f32 %v2897, 1.0
        %v2930 = vadd.f32 %v2898, 1.0
        %v2931 = vadd.f32 %v2899, 1.0
        %v2932 = vadd.f32 %v2900, 1.0
        %v2933 = vmul.f32 %v2805, %v2901
        %v2934 = vmul.f32 %v2806, %v2902
        %v2935 = vmul.f32 %v2807, %v2903
        %v2936 = vmul.f32 %v2808, %v2904
        %v2937 = vmul.f32 %v2809, %v2905
        %v2938 = vmul.f32 %v2810, %v2906
        %v2939 = vmul.f32 %v2811, %v2907
        %v2940 = vmul.f32 %v2812, %v2908
        %v2941 = vmul.f32 %v2813, %v2909
        %v2942 = vmul.f32 %v2814, %v2910
        %v2943 = vmul.f32 %v2815, %v2911
        %v2944 = vmul.f32 %v2816, %v2912
        %v2945 = vmul.f32 %v2817, %v2913
        %v2946 = vmul.f32 %v2818, %v2914
        %v2947 = vmul.f32 %v2819, %v2915
        %v2948 = vmul.f32 %v2820, %v2916
        %v2949 = vmul.f32 %v2821, %v2917
        %v2950 = vmul.f32 %v2822, %v2918
        %v2951 = vmul.f32 %v2823, %v2919
        %v2952 = vmul.f32 %v2824, %v2920
        %v2953 = vmul.f32 %v2825, %v2921
        %v2954 = vmul.f32 %v2826, %v2922
        %v2955 = vmul.f32 %v2827, %v2923
        %v2956 = vmul.f32 %v2828, %v2924
        %v2957 = vmul.f32 %v2829, %v2925
        %v2958 = vmul.f32 %v2830, %v2926
        %v2959 = vmul.f32 %v2831, %v2927
        %v2960 = vmul.f32 %v2832, %v2928
        %v2961 = vmul.f32 %v2833, %v2929
        %v2962 = vmul.f32 %v2834, %v2930
        %v2963 = vmul.f32 %v2835, %v2931
        %v2964 = vmul.f32 %v2836, %v2932
        %v2965 = vld [vmem:[#allocation7] sm:$0xff]
        %v2966 = vld [vmem:[#allocation7 + $0x8] sm:$0xff]
        %v2967 = vld [vmem:[#allocation7 + $0x10] sm:$0xff]
        %v2968 = vld [vmem:[#allocation7 + $0x18] sm:$0xff]
        %v2969 = vld [vmem:[#allocation7 + $0x20] sm:$0xff]
        %v2970 = vld [vmem:[#allocation7 + $0x28] sm:$0xff]
        %v2971 = vld [vmem:[#allocation7 + $0x30] sm:$0xff]
        %v2972 = vld [vmem:[#allocation7 + $0x38] sm:$0xff]
        %v2973 = vld [vmem:[#allocation7 + $0x40] sm:$0xff]
        %v2974 = vld [vmem:[#allocation7 + $0x48] sm:$0xff]
        %v2975 = vld [vmem:[#allocation7 + $0x50] sm:$0xff]
        %v2976 = vld [vmem:[#allocation7 + $0x58] sm:$0xff]
        %v2977 = vld [vmem:[#allocation7 + $0x60] sm:$0xff]
        %v2978 = vld [vmem:[#allocation7 + $0x68] sm:$0xff]
        %v2979 = vld [vmem:[#allocation7 + $0x70] sm:$0xff]
        %v2980 = vld [vmem:[#allocation7 + $0x78] sm:$0xff]
        %v2981 = vld [vmem:[#allocation7 + $0x80] sm:$0xff]
        %v2982 = vld [vmem:[#allocation7 + $0x88] sm:$0xff]
        %v2983 = vld [vmem:[#allocation7 + $0x90] sm:$0xff]
        %v2984 = vld [vmem:[#allocation7 + $0x98] sm:$0xff]
        %v2985 = vld [vmem:[#allocation7 + $0xa0] sm:$0xff]
        %v2986 = vld [vmem:[#allocation7 + $0xa8] sm:$0xff]
        %v2987 = vld [vmem:[#allocation7 + $0xb0] sm:$0xff]
        %v2988 = vld [vmem:[#allocation7 + $0xb8] sm:$0xff]
        %v2989 = vld [vmem:[#allocation7 + $0xc0] sm:$0xff]
        %v2990 = vld [vmem:[#allocation7 + $0xc8] sm:$0xff]
        %v2991 = vld [vmem:[#allocation7 + $0xd0] sm:$0xff]
        %v2992 = vld [vmem:[#allocation7 + $0xd8] sm:$0xff]
        %v2993 = vld [vmem:[#allocation7 + $0xe0] sm:$0xff]
        %v2994 = vld [vmem:[#allocation7 + $0xe8] sm:$0xff]
        %v2995 = vld [vmem:[#allocation7 + $0xf0] sm:$0xff]
        %v2996 = vld [vmem:[#allocation7 + $0xf8] sm:$0xff]
        %v2997 = vld [vmem:[#allocation7 + $0x100] sm:$0xff]
        %v2998 = vld [vmem:[#allocation7 + $0x108] sm:$0xff]
        %v2999 = vld [vmem:[#allocation7 + $0x110] sm:$0xff]
        %v3000 = vld [vmem:[#allocation7 + $0x118] sm:$0xff]
        %v3001 = vld [vmem:[#allocation7 + $0x120] sm:$0xff]
        %v3002 = vld [vmem:[#allocation7 + $0x128] sm:$0xff]
        %v3003 = vld [vmem:[#allocation7 + $0x130] sm:$0xff]
        %v3004 = vld [vmem:[#allocation7 + $0x138] sm:$0xff]
        %v3005 = vld [vmem:[#allocation7 + $0x140] sm:$0xff]
        %v3006 = vld [vmem:[#allocation7 + $0x148] sm:$0xff]
        %v3007 = vld [vmem:[#allocation7 + $0x150] sm:$0xff]
        %v3008 = vld [vmem:[#allocation7 + $0x158] sm:$0xff]
        %v3009 = vld [vmem:[#allocation7 + $0x160] sm:$0xff]
        %v3010 = vld [vmem:[#allocation7 + $0x168] sm:$0xff]
        %v3011 = vld [vmem:[#allocation7 + $0x170] sm:$0xff]
        %v3012 = vld [vmem:[#allocation7 + $0x178] sm:$0xff]
        %v3013 = vld [vmem:[#allocation7 + $0x180] sm:$0xff]
        %v3014 = vld [vmem:[#allocation7 + $0x188] sm:$0xff]
        %v3015 = vld [vmem:[#allocation7 + $0x190] sm:$0xff]
        %v3016 = vld [vmem:[#allocation7 + $0x198] sm:$0xff]
        %v3017 = vld [vmem:[#allocation7 + $0x1a0] sm:$0xff]
        %v3018 = vld [vmem:[#allocation7 + $0x1a8] sm:$0xff]
        %v3019 = vld [vmem:[#allocation7 + $0x1b0] sm:$0xff]
        %v3020 = vld [vmem:[#allocation7 + $0x1b8] sm:$0xff]
        %v3021 = vld [vmem:[#allocation7 + $0x1c0] sm:$0xff]
        %v3022 = vld [vmem:[#allocation7 + $0x1c8] sm:$0xff]
        %v3023 = vld [vmem:[#allocation7 + $0x1d0] sm:$0xff]
        %v3024 = vld [vmem:[#allocation7 + $0x1d8] sm:$0xff]
        %v3025 = vld [vmem:[#allocation7 + $0x1e0] sm:$0xff]
        %v3026 = vld [vmem:[#allocation7 + $0x1e8] sm:$0xff]
        %v3027 = vld [vmem:[#allocation7 + $0x1f0] sm:$0xff]
        %v3028 = vld [vmem:[#allocation7 + $0x1f8] sm:$0xff]
        %v3029 = vld [vmem:[%s12] sm:$0x1]
        %v3031 = vlaneseq
        %v3032 = vshrl.u32 %v3031, 7
        %v3033 = vsub.s32 0, %v3032
        %v3034 = vrot.slane %v3029, %v3033
        %3036 = vmatprep.subr.mxu0 0.0
        %3037 = vmatpush1.msra.mxu0 %v2980
        %3038 = vmatprep.subr.mxu0 0.0
        %3039 = vmatpush1.msra.mxu0 %v2979
        %3040 = vmatprep.subr.mxu0 0.0
        %3041 = vmatpush1.msra.mxu0 %v2978
        %3042 = vmatprep.subr.mxu0 0.0
        %3043 = vmatpush1.msra.mxu0 %v2977
        %3044 = vmatprep.subr.mxu0 0.0
        %3045 = vmatpush1.msra.mxu0 %v2976
        %3046 = vmatprep.subr.mxu0 0.0
        %3047 = vmatpush1.msra.mxu0 %v2975
        %3048 = vmatprep.subr.mxu0 0.0
        %3049 = vmatpush1.msra.mxu0 %v2974
        %3050 = vmatprep.subr.mxu0 0.0
        %3051 = vmatpush1.msra.mxu0 %v2973
        %3052 = vmatprep.subr.mxu0 0.0
        %3053 = vmatpush1.msra.mxu0 %v2972
        %3054 = vmatprep.subr.mxu0 0.0
        %3055 = vmatpush1.msra.mxu0 %v2971
        %3056 = vmatprep.subr.mxu0 0.0
        %3057 = vmatpush1.msra.mxu0 %v2970
        %3058 = vmatprep.subr.mxu0 0.0
        %3059 = vmatpush1.msra.mxu0 %v2969
        %3060 = vmatprep.subr.mxu0 0.0
        %3061 = vmatpush1.msra.mxu0 %v2968
        %3062 = vmatprep.subr.mxu0 0.0
        %3063 = vmatpush1.msra.mxu0 %v2967
        %3064 = vmatprep.subr.mxu0 0.0
        %3065 = vmatpush1.msra.mxu0 %v2966
        %3066 = vmatprep.subr.mxu0 0.0
        %3067 = vmatpush1.msra.mxu0 %v2965
        %3068 = vmatprep.subr.mxu0 0.0
        %3069 = vmatpush2.msra.mxu0 %v2996
        %3070 = vmatprep.subr.mxu0 0.0
        %3071 = vmatpush2.msra.mxu0 %v2995
        %3072 = vmatprep.subr.mxu0 0.0
        %3073 = vmatpush2.msra.mxu0 %v2994
        %3074 = vmatprep.subr.mxu0 0.0
        %3075 = vmatpush2.msra.mxu0 %v2993
        %3076 = vmatprep.subr.mxu0 0.0
        %3077 = vmatpush2.msra.mxu0 %v2992
        %3078 = vmatprep.subr.mxu0 0.0
        %3079 = vmatpush2.msra.mxu0 %v2991
        %3080 = vmatprep.subr.mxu0 0.0
        %3081 = vmatpush2.msra.mxu0 %v2990
        %3082 = vmatprep.subr.mxu0 0.0
        %3083 = vmatpush2.msra.mxu0 %v2989
        %3084 = vmatprep.subr.mxu0 0.0
        %3085 = vmatpush2.msra.mxu0 %v2988
        %3086 = vmatprep.subr.mxu0 0.0
        %3087 = vmatpush2.msra.mxu0 %v2987
        %3088 = vmatprep.subr.mxu0 0.0
        %3089 = vmatpush2.msra.mxu0 %v2986
        %3090 = vmatprep.subr.mxu0 0.0
        %3091 = vmatpush2.msra.mxu0 %v2985
        %3092 = vmatprep.subr.mxu0 0.0
        %3093 = vmatpush2.msra.mxu0 %v2984
        %3094 = vmatprep.subr.mxu0 0.0
        %3095 = vmatpush2.msra.mxu0 %v2983
        %3096 = vmatprep.subr.mxu0 0.0
        %3097 = vmatpush2.msra.mxu0 %v2982
        %3098 = vmatprep.subr.mxu0 0.0
        %3099 = vmatpush2.msra.mxu0 %v2981
        %3100 = vmatprep.mubr.f32.mxu0 %v2934
        %3101 = vmatmul.mubr.f32.gmra.mxu0 %v2933
        %v3102 = vpop.f32.mrf.mxu0
        %v3103 = vadd.f32 %v3034, %v3102
        %v3104 = vpop.f32.mrf.mxu0
        %3105 = vmatprep.mubr.f32.mxu0 %v2938
        %3106 = vmatmul.mubr.f32.gmra.mxu0 %v2937
        %v3107 = vpop.f32.mrf.mxu0
        %v3108 = vadd.f32 %v3034, %v3107
        %v3109 = vpop.f32.mrf.mxu0
        %3110 = vmatprep.mubr.f32.mxu0 %v2942
        %3111 = vmatmul.mubr.f32.gmra.mxu0 %v2941
        %v3112 = vpop.f32.mrf.mxu0
        %v3113 = vadd.f32 %v3034, %v3112
        %v3114 = vpop.f32.mrf.mxu0
        %3115 = vmatprep.mubr.f32.mxu0 %v2946
        %3116 = vmatmul.mubr.f32.gmra.mxu0 %v2945
        %v3117 = vpop.f32.mrf.mxu0
        %v3118 = vadd.f32 %v3034, %v3117
        %v3119 = vpop.f32.mrf.mxu0
        %3120 = vmatprep.mubr.f32.mxu0 %v2950
        %3121 = vmatmul.mubr.f32.gmra.mxu0 %v2949
        %v3122 = vpop.f32.mrf.mxu0
        %v3123 = vadd.f32 %v3034, %v3122
        %v3124 = vpop.f32.mrf.mxu0
        %3125 = vmatprep.mubr.f32.mxu0 %v2954
        %3126 = vmatmul.mubr.f32.gmra.mxu0 %v2953
        %v3127 = vpop.f32.mrf.mxu0
        %v3128 = vadd.f32 %v3034, %v3127
        %v3129 = vpop.f32.mrf.mxu0
        %3130 = vmatprep.mubr.f32.mxu0 %v2958
        %3131 = vmatmul.mubr.f32.gmra.mxu0 %v2957
        %v3132 = vpop.f32.mrf.mxu0
        %v3133 = vadd.f32 %v3034, %v3132
        %v3134 = vpop.f32.mrf.mxu0
        %3135 = vmatprep.mubr.f32.mxu0 %v2962
        %3136 = vmatmul.mubr.f32.gmra.mxu0 %v2961
        %v3137 = vpop.f32.mrf.mxu0
        %v3138 = vadd.f32 %v3034, %v3137
        %v3139 = vpop.f32.mrf.mxu0
        %3140 = vdwg.mxu0
        %3141 = vmatprep.subr.mxu0 0.0
        %3142 = vmatpush1.msra.mxu0 %v3012
        %3143 = vmatprep.subr.mxu0 0.0
        %3144 = vmatpush1.msra.mxu0 %v3011
        %3145 = vmatprep.subr.mxu0 0.0
        %3146 = vmatpush1.msra.mxu0 %v3010
        %3147 = vmatprep.subr.mxu0 0.0
        %3148 = vmatpush1.msra.mxu0 %v3009
        %3149 = vmatprep.subr.mxu0 0.0
        %3150 = vmatpush1.msra.mxu0 %v3008
        %3151 = vmatprep.subr.mxu0 0.0
        %3152 = vmatpush1.msra.mxu0 %v3007
        %3153 = vmatprep.subr.mxu0 0.0
        %3154 = vmatpush1.msra.mxu0 %v3006
        %3155 = vmatprep.subr.mxu0 0.0
        %3156 = vmatpush1.msra.mxu0 %v3005
        %3157 = vmatprep.subr.mxu0 0.0
        %3158 = vmatpush1.msra.mxu0 %v3004
        %3159 = vmatprep.subr.mxu0 0.0
        %3160 = vmatpush1.msra.mxu0 %v3003
        %3161 = vmatprep.subr.mxu0 0.0
        %3162 = vmatpush1.msra.mxu0 %v3002
        %3163 = vmatprep.subr.mxu0 0.0
        %3164 = vmatpush1.msra.mxu0 %v3001
        %3165 = vmatprep.subr.mxu0 0.0
        %3166 = vmatpush1.msra.mxu0 %v3000
        %3167 = vmatprep.subr.mxu0 0.0
        %3168 = vmatpush1.msra.mxu0 %v2999
        %3169 = vmatprep.subr.mxu0 0.0
        %3170 = vmatpush1.msra.mxu0 %v2998
        %3171 = vmatprep.subr.mxu0 0.0
        %3172 = vmatpush1.msra.mxu0 %v2997
        %3173 = vmatprep.subr.mxu0 0.0
        %3174 = vmatpush2.msra.mxu0 %v3028
        %3175 = vmatprep.subr.mxu0 0.0
        %3176 = vmatpush2.msra.mxu0 %v3027
        %3177 = vmatprep.subr.mxu0 0.0
        %3178 = vmatpush2.msra.mxu0 %v3026
        %3179 = vmatprep.subr.mxu0 0.0
        %3180 = vmatpush2.msra.mxu0 %v3025
        %3181 = vmatprep.subr.mxu0 0.0
        %3182 = vmatpush2.msra.mxu0 %v3024
        %3183 = vmatprep.subr.mxu0 0.0
        %3184 = vmatpush2.msra.mxu0 %v3023
        %3185 = vmatprep.subr.mxu0 0.0
        %3186 = vmatpush2.msra.mxu0 %v3022
        %3187 = vmatprep.subr.mxu0 0.0
        %3188 = vmatpush2.msra.mxu0 %v3021
        %3189 = vmatprep.subr.mxu0 0.0
        %3190 = vmatpush2.msra.mxu0 %v3020
        %3191 = vmatprep.subr.mxu0 0.0
        %3192 = vmatpush2.msra.mxu0 %v3019
        %3193 = vmatprep.subr.mxu0 0.0
        %3194 = vmatpush2.msra.mxu0 %v3018
        %3195 = vmatprep.subr.mxu0 0.0
        %3196 = vmatpush2.msra.mxu0 %v3017
        %3197 = vmatprep.subr.mxu0 0.0
        %3198 = vmatpush2.msra.mxu0 %v3016
        %3199 = vmatprep.subr.mxu0 0.0
        %3200 = vmatpush2.msra.mxu0 %v3015
        %3201 = vmatprep.subr.mxu0 0.0
        %3202 = vmatpush2.msra.mxu0 %v3014
        %3203 = vmatprep.subr.mxu0 0.0
        %3204 = vmatpush2.msra.mxu0 %v3013
        %3205 = vmatprep.mubr.f32.mxu0 %v2936
        %3206 = vmatmul.mubr.f32.gmra.mxu0 %v2935
        %v3207 = vpop.f32.mrf.mxu0
        %v3208 = vadd.f32 %v3103, %v3207
        %v3209 = vpop.f32.mrf.mxu0
        %3210 = vmatprep.mubr.f32.mxu0 %v2940
        %3211 = vmatmul.mubr.f32.gmra.mxu0 %v2939
        %v3212 = vpop.f32.mrf.mxu0
        %v3213 = vadd.f32 %v3108, %v3212
        %v3214 = vpop.f32.mrf.mxu0
        %3215 = vmatprep.mubr.f32.mxu0 %v2944
        %3216 = vmatmul.mubr.f32.gmra.mxu0 %v2943
        %v3217 = vpop.f32.mrf.mxu0
        %v3218 = vadd.f32 %v3113, %v3217
        %v3219 = vpop.f32.mrf.mxu0
        %3220 = vmatprep.mubr.f32.mxu0 %v2948
        %3221 = vmatmul.mubr.f32.gmra.mxu0 %v2947
        %v3222 = vpop.f32.mrf.mxu0
        %v3223 = vadd.f32 %v3118, %v3222
        %v3224 = vpop.f32.mrf.mxu0
        %3225 = vmatprep.mubr.f32.mxu0 %v2952
        %3226 = vmatmul.mubr.f32.gmra.mxu0 %v2951
        %v3227 = vpop.f32.mrf.mxu0
        %v3228 = vadd.f32 %v3123, %v3227
        %v3229 = vpop.f32.mrf.mxu0
        %3230 = vmatprep.mubr.f32.mxu0 %v2956
        %3231 = vmatmul.mubr.f32.gmra.mxu0 %v2955
        %v3232 = vpop.f32.mrf.mxu0
        %v3233 = vadd.f32 %v3128, %v3232
        %v3234 = vpop.f32.mrf.mxu0
        %3235 = vmatprep.mubr.f32.mxu0 %v2960
        %3236 = vmatmul.mubr.f32.gmra.mxu0 %v2959
        %v3237 = vpop.f32.mrf.mxu0
        %v3238 = vadd.f32 %v3133, %v3237
        %v3239 = vpop.f32.mrf.mxu0
        %3240 = vmatprep.mubr.f32.mxu0 %v2964
        %3241 = vmatmul.mubr.f32.gmra.mxu0 %v2963
        %v3242 = vpop.f32.mrf.mxu0
        %v3243 = vadd.f32 %v3138, %v3242
        %v3244 = vpop.f32.mrf.mxu0
        %3245 = vdwg.mxu0
        %v3246 = vadd.f32 %v2367, %v3208
        %v3247 = vadd.f32 %v2368, %v3213
        %v3248 = vadd.f32 %v2369, %v3218
        %v3249 = vadd.f32 %v2370, %v3223
        %v3250 = vadd.f32 %v2371, %v3228
        %v3251 = vadd.f32 %v2372, %v3233
        %v3252 = vadd.f32 %v2373, %v3238
        %v3253 = vadd.f32 %v2374, %v3243
        %3254 = vst [vmem:[%s488] sm:$0xff] %v3246
        %3255 = vst [vmem:[%s488 + $0x8] sm:$0xff] %v3247
        %3256 = vst [vmem:[%s488 + $0x10] sm:$0xff] %v3248
        %3257 = vst [vmem:[%s488 + $0x18] sm:$0xff] %v3249
        %3258 = vst [vmem:[%s488 + $0x20] sm:$0xff] %v3250
        %3259 = vst [vmem:[%s488 + $0x28] sm:$0xff] %v3251
        %3260 = vst [vmem:[%s488 + $0x30] sm:$0xff] %v3252
        %3261 = vst [vmem:[%s488 + $0x38] sm:$0xff] %v3253
        %s3262 = sand.u32 %s317, 1
        %s3263 = scalar_lea.sflag [#allocation4], %s3262
        %s3264 = sand.u32 %s317, 1
        %s3265 = smul.addr %s3264, 64
        %s3266 = scalar_lea.vmem [#allocation8], %s3265
        // Predicated region
        $region85: #{tpu_custom_call.1} parent=71 // pred_check
          %p3267 = pneg %p327
        $region86: #{tpu_custom_call.1} parent=71 // pred_check_branch
          %3269 = sbr.rel (%p3267) target = $region88
        $region87: #{tpu_custom_call.1} parent=71 // pred_region
          %s3270 = smul.u32 4, %s31
          %s3272 = ssub.s32 1024, 1024
          %3273 = vsyncadd %s3263, %s3272
          %s3274 = smul.addr %s3270, 2
          %s3275 = smul.addr %s3274, 128
          %s3276 = scalar_lea.hbm %s13, %s3275
          %s3277 = sshll.u32 %s3266, 4
          %s3278 = int_to_ptr.vmem [resolvable:$true] %s3277
          %3283 = dma.vmem_to_hbm [thread:$0]  %s3278, 1024, %s3276, %s3263, 128, 128, 8
        $region88: #{tpu_custom_call.1} parent=71 // pred_fallthru
          _
      $region72: #{tpu_custom_call.1} parent=5 // pred_fallthru
        _
      %p3284 = scmp.le.s32.totalorder 2, %s26
      // Predicated region
      $region89: #{tpu_custom_call.1} parent=5 // pred_check
        %p3285 = pneg %p3284
      $region90: #{tpu_custom_call.1} parent=5 // pred_check_branch
        %3287 = sbr.rel (%p3285) target = $region92
      $region91: #{tpu_custom_call.1} parent=5 // pred_region
        %s3288 = ssub.s32 %s26, 2
        // Predicated region
        $region93: #{tpu_custom_call.1} parent=91 // pred_check
          %p3289 = pneg %p333
        $region94: #{tpu_custom_call.1} parent=91 // pred_check_branch
          %3291 = sbr.rel (%p3289) target = $region96
        $region95: #{tpu_custom_call.1} parent=91 // pred_region
          %s3292 = sand.u32 %s318, 1
          %s3293 = scalar_lea.sflag [#allocation4], %s3292
          %s3294 = sand.u32 %s318, 1
          %s3295 = smul.addr %s3294, 64
          %s3296 = scalar_lea.vmem [#allocation8], %s3295
          %3297 = dma.done %s3293, 1024
        $region96: #{tpu_custom_call.1} parent=91 // pred_fallthru
          _
      $region92: #{tpu_custom_call.1} parent=5 // pred_fallthru
        _
    $region6: #{tpu_custom_call.1} parent=1 // loop_footer
      %s30 = sadd.s32 1, %s26
    $region7: #{tpu_custom_call.1} parent=1 // loop_footer_branch
      %25 = sbr.rel target = $region3
    $region8: #{tpu_custom_call.1} parent=1 // loop_exit
      _
    %3298 = vsyncpa [#allocation3], 1
    %s3299 = scalar_lea.sflag [#allocation3], 1
    %3300 = vsyncpa %s3299, 1
    %3301 = vsyncpa [#allocation6], 1
    %3302 = vsyncpa [#allocation4], 1
    %s3303 = scalar_lea.sflag [#allocation4], 1
    %3304 = vsyncpa %s3303, 1

</llo_original>
